<compile_context>
chip_gen: v6e
topology: v6e:2x2x1
jax: 0.10.0
libtpu: 0.0.40
codegen_flags: <defaults>
</compile_context>

<pallas_src>
import jax
import jax.numpy as jnp
from jax.experimental import pallas as pl
from jax.experimental.pallas import tpu as pltpu

LANES = 128


def gcn_sumpool_kernel(x_ref, adj_ref, w1_ref, w2_ref,
                       wl1_ref, bl1_ref, wl2_ref, bl2_ref, out_ref):
    """One grid step: run G independent graphs fully fused in VMEM (f32)."""
    G, N, F = x_ref.shape            # graphs per step, nodes, node features
    H = w1_ref.shape[1]              # dim_h

    x = x_ref[...]                   # (G, N, F) f32 (streamed, no wrapper cast)
    adj = adj_ref[...]               # (G, N, N) f32

    # ---- gc1: relu(adj @ (x @ W1)) ---------------------------------------
    # Weight matmul on the stacked (G*N, F) view -> M = G*N per MXU pass
    # instead of G separate M=N passes.
    xw1 = jnp.dot(x.reshape(G * N, F), w1_ref[...],
                  preferred_element_type=jnp.float32).reshape(G, N, H)
    h1 = jnp.einsum('gij,gjh->gih', adj, xw1,
                    preferred_element_type=jnp.float32)
    h1 = jnp.maximum(h1, 0.0)

    # ---- gc2: relu(adj @ (h1 @ W2)) ---------------------------------------
    hw2 = jnp.dot(h1.reshape(G * N, H), w2_ref[...],
                  preferred_element_type=jnp.float32).reshape(G, N, H)
    h2 = jnp.einsum('gij,gjh->gih', adj, hw2,
                    preferred_element_type=jnp.float32)
    h2 = jnp.maximum(h2, 0.0)

    # ---- per-graph sum pooling over nodes ----------------------------------
    # Sublane reduction on the (otherwise idle) XLU; sums f32 h2 exactly like
    # the reference (previously a block-ones MXU matmul over bf16-cast h2).
    h3 = jnp.sum(h2, axis=1)                                      # (G, H) f32

    # ---- lin1 + ReLU --------------------------------------------------------
    h = jnp.dot(h3, wl1_ref[...],
                preferred_element_type=jnp.float32) + bl1_ref[...]
    h = jnp.maximum(h, 0.0)

    # TODO(synk): training-mode dropout (p=self.dropout) omitted; kernel runs
    # in inference mode where F.dropout is the identity.

    # ---- lin2 into the 128-lane padded output ------------------------------
    out = jnp.dot(h, wl2_ref[...],
                  preferred_element_type=jnp.float32) + bl2_ref[...]  # (G, Cpad)
    out_ref[...] = out[None].astype(out_ref.dtype)                    # (1, G, Cpad)


def prepare_params(params):
    """One-time parameter preprocessing, hoisted out of the hot forward path.

    Zero-pads lin2's weight/bias to a 128-lane output dimension so the final
    store in the kernel is lane-dense.  Everything stays f32.
    """
    w1, w2, wl1, bl1, wl2, bl2 = params
    H, C = wl2.shape
    c_pad = max(LANES, ((C + LANES - 1) // LANES) * LANES)
    wl2_pad = jnp.zeros((H, c_pad), jnp.float32).at[:, :C].set(wl2.astype(jnp.float32))
    bl2_pad = jnp.zeros((1, c_pad), jnp.float32).at[:, :C].set(
        bl2.reshape(1, -1).astype(jnp.float32))
    return (w1.astype(jnp.float32), w2.astype(jnp.float32),
            wl1.astype(jnp.float32), bl1.reshape(1, -1).astype(jnp.float32),
            wl2_pad, bl2_pad, C)


def gcn_sumpooling_twolayers(x, adj, prepared_params, *, graphs_per_step=None):
    """Batched forward.

    x:   [B, N, F] float32   (B independent graphs, N nodes each)
    adj: [B, N, N] float32
    Returns [B, num_classes] float32 (one row per graph, matching the
    module's [1, num_classes] output per graph).
    """
    w1, w2, wl1, bl1, wl2_pad, bl2_pad, C = prepared_params
    B, N, F = x.shape
    H = w1.shape[1]
    C_pad = wl2_pad.shape[1]

    if graphs_per_step is None:
        # Stream ~0.5 MiB of x+adj per grid step (amortizes the ~0.35 us
        # per-step cost), but keep >= 2 steps so the "parallel" axis can be
        # sharded across v7x's two TensorCores.
        per_graph_bytes = (N * F + N * N) * x.dtype.itemsize
        g_cap = max(1, (512 * 1024) // per_graph_bytes)
        graphs_per_step = int(max(1, min(g_cap, (B + 1) // 2)))
    G = graphs_per_step

    steps = -(-B // G)               # cdiv: ragged batches handled by padding
    B_pad = steps * G
    if B_pad != B:
        pad = B_pad - B
        x = jnp.pad(x, ((0, pad), (0, 0), (0, 0)))
        adj = jnp.pad(adj, ((0, pad), (0, 0), (0, 0)))

    const2 = lambda i: (0, 0)        # resident (never re-DMA'd) parameters

    out = pl.pallas_call(
        gcn_sumpool_kernel,
        out_shape=jax.ShapeDtypeStruct((steps, G, C_pad), jnp.float32),
        grid_spec=pltpu.PrefetchScalarGridSpec(
            num_scalar_prefetch=0,
            grid=(steps,),
            in_specs=[
                pl.BlockSpec((G, N, F), lambda i: (i, 0, 0)),      # x   (streamed)
                pl.BlockSpec((G, N, N), lambda i: (i, 0, 0)),      # adj (streamed)
                pl.BlockSpec((F, H), const2),                      # W1
                pl.BlockSpec((H, H), const2),                      # W2
                pl.BlockSpec((H, H), const2),                      # W_lin1
                pl.BlockSpec((1, H), const2),                      # b_lin1
                pl.BlockSpec((H, C_pad), const2),                  # W_lin2 (padded)
                pl.BlockSpec((1, C_pad), const2),                  # b_lin2 (padded)
            ],
            out_specs=pl.BlockSpec((1, G, C_pad), lambda i: (i, 0, 0)),
        ),
        compiler_params=pltpu.CompilerParams(
            dimension_semantics=("parallel",)),
    )(x, adj, w1, w2, wl1, bl1, wl2_pad, bl2_pad)

    return out.reshape(B_pad, C_pad)[:B, :C]


def init_params(key, num_node_features, dim_h, num_classes):
    """Deterministic synthetic parameters.

    Linear weights are stored as [in, out] (i.e. already W^T relative to
    torch.nn.Linear's [out, in] layout); biases are [1, out] rows.
    """
    k1, k2, k3, k4, k5, k6 = jax.random.split(key, 6)
    s = 0.2
    w1 = jax.random.normal(k1, (num_node_features, dim_h), jnp.float32) * s
    w2 = jax.random.normal(k2, (dim_h, dim_h), jnp.float32) * s
    wl1 = jax.random.normal(k3, (dim_h, dim_h), jnp.float32) * s
    bl1 = jax.random.normal(k4, (1, dim_h), jnp.float32) * s
    wl2 = jax.random.normal(k5, (dim_h, num_classes), jnp.float32) * s
    bl2 = jax.random.normal(k6, (1, num_classes), jnp.float32) * s
    return (w1, w2, wl1, bl1, wl2, bl2)


def reference_forward(x, adj, params):
    """Pure-JAX f32 reference for ONE graph, mirroring the PyTorch module."""
    w1, w2, wl1, bl1, wl2, bl2 = params
    h1 = jnp.maximum(adj @ (x @ w1), 0.0)
    h2 = jnp.maximum(adj @ (h1 @ w2), 0.0)
    h3 = jnp.sum(h2, axis=0, keepdims=True)
    h = jnp.maximum(h3 @ wl1 + bl1, 0.0)
    return h @ wl2 + bl2


if __name__ == "__main__":
    B = 23                # deliberately ragged: auto G=12 -> 2 steps + 1 pad graph
    num_nodes = 64
    num_node_features = 16
    dim_h = 32
    num_classes = 8

    key = jax.random.PRNGKey(0)
    kx, kadj, kparams = jax.random.split(key, 3)

    x = jax.random.normal(kx, (B, num_nodes, num_node_features), jnp.float32)

    # Symmetric 0/1 adjacency with self-loops, row-normalized (standard GCN
    # propagation matrix), per graph, deterministic.
    a = (jax.random.uniform(kadj, (B, num_nodes, num_nodes)) < 0.1).astype(jnp.float32)
    adj = jnp.clip(a + jnp.swapaxes(a, 1, 2)
                   + jnp.eye(num_nodes, dtype=jnp.float32)[None], 0.0, 1.0)
    adj = adj / jnp.sum(adj, axis=-1, keepdims=True)

    params = init_params(kparams, num_node_features, dim_h, num_classes)
    prepared = prepare_params(params)     # one-time, hoisted out of the forward

    out = gcn_sumpooling_twolayers(x, adj, prepared)
    out = jax.block_until_ready(out)

    # f32 reference with full-precision matmuls (avoids XLA's default bf16
    # matmul pass skewing the comparison).
    with jax.default_matmul_precision("float32"):
        ref = jax.vmap(lambda xb, ab: reference_forward(xb, ab, params)[0])(x, adj)
        ref = jax.block_until_ready(ref)

    assert out.shape == (B, num_classes), out.shape
    assert jnp.allclose(out, ref, rtol=2e-2, atol=2e-2), "mismatch vs reference"

    print("KERNEL_OK")
</pallas_src>

<mosaic_0001>
module attributes {stable_mosaic.version = 11 : i64} {
  func.func @gcn_sumpool_kernel(%arg0: i32, %arg1: memref<12x64x16xf32, #tpu.memory_space<vmem>>, %arg2: memref<12x64x64xf32, #tpu.memory_space<vmem>>, %arg3: memref<16x32xf32, #tpu.memory_space<vmem>>, %arg4: memref<32x32xf32, #tpu.memory_space<vmem>>, %arg5: memref<32x32xf32, #tpu.memory_space<vmem>>, %arg6: memref<1x32xf32, #tpu.memory_space<vmem>>, %arg7: memref<32x128xf32, #tpu.memory_space<vmem>>, %arg8: memref<1x128xf32, #tpu.memory_space<vmem>>, %arg9: memref<1x12x128xf32, #tpu.memory_space<vmem>>) attributes {dimension_semantics = [#tpu.dimension_semantics<parallel>], iteration_bounds = array<i64: 2>, scalar_prefetch = 0 : i64, scratch_operands = 0 : i64, tpu.core_type = #tpu.core_type<tc>, window_params = [{transform_indices = @transform_0, window_bounds = array<i64: 12, 64, 16>}, {transform_indices = @transform_1, window_bounds = array<i64: 12, 64, 64>}, {pipeline_mode = #tpu.pipeline_mode<synchronous>, transform_indices = @transform_2, window_bounds = array<i64: 16, 32>}, {pipeline_mode = #tpu.pipeline_mode<synchronous>, transform_indices = @transform_3, window_bounds = array<i64: 32, 32>}, {pipeline_mode = #tpu.pipeline_mode<synchronous>, transform_indices = @transform_4, window_bounds = array<i64: 32, 32>}, {pipeline_mode = #tpu.pipeline_mode<synchronous>, transform_indices = @transform_5, window_bounds = array<i64: 1, 32>}, {pipeline_mode = #tpu.pipeline_mode<synchronous>, transform_indices = @transform_6, window_bounds = array<i64: 32, 128>}, {pipeline_mode = #tpu.pipeline_mode<synchronous>, transform_indices = @transform_7, window_bounds = array<i64: 1, 128>}, {transform_indices = @transform_8, window_bounds = array<i64: 1, 12, 128>}]} {
    %c0 = arith.constant 0 : index
    %c0_0 = arith.constant 0 : index
    %c0_1 = arith.constant 0 : index
    %0 = vector.load %arg1[%c0, %c0_0, %c0_1] : memref<12x64x16xf32, #tpu.memory_space<vmem>>, vector<12x64x16xf32>
    %c0_2 = arith.constant 0 : index
    %c0_3 = arith.constant 0 : index
    %c0_4 = arith.constant 0 : index
    %1 = vector.load %arg2[%c0_2, %c0_3, %c0_4] : memref<12x64x64xf32, #tpu.memory_space<vmem>>, vector<12x64x64xf32>
    %2 = vector.shape_cast %0 : vector<12x64x16xf32> to vector<768x16xf32>
    %c0_5 = arith.constant 0 : index
    %c0_6 = arith.constant 0 : index
    %3 = vector.load %arg3[%c0_5, %c0_6] : memref<16x32xf32, #tpu.memory_space<vmem>>, vector<16x32xf32>
    %cst = arith.constant dense<0.000000e+00> : vector<768x32xf32>
    %4 = tpu.matmul %2, %3, %cst {dimension_numbers = #tpu.dot_dimension_numbers<[1], [0], [0], [1], [0, 0, 1, 1], [], []>} : vector<768x16xf32>, vector<16x32xf32>, vector<768x32xf32> -> vector<768x32xf32>
    %5 = vector.shape_cast %4 : vector<768x32xf32> to vector<12x64x32xf32>
    "tpu.trace_start"() <{level = 10 : i32, message = "gij,gjh->gih"}> : () -> ()
    %cst_7 = arith.constant dense<0.000000e+00> : vector<12x64x32xf32>
    %6 = tpu.matmul %1, %5, %cst_7 {dimension_numbers = #tpu.dot_dimension_numbers<[2], [1], [1], [2], [0, 0, 0, 1, 1, 2], [0], [0]>} : vector<12x64x64xf32>, vector<12x64x32xf32>, vector<12x64x32xf32> -> vector<12x64x32xf32>
    "tpu.trace_stop"() : () -> ()
    %cst_8 = arith.constant 0.000000e+00 : f32
    %7 = vector.broadcast %cst_8 : f32 to vector<12x64x32xf32>
    %8 = arith.maximumf %6, %7 : vector<12x64x32xf32>
    %9 = vector.shape_cast %8 : vector<12x64x32xf32> to vector<768x32xf32>
    %c0_9 = arith.constant 0 : index
    %c0_10 = arith.constant 0 : index
    %10 = vector.load %arg4[%c0_9, %c0_10] : memref<32x32xf32, #tpu.memory_space<vmem>>, vector<32x32xf32>
    %cst_11 = arith.constant dense<0.000000e+00> : vector<768x32xf32>
    %11 = tpu.matmul %9, %10, %cst_11 {dimension_numbers = #tpu.dot_dimension_numbers<[1], [0], [0], [1], [0, 0, 1, 1], [], []>} : vector<768x32xf32>, vector<32x32xf32>, vector<768x32xf32> -> vector<768x32xf32>
    %12 = vector.shape_cast %11 : vector<768x32xf32> to vector<12x64x32xf32>
    "tpu.trace_start"() <{level = 10 : i32, message = "gij,gjh->gih"}> : () -> ()
    %cst_12 = arith.constant dense<0.000000e+00> : vector<12x64x32xf32>
    %13 = tpu.matmul %1, %12, %cst_12 {dimension_numbers = #tpu.dot_dimension_numbers<[2], [1], [1], [2], [0, 0, 0, 1, 1, 2], [0], [0]>} : vector<12x64x64xf32>, vector<12x64x32xf32>, vector<12x64x32xf32> -> vector<12x64x32xf32>
    "tpu.trace_stop"() : () -> ()
    %cst_13 = arith.constant 0.000000e+00 : f32
    %14 = vector.broadcast %cst_13 : f32 to vector<12x64x32xf32>
    %15 = arith.maximumf %13, %14 : vector<12x64x32xf32>
    %cst_14 = arith.constant dense<0.000000e+00> : vector<12x32xf32>
    %16 = vector.multi_reduction <add>, %15, %cst_14 [1] : vector<12x64x32xf32> to vector<12x32xf32>
    %c0_15 = arith.constant 0 : index
    %c0_16 = arith.constant 0 : index
    %17 = vector.load %arg5[%c0_15, %c0_16] : memref<32x32xf32, #tpu.memory_space<vmem>>, vector<32x32xf32>
    %cst_17 = arith.constant dense<0.000000e+00> : vector<12x32xf32>
    %18 = tpu.matmul %16, %17, %cst_17 {dimension_numbers = #tpu.dot_dimension_numbers<[1], [0], [0], [1], [0, 0, 1, 1], [], []>} : vector<12x32xf32>, vector<32x32xf32>, vector<12x32xf32> -> vector<12x32xf32>
    %c0_18 = arith.constant 0 : index
    %c0_19 = arith.constant 0 : index
    %19 = vector.load %arg6[%c0_18, %c0_19] : memref<1x32xf32, #tpu.memory_space<vmem>>, vector<1x32xf32>
    %20 = vector.broadcast %19 : vector<1x32xf32> to vector<12x32xf32>
    %21 = arith.addf %18, %20 : vector<12x32xf32>
    %cst_20 = arith.constant 0.000000e+00 : f32
    %22 = vector.broadcast %cst_20 : f32 to vector<12x32xf32>
    %23 = arith.maximumf %21, %22 : vector<12x32xf32>
    %c0_21 = arith.constant 0 : index
    %c0_22 = arith.constant 0 : index
    %24 = vector.load %arg7[%c0_21, %c0_22] : memref<32x128xf32, #tpu.memory_space<vmem>>, vector<32x128xf32>
    %cst_23 = arith.constant dense<0.000000e+00> : vector<12x128xf32>
    %25 = tpu.matmul %23, %24, %cst_23 {dimension_numbers = #tpu.dot_dimension_numbers<[1], [0], [0], [1], [0, 0, 1, 1], [], []>} : vector<12x32xf32>, vector<32x128xf32>, vector<12x128xf32> -> vector<12x128xf32>
    %c0_24 = arith.constant 0 : index
    %c0_25 = arith.constant 0 : index
    %26 = vector.load %arg8[%c0_24, %c0_25] : memref<1x128xf32, #tpu.memory_space<vmem>>, vector<1x128xf32>
    %27 = vector.broadcast %26 : vector<1x128xf32> to vector<12x128xf32>
    %28 = arith.addf %25, %27 : vector<12x128xf32>
    %29 = vector.shape_cast %28 : vector<12x128xf32> to vector<1x12x128xf32>
    %c0_26 = arith.constant 0 : index
    %c0_27 = arith.constant 0 : index
    %c0_28 = arith.constant 0 : index
    %30 = vector.load %arg9[%c0_26, %c0_27, %c0_28] : memref<1x12x128xf32, #tpu.memory_space<vmem>>, vector<1x12x128xf32>
    tpu.vector_store %arg9[%c0_26, %c0_27, %c0_28], %29 {strides = array<i32>} : memref<1x12x128xf32, #tpu.memory_space<vmem>>, vector<1x12x128xf32>,
    return
  }
  func.func @transform_0(%arg0: i32) -> (i32, i32, i32) {
    %c0_i32 = arith.constant 0 : i32
    %c0_i32_0 = arith.constant 0 : i32
    %c0_i32_1 = arith.constant 0 : i32
    return %arg0, %c0_i32, %c0_i32_0 : i32, i32, i32
  }
  func.func @transform_1(%arg0: i32) -> (i32, i32, i32) {
    %c0_i32 = arith.constant 0 : i32
    %c0_i32_0 = arith.constant 0 : i32
    %c0_i32_1 = arith.constant 0 : i32
    return %arg0, %c0_i32, %c0_i32_0 : i32, i32, i32
  }
  func.func @transform_2(%arg0: i32) -> (i32, i32) {
    %c0_i32 = arith.constant 0 : i32
    %c0_i32_0 = arith.constant 0 : i32
    %c0_i32_1 = arith.constant 0 : i32
    return %c0_i32, %c0_i32_0 : i32, i32
  }
  func.func @transform_3(%arg0: i32) -> (i32, i32) {
    %c0_i32 = arith.constant 0 : i32
    %c0_i32_0 = arith.constant 0 : i32
    %c0_i32_1 = arith.constant 0 : i32
    return %c0_i32, %c0_i32_0 : i32, i32
  }
  func.func @transform_4(%arg0: i32) -> (i32, i32) {
    %c0_i32 = arith.constant 0 : i32
    %c0_i32_0 = arith.constant 0 : i32
    %c0_i32_1 = arith.constant 0 : i32
    return %c0_i32, %c0_i32_0 : i32, i32
  }
  func.func @transform_5(%arg0: i32) -> (i32, i32) {
    %c0_i32 = arith.constant 0 : i32
    %c0_i32_0 = arith.constant 0 : i32
    %c0_i32_1 = arith.constant 0 : i32
    return %c0_i32, %c0_i32_0 : i32, i32
  }
  func.func @transform_6(%arg0: i32) -> (i32, i32) {
    %c0_i32 = arith.constant 0 : i32
    %c0_i32_0 = arith.constant 0 : i32
    %c0_i32_1 = arith.constant 0 : i32
    return %c0_i32, %c0_i32_0 : i32, i32
  }
  func.func @transform_7(%arg0: i32) -> (i32, i32) {
    %c0_i32 = arith.constant 0 : i32
    %c0_i32_0 = arith.constant 0 : i32
    %c0_i32_1 = arith.constant 0 : i32
    return %c0_i32, %c0_i32_0 : i32, i32
  }
  func.func @transform_8(%arg0: i32) -> (i32, i32, i32) {
    %c0_i32 = arith.constant 0 : i32
    %c0_i32_0 = arith.constant 0 : i32
    %c0_i32_1 = arith.constant 0 : i32
    return %arg0, %c0_i32, %c0_i32_0 : i32, i32, i32
  }
}

</mosaic_0001>

<llo_original>
// kernel: tpu_custom_call.1
$region0: #{tpu_custom_call.1}
  #allocation0 [shape = 'u32[]', space=smem, size = 0x4, offset = 0x4, fixed_abs, tag = 'smem constant byte address 0x4 - core index']
  #allocation1 [shape = 'u32[144,128]{1,0:T(1,128)}', space=vmem, size = 0x12000, scoped, tag = 'internal scratch']
  %s0 = inlined_call_operand.vmem [shape: f32[24,64,16], index: 0, kind: input, shape index: {}]
  %s1 = inlined_call_operand.vmem [shape: f32[24,64,64], index: 1, kind: input, shape index: {}]
  %s2 = inlined_call_operand.vmem [shape: f32[16,32], index: 2, kind: input, shape index: {}]
  %s3 = inlined_call_operand.vmem [shape: f32[32,32], index: 3, kind: input, shape index: {}]
  %s4 = inlined_call_operand.vmem [shape: f32[32,32], index: 4, kind: input, shape index: {}]
  %s5 = inlined_call_operand.vmem [shape: f32[1,32], index: 5, kind: input, shape index: {}]
  %s6 = inlined_call_operand.vmem [shape: f32[32,128], index: 6, kind: input, shape index: {}]
  %s7 = inlined_call_operand.vmem [shape: f32[1,128], index: 7, kind: input, shape index: {}]
  %s8 = inlined_call_operand.vmem [shape: f32[2,12,128], index: 8, kind: output, shape index: {}]
  %s9 = sld [smem:[#allocation0]]
  $region65: #{tpu_custom_call.1} parent=0
    _
  %s11 = ssub.s32 1, %s9
  %s12 = scalar_select 0, %s11, %s9
  loop: start=0, step=1, limit=4
  $region2: #{tpu_custom_call.1} parent=0 // loop_pre_header
    _
  $region3: #{tpu_custom_call.1} parent=0 // loop_header
    %s14 = sphi 0, %s18
    %p15 = scmp.ge.s32.totalorder %s14, 4
    %s24 = sphi 0, %s26
    %s27 = sphi 0, %s24
    %s28 = sphi 0, %s27
    %s44 = sphi 0, %s28
    %s50 = sphi 0, %s52
    %s53 = sphi 0, %s50
    %s54 = sphi 0, %s53
    %s70 = sphi 0, %s54
    %s74 = sphi 0, %s74
    %s76 = sphi 0, %s74
    %s77 = sphi 0, %s76
    %s91 = sphi 0, %s77
    %s95 = sphi 0, %s95
    %s97 = sphi 0, %s95
    %s98 = sphi 0, %s97
    %s112 = sphi 0, %s98
    %s116 = sphi 0, %s116
    %s118 = sphi 0, %s116
    %s119 = sphi 0, %s118
    %s133 = sphi 0, %s119
    %s137 = sphi 0, %s137
    %s139 = sphi 0, %s137
    %s140 = sphi 0, %s139
    %s154 = sphi 0, %s140
    %s158 = sphi 0, %s158
    %s160 = sphi 0, %s158
    %s161 = sphi 0, %s160
    %s175 = sphi 0, %s161
    %s179 = sphi 0, %s179
    %s181 = sphi 0, %s179
    %s182 = sphi 0, %s181
    %s196 = sphi 0, %s182
    %s202 = sphi 0, %s204
    %s205 = sphi 0, %s202
    %s206 = sphi 0, %s205
    %s222 = sphi 0, %s206
  $region4: #{tpu_custom_call.1} parent=0 // loop_header_branch
    %17 = sbr.rel (%p15) target = $region8
  $region5: #{tpu_custom_call.1} parent=0 // loop_body
    %s19 = ssub.s32 %s14, 1
    %s20 = ssub.s32 %s14, 2
    %s21 = sadd.s32 %s14, 1
    %s22 = ssub.s32 %s14, %s21
    %p23 = scmp.eq.s32.totalorder %s22, 0
    %s25 = sadd.s32 %s24, 1
    %s26 = scalar_select %p23, %s24, %s25
    %p29 = pneg %p23
    %p30 = scmp.eq.s32.totalorder %s14, 1
    %p31 = por %p29, %p30
    %p32 = scmp.ne.s32.totalorder %s24, %s27
    %p33 = scmp.eq.s32.totalorder %s14, 0
    %p34 = por %p32, %p33
    %p35 = scmp.ne.s32.totalorder %s24, %s27
    %p36 = scmp.eq.s32.totalorder %s19, 1
    %p37 = por %p35, %p36
    %p38 = scmp.ne.s32.totalorder %s27, %s28
    %p39 = scmp.eq.s32.totalorder %s19, 0
    %p40 = por %p38, %p39
    %p41 = scmp.ne.s32.totalorder %s27, %s28
    %p42 = scmp.eq.s32.totalorder %s20, 1
    %p43 = por %p41, %p42
    %p45 = scmp.ne.s32.totalorder %s28, %s44
    %p46 = scmp.eq.s32.totalorder %s20, 0
    %p47 = por %p45, %p46
    %s48 = ssub.s32 %s14, %s21
    %p49 = scmp.eq.s32.totalorder %s48, 0
    %s51 = sadd.s32 %s50, 1
    %s52 = scalar_select %p49, %s50, %s51
    %p55 = pneg %p49
    %p56 = scmp.eq.s32.totalorder %s14, 1
    %p57 = por %p55, %p56
    %p58 = scmp.ne.s32.totalorder %s50, %s53
    %p59 = scmp.eq.s32.totalorder %s14, 0
    %p60 = por %p58, %p59
    %p61 = scmp.ne.s32.totalorder %s50, %s53
    %p62 = scmp.eq.s32.totalorder %s19, 1
    %p63 = por %p61, %p62
    %p64 = scmp.ne.s32.totalorder %s53, %s54
    %p65 = scmp.eq.s32.totalorder %s19, 0
    %p66 = por %p64, %p65
    %p67 = scmp.ne.s32.totalorder %s53, %s54
    %p68 = scmp.eq.s32.totalorder %s20, 1
    %p69 = por %p67, %p68
    %p71 = scmp.ne.s32.totalorder %s54, %s70
    %p72 = scmp.eq.s32.totalorder %s20, 0
    %p73 = por %p71, %p72
    %s75 = sadd.s32 %s74, 1
    %p78 = scmp.eq.s32.totalorder %s14, 1
    %p79 = scmp.ne.s32.totalorder %s74, %s76
    %p80 = scmp.eq.s32.totalorder %s14, 0
    %p81 = por %p79, %p80
    %p82 = scmp.ne.s32.totalorder %s74, %s76
    %p83 = scmp.eq.s32.totalorder %s19, 1
    %p84 = por %p82, %p83
    %p85 = scmp.ne.s32.totalorder %s76, %s77
    %p86 = scmp.eq.s32.totalorder %s19, 0
    %p87 = por %p85, %p86
    %p88 = scmp.ne.s32.totalorder %s76, %s77
    %p89 = scmp.eq.s32.totalorder %s20, 1
    %p90 = por %p88, %p89
    %p92 = scmp.ne.s32.totalorder %s77, %s91
    %p93 = scmp.eq.s32.totalorder %s20, 0
    %p94 = por %p92, %p93
    %s96 = sadd.s32 %s95, 1
    %p99 = scmp.eq.s32.totalorder %s14, 1
    %p100 = scmp.ne.s32.totalorder %s95, %s97
    %p101 = scmp.eq.s32.totalorder %s14, 0
    %p102 = por %p100, %p101
    %p103 = scmp.ne.s32.totalorder %s95, %s97
    %p104 = scmp.eq.s32.totalorder %s19, 1
    %p105 = por %p103, %p104
    %p106 = scmp.ne.s32.totalorder %s97, %s98
    %p107 = scmp.eq.s32.totalorder %s19, 0
    %p108 = por %p106, %p107
    %p109 = scmp.ne.s32.totalorder %s97, %s98
    %p110 = scmp.eq.s32.totalorder %s20, 1
    %p111 = por %p109, %p110
    %p113 = scmp.ne.s32.totalorder %s98, %s112
    %p114 = scmp.eq.s32.totalorder %s20, 0
    %p115 = por %p113, %p114
    %s117 = sadd.s32 %s116, 1
    %p120 = scmp.eq.s32.totalorder %s14, 1
    %p121 = scmp.ne.s32.totalorder %s116, %s118
    %p122 = scmp.eq.s32.totalorder %s14, 0
    %p123 = por %p121, %p122
    %p124 = scmp.ne.s32.totalorder %s116, %s118
    %p125 = scmp.eq.s32.totalorder %s19, 1
    %p126 = por %p124, %p125
    %p127 = scmp.ne.s32.totalorder %s118, %s119
    %p128 = scmp.eq.s32.totalorder %s19, 0
    %p129 = por %p127, %p128
    %p130 = scmp.ne.s32.totalorder %s118, %s119
    %p131 = scmp.eq.s32.totalorder %s20, 1
    %p132 = por %p130, %p131
    %p134 = scmp.ne.s32.totalorder %s119, %s133
    %p135 = scmp.eq.s32.totalorder %s20, 0
    %p136 = por %p134, %p135
    %s138 = sadd.s32 %s137, 1
    %p141 = scmp.eq.s32.totalorder %s14, 1
    %p142 = scmp.ne.s32.totalorder %s137, %s139
    %p143 = scmp.eq.s32.totalorder %s14, 0
    %p144 = por %p142, %p143
    %p145 = scmp.ne.s32.totalorder %s137, %s139
    %p146 = scmp.eq.s32.totalorder %s19, 1
    %p147 = por %p145, %p146
    %p148 = scmp.ne.s32.totalorder %s139, %s140
    %p149 = scmp.eq.s32.totalorder %s19, 0
    %p150 = por %p148, %p149
    %p151 = scmp.ne.s32.totalorder %s139, %s140
    %p152 = scmp.eq.s32.totalorder %s20, 1
    %p153 = por %p151, %p152
    %p155 = scmp.ne.s32.totalorder %s140, %s154
    %p156 = scmp.eq.s32.totalorder %s20, 0
    %p157 = por %p155, %p156
    %s159 = sadd.s32 %s158, 1
    %p162 = scmp.eq.s32.totalorder %s14, 1
    %p163 = scmp.ne.s32.totalorder %s158, %s160
    %p164 = scmp.eq.s32.totalorder %s14, 0
    %p165 = por %p163, %p164
    %p166 = scmp.ne.s32.totalorder %s158, %s160
    %p167 = scmp.eq.s32.totalorder %s19, 1
    %p168 = por %p166, %p167
    %p169 = scmp.ne.s32.totalorder %s160, %s161
    %p170 = scmp.eq.s32.totalorder %s19, 0
    %p171 = por %p169, %p170
    %p172 = scmp.ne.s32.totalorder %s160, %s161
    %p173 = scmp.eq.s32.totalorder %s20, 1
    %p174 = por %p172, %p173
    %p176 = scmp.ne.s32.totalorder %s161, %s175
    %p177 = scmp.eq.s32.totalorder %s20, 0
    %p178 = por %p176, %p177
    %s180 = sadd.s32 %s179, 1
    %p183 = scmp.eq.s32.totalorder %s14, 1
    %p184 = scmp.ne.s32.totalorder %s179, %s181
    %p185 = scmp.eq.s32.totalorder %s14, 0
    %p186 = por %p184, %p185
    %p187 = scmp.ne.s32.totalorder %s179, %s181
    %p188 = scmp.eq.s32.totalorder %s19, 1
    %p189 = por %p187, %p188
    %p190 = scmp.ne.s32.totalorder %s181, %s182
    %p191 = scmp.eq.s32.totalorder %s19, 0
    %p192 = por %p190, %p191
    %p193 = scmp.ne.s32.totalorder %s181, %s182
    %p194 = scmp.eq.s32.totalorder %s20, 1
    %p195 = por %p193, %p194
    %p197 = scmp.ne.s32.totalorder %s182, %s196
    %p198 = scmp.eq.s32.totalorder %s20, 0
    %p199 = por %p197, %p198
    %s200 = ssub.s32 %s14, %s21
    %p201 = scmp.eq.s32.totalorder %s200, 0
    %s203 = sadd.s32 %s202, 1
    %s204 = scalar_select %p201, %s202, %s203
    %p207 = pneg %p201
    %p208 = scmp.eq.s32.totalorder %s14, 1
    %p209 = por %p207, %p208
    %p210 = scmp.ne.s32.totalorder %s202, %s205
    %p211 = scmp.eq.s32.totalorder %s14, 0
    %p212 = por %p210, %p211
    %p213 = scmp.ne.s32.totalorder %s202, %s205
    %p214 = scmp.eq.s32.totalorder %s19, 1
    %p215 = por %p213, %p214
    %p216 = scmp.ne.s32.totalorder %s205, %s206
    %p217 = scmp.eq.s32.totalorder %s19, 0
    %p218 = por %p216, %p217
    %p219 = scmp.ne.s32.totalorder %s205, %s206
    %p220 = scmp.eq.s32.totalorder %s20, 1
    %p221 = por %p219, %p220
    %p223 = scmp.ne.s32.totalorder %s206, %s222
    %p224 = scmp.eq.s32.totalorder %s20, 0
    %p225 = por %p223, %p224
    %p226 = scmp.le.s32.totalorder 1, %s14
    %p227 = scmp.lt.s32.totalorder %s14, 3
    %p228 = pnand %p226, %p227
    %p229 = pneg %p228
    // Predicated region
    $region9: #{tpu_custom_call.1} parent=5 // pred_check
      _
    $region10: #{tpu_custom_call.1} parent=5 // pred_check_branch
      %231 = sbr.rel (%p228) target = $region12
    $region11: #{tpu_custom_call.1} parent=5 // pred_region
      %s232 = ssub.s32 %s14, 1
      // Predicated region
      $region13: #{tpu_custom_call.1} parent=11 // pred_check
        %p233 = pneg %p87
      $region14: #{tpu_custom_call.1} parent=11 // pred_check_branch
        %235 = sbr.rel (%p233) target = $region16
      $region15: #{tpu_custom_call.1} parent=11 // pred_region
        _
      $region16: #{tpu_custom_call.1} parent=11 // pred_fallthru
        _
      // Predicated region
      $region17: #{tpu_custom_call.1} parent=11 // pred_check
        %p236 = pneg %p108
      $region18: #{tpu_custom_call.1} parent=11 // pred_check_branch
        %238 = sbr.rel (%p236) target = $region20
      $region19: #{tpu_custom_call.1} parent=11 // pred_region
        _
      $region20: #{tpu_custom_call.1} parent=11 // pred_fallthru
        _
      // Predicated region
      $region21: #{tpu_custom_call.1} parent=11 // pred_check
        %p239 = pneg %p129
      $region22: #{tpu_custom_call.1} parent=11 // pred_check_branch
        %241 = sbr.rel (%p239) target = $region24
      $region23: #{tpu_custom_call.1} parent=11 // pred_region
        _
      $region24: #{tpu_custom_call.1} parent=11 // pred_fallthru
        _
      // Predicated region
      $region25: #{tpu_custom_call.1} parent=11 // pred_check
        %p242 = pneg %p150
      $region26: #{tpu_custom_call.1} parent=11 // pred_check_branch
        %244 = sbr.rel (%p242) target = $region28
      $region27: #{tpu_custom_call.1} parent=11 // pred_region
        _
      $region28: #{tpu_custom_call.1} parent=11 // pred_fallthru
        _
      // Predicated region
      $region29: #{tpu_custom_call.1} parent=11 // pred_check
        %p245 = pneg %p171
      $region30: #{tpu_custom_call.1} parent=11 // pred_check_branch
        %247 = sbr.rel (%p245) target = $region32
      $region31: #{tpu_custom_call.1} parent=11 // pred_region
        _
      $region32: #{tpu_custom_call.1} parent=11 // pred_fallthru
        _
      // Predicated region
      $region33: #{tpu_custom_call.1} parent=11 // pred_check
        %p248 = pneg %p192
      $region34: #{tpu_custom_call.1} parent=11 // pred_check_branch
        %250 = sbr.rel (%p248) target = $region36
      $region35: #{tpu_custom_call.1} parent=11 // pred_region
        _
      $region36: #{tpu_custom_call.1} parent=11 // pred_fallthru
        _
    $region12: #{tpu_custom_call.1} parent=5 // pred_fallthru
      _
    %p251 = scmp.lt.s32.totalorder %s14, 2
    // Predicated region
    $region37: #{tpu_custom_call.1} parent=5 // pred_check
      %p252 = pneg %p251
    $region38: #{tpu_custom_call.1} parent=5 // pred_check_branch
      %254 = sbr.rel (%p252) target = $region40
    $region39: #{tpu_custom_call.1} parent=5 // pred_region
      // Predicated region
      $region41: #{tpu_custom_call.1} parent=39 // pred_check
        %p255 = pneg %p34
      $region42: #{tpu_custom_call.1} parent=39 // pred_check_branch
        %257 = sbr.rel (%p255) target = $region44
      $region43: #{tpu_custom_call.1} parent=39 // pred_region
        %s258 = smul.u32 12, %s14
        %p259 = scmp.lt.s32.totalorder %s258, 23
        %s260 = scalar_select %p259, %s258, 23
        %s261 = smul.addr %s260, 8
        %s262 = smul.addr %s261, 8
        %s263 = scalar_lea.vmem %s0, %s262
        %s264 = smul.u32 12, %s14
      $region44: #{tpu_custom_call.1} parent=39 // pred_fallthru
        _
      // Predicated region
      $region45: #{tpu_custom_call.1} parent=39 // pred_check
        %p265 = pneg %p60
      $region46: #{tpu_custom_call.1} parent=39 // pred_check_branch
        %267 = sbr.rel (%p265) target = $region48
      $region47: #{tpu_custom_call.1} parent=39 // pred_region
        %s268 = smul.u32 12, %s14
        %p269 = scmp.lt.s32.totalorder %s268, 23
        %s270 = scalar_select %p269, %s268, 23
        %s271 = smul.addr %s270, 8
        %s272 = smul.addr %s271, 8
        %s273 = scalar_lea.vmem %s1, %s272
        %s274 = smul.u32 12, %s14
      $region48: #{tpu_custom_call.1} parent=39 // pred_fallthru
        _
    $region40: #{tpu_custom_call.1} parent=5 // pred_fallthru
      _
    %p275 = scmp.le.s32.totalorder 1, %s14
    %p276 = scmp.lt.s32.totalorder %s14, 3
    %p277 = pnand %p275, %p276
    %p278 = pneg %p277
    // Predicated region
    $region49: #{tpu_custom_call.1} parent=5 // pred_check
      _
    $region50: #{tpu_custom_call.1} parent=5 // pred_check_branch
      %280 = sbr.rel (%p277) target = $region52
    $region51: #{tpu_custom_call.1} parent=5 // pred_region
      %s281 = ssub.s32 %s14, 1
      %s282 = smul.u32 12, %s19
      %p283 = scmp.lt.s32.totalorder %s282, 23
      %s284 = scalar_select %p283, %s282, 23
      %s285 = smul.addr %s284, 8
      %s286 = smul.addr %s285, 8
      %s287 = scalar_lea.vmem %s0, %s286
      %p288 = pneg %p40
      %p289 = pneg %p37
      %s290 = smul.u32 12, %s19
      %p291 = scmp.lt.s32.totalorder %s290, 23
      %s292 = scalar_select %p291, %s290, 23
      %s293 = smul.addr %s292, 8
      %s294 = smul.addr %s293, 8
      %s295 = scalar_lea.vmem %s1, %s294
      %p296 = pneg %p66
      %p297 = pneg %p63
      %p298 = pneg %p87
      %p299 = pneg %p84
      %p300 = pneg %p108
      %p301 = pneg %p105
      %p302 = pneg %p129
      %p303 = pneg %p126
      %p304 = pneg %p150
      %p305 = pneg %p147
      %p306 = pneg %p171
      %p307 = pneg %p168
      %p308 = pneg %p192
      %p309 = pneg %p189
      %p310 = pneg %p218
      %p311 = pneg %p215
      %p312 = scmp.lt.s32.totalorder %s19, 1
      %s313 = scalar_select %p312, %s19, 1
      %s314 = smul.addr %s313, 2
      %s315 = smul.addr %s314, 8
      %s316 = scalar_lea.vmem %s8, %s315
      %s317 = smul.u32 12, %s19
      %p318 = scmp.lt.s32.totalorder %s317, 23
      %s319 = scalar_select %p318, %s317, 23
      %s320 = smul.addr %s319, 8
      %s321 = smul.addr %s320, 8
      %s322 = scalar_lea.vmem %s0, %s321
      %s323 = smul.u32 12, %s19
      %s324 = smul.u32 12, %s19
      %p325 = scmp.lt.s32.totalorder %s324, 23
      %s326 = scalar_select %p325, %s324, 23
      %s327 = smul.addr %s326, 8
      %s328 = smul.addr %s327, 8
      %s329 = scalar_lea.vmem %s1, %s328
      %s330 = smul.u32 12, %s19
      %p331 = scmp.lt.s32.totalorder %s19, 1
      %s332 = scalar_select %p331, %s19, 1
      %s333 = smul.addr %s332, 2
      %s334 = smul.addr %s333, 8
      %s335 = scalar_lea.vmem %s8, %s334
      %v336 = vld [vmem:[%s322] sm:$0xff]
      %v337 = vld [vmem:[%s322 + $0x8] sm:$0xff]
      %v338 = vld [vmem:[%s322 + $0x10] sm:$0xff]
      %v339 = vld [vmem:[%s322 + $0x18] sm:$0xff]
      %v340 = vld [vmem:[%s322 + $0x20] sm:$0xff]
      %v341 = vld [vmem:[%s322 + $0x28] sm:$0xff]
      %v342 = vld [vmem:[%s322 + $0x30] sm:$0xff]
      %v343 = vld [vmem:[%s322 + $0x38] sm:$0xff]
      %v344 = vld [vmem:[%s322 + $0x40] sm:$0xff]
      %v345 = vld [vmem:[%s322 + $0x48] sm:$0xff]
      %v346 = vld [vmem:[%s322 + $0x50] sm:$0xff]
      %v347 = vld [vmem:[%s322 + $0x58] sm:$0xff]
      %v348 = vld [vmem:[%s322 + $0x60] sm:$0xff]
      %v349 = vld [vmem:[%s322 + $0x68] sm:$0xff]
      %v350 = vld [vmem:[%s322 + $0x70] sm:$0xff]
      %v351 = vld [vmem:[%s322 + $0x78] sm:$0xff]
      %v352 = vld [vmem:[%s322 + $0x80] sm:$0xff]
      %v353 = vld [vmem:[%s322 + $0x88] sm:$0xff]
      %v354 = vld [vmem:[%s322 + $0x90] sm:$0xff]
      %v355 = vld [vmem:[%s322 + $0x98] sm:$0xff]
      %v356 = vld [vmem:[%s322 + $0xa0] sm:$0xff]
      %v357 = vld [vmem:[%s322 + $0xa8] sm:$0xff]
      %v358 = vld [vmem:[%s322 + $0xb0] sm:$0xff]
      %v359 = vld [vmem:[%s322 + $0xb8] sm:$0xff]
      %v360 = vld [vmem:[%s322 + $0xc0] sm:$0xff]
      %v361 = vld [vmem:[%s322 + $0xc8] sm:$0xff]
      %v362 = vld [vmem:[%s322 + $0xd0] sm:$0xff]
      %v363 = vld [vmem:[%s322 + $0xd8] sm:$0xff]
      %v364 = vld [vmem:[%s322 + $0xe0] sm:$0xff]
      %v365 = vld [vmem:[%s322 + $0xe8] sm:$0xff]
      %v366 = vld [vmem:[%s322 + $0xf0] sm:$0xff]
      %v367 = vld [vmem:[%s322 + $0xf8] sm:$0xff]
      %v368 = vld [vmem:[%s322 + $0x100] sm:$0xff]
      %v369 = vld [vmem:[%s322 + $0x108] sm:$0xff]
      %v370 = vld [vmem:[%s322 + $0x110] sm:$0xff]
      %v371 = vld [vmem:[%s322 + $0x118] sm:$0xff]
      %v372 = vld [vmem:[%s322 + $0x120] sm:$0xff]
      %v373 = vld [vmem:[%s322 + $0x128] sm:$0xff]
      %v374 = vld [vmem:[%s322 + $0x130] sm:$0xff]
      %v375 = vld [vmem:[%s322 + $0x138] sm:$0xff]
      %v376 = vld [vmem:[%s322 + $0x140] sm:$0xff]
      %v377 = vld [vmem:[%s322 + $0x148] sm:$0xff]
      %v378 = vld [vmem:[%s322 + $0x150] sm:$0xff]
      %v379 = vld [vmem:[%s322 + $0x158] sm:$0xff]
      %v380 = vld [vmem:[%s322 + $0x160] sm:$0xff]
      %v381 = vld [vmem:[%s322 + $0x168] sm:$0xff]
      %v382 = vld [vmem:[%s322 + $0x170] sm:$0xff]
      %v383 = vld [vmem:[%s322 + $0x178] sm:$0xff]
      %v384 = vld [vmem:[%s322 + $0x180] sm:$0xff]
      %v385 = vld [vmem:[%s322 + $0x188] sm:$0xff]
      %v386 = vld [vmem:[%s322 + $0x190] sm:$0xff]
      %v387 = vld [vmem:[%s322 + $0x198] sm:$0xff]
      %v388 = vld [vmem:[%s322 + $0x1a0] sm:$0xff]
      %v389 = vld [vmem:[%s322 + $0x1a8] sm:$0xff]
      %v390 = vld [vmem:[%s322 + $0x1b0] sm:$0xff]
      %v391 = vld [vmem:[%s322 + $0x1b8] sm:$0xff]
      %v392 = vld [vmem:[%s322 + $0x1c0] sm:$0xff]
      %v393 = vld [vmem:[%s322 + $0x1c8] sm:$0xff]
      %v394 = vld [vmem:[%s322 + $0x1d0] sm:$0xff]
      %v395 = vld [vmem:[%s322 + $0x1d8] sm:$0xff]
      %v396 = vld [vmem:[%s322 + $0x1e0] sm:$0xff]
      %v397 = vld [vmem:[%s322 + $0x1e8] sm:$0xff]
      %v398 = vld [vmem:[%s322 + $0x1f0] sm:$0xff]
      %v399 = vld [vmem:[%s322 + $0x1f8] sm:$0xff]
      %v400 = vld [vmem:[%s322 + $0x200] sm:$0xff]
      %v401 = vld [vmem:[%s322 + $0x208] sm:$0xff]
      %v402 = vld [vmem:[%s322 + $0x210] sm:$0xff]
      %v403 = vld [vmem:[%s322 + $0x218] sm:$0xff]
      %v404 = vld [vmem:[%s322 + $0x220] sm:$0xff]
      %v405 = vld [vmem:[%s322 + $0x228] sm:$0xff]
      %v406 = vld [vmem:[%s322 + $0x230] sm:$0xff]
      %v407 = vld [vmem:[%s322 + $0x238] sm:$0xff]
      %v408 = vld [vmem:[%s322 + $0x240] sm:$0xff]
      %v409 = vld [vmem:[%s322 + $0x248] sm:$0xff]
      %v410 = vld [vmem:[%s322 + $0x250] sm:$0xff]
      %v411 = vld [vmem:[%s322 + $0x258] sm:$0xff]
      %v412 = vld [vmem:[%s322 + $0x260] sm:$0xff]
      %v413 = vld [vmem:[%s322 + $0x268] sm:$0xff]
      %v414 = vld [vmem:[%s322 + $0x270] sm:$0xff]
      %v415 = vld [vmem:[%s322 + $0x278] sm:$0xff]
      %v416 = vld [vmem:[%s322 + $0x280] sm:$0xff]
      %v417 = vld [vmem:[%s322 + $0x288] sm:$0xff]
      %v418 = vld [vmem:[%s322 + $0x290] sm:$0xff]
      %v419 = vld [vmem:[%s322 + $0x298] sm:$0xff]
      %v420 = vld [vmem:[%s322 + $0x2a0] sm:$0xff]
      %v421 = vld [vmem:[%s322 + $0x2a8] sm:$0xff]
      %v422 = vld [vmem:[%s322 + $0x2b0] sm:$0xff]
      %v423 = vld [vmem:[%s322 + $0x2b8] sm:$0xff]
      %v424 = vld [vmem:[%s322 + $0x2c0] sm:$0xff]
      %v425 = vld [vmem:[%s322 + $0x2c8] sm:$0xff]
      %v426 = vld [vmem:[%s322 + $0x2d0] sm:$0xff]
      %v427 = vld [vmem:[%s322 + $0x2d8] sm:$0xff]
      %v428 = vld [vmem:[%s322 + $0x2e0] sm:$0xff]
      %v429 = vld [vmem:[%s322 + $0x2e8] sm:$0xff]
      %v430 = vld [vmem:[%s322 + $0x2f0] sm:$0xff]
      %v431 = vld [vmem:[%s322 + $0x2f8] sm:$0xff]
      %v432 = vld [vmem:[%s329] sm:$0xff]
      %v433 = vld [vmem:[%s329 + $0x8] sm:$0xff]
      %v434 = vld [vmem:[%s329 + $0x10] sm:$0xff]
      %v435 = vld [vmem:[%s329 + $0x18] sm:$0xff]
      %v436 = vld [vmem:[%s329 + $0x20] sm:$0xff]
      %v437 = vld [vmem:[%s329 + $0x28] sm:$0xff]
      %v438 = vld [vmem:[%s329 + $0x30] sm:$0xff]
      %v439 = vld [vmem:[%s329 + $0x38] sm:$0xff]
      %v440 = vld [vmem:[%s329 + $0x40] sm:$0xff]
      %v441 = vld [vmem:[%s329 + $0x48] sm:$0xff]
      %v442 = vld [vmem:[%s329 + $0x50] sm:$0xff]
      %v443 = vld [vmem:[%s329 + $0x58] sm:$0xff]
      %v444 = vld [vmem:[%s329 + $0x60] sm:$0xff]
      %v445 = vld [vmem:[%s329 + $0x68] sm:$0xff]
      %v446 = vld [vmem:[%s329 + $0x70] sm:$0xff]
      %v447 = vld [vmem:[%s329 + $0x78] sm:$0xff]
      %v448 = vld [vmem:[%s329 + $0x80] sm:$0xff]
      %v449 = vld [vmem:[%s329 + $0x88] sm:$0xff]
      %v450 = vld [vmem:[%s329 + $0x90] sm:$0xff]
      %v451 = vld [vmem:[%s329 + $0x98] sm:$0xff]
      %v452 = vld [vmem:[%s329 + $0xa0] sm:$0xff]
      %v453 = vld [vmem:[%s329 + $0xa8] sm:$0xff]
      %v454 = vld [vmem:[%s329 + $0xb0] sm:$0xff]
      %v455 = vld [vmem:[%s329 + $0xb8] sm:$0xff]
      %v456 = vld [vmem:[%s329 + $0xc0] sm:$0xff]
      %v457 = vld [vmem:[%s329 + $0xc8] sm:$0xff]
      %v458 = vld [vmem:[%s329 + $0xd0] sm:$0xff]
      %v459 = vld [vmem:[%s329 + $0xd8] sm:$0xff]
      %v460 = vld [vmem:[%s329 + $0xe0] sm:$0xff]
      %v461 = vld [vmem:[%s329 + $0xe8] sm:$0xff]
      %v462 = vld [vmem:[%s329 + $0xf0] sm:$0xff]
      %v463 = vld [vmem:[%s329 + $0xf8] sm:$0xff]
      %v464 = vld [vmem:[%s329 + $0x100] sm:$0xff]
      %v465 = vld [vmem:[%s329 + $0x108] sm:$0xff]
      %v466 = vld [vmem:[%s329 + $0x110] sm:$0xff]
      %v467 = vld [vmem:[%s329 + $0x118] sm:$0xff]
      %v468 = vld [vmem:[%s329 + $0x120] sm:$0xff]
      %v469 = vld [vmem:[%s329 + $0x128] sm:$0xff]
      %v470 = vld [vmem:[%s329 + $0x130] sm:$0xff]
      %v471 = vld [vmem:[%s329 + $0x138] sm:$0xff]
      %v472 = vld [vmem:[%s329 + $0x140] sm:$0xff]
      %v473 = vld [vmem:[%s329 + $0x148] sm:$0xff]
      %v474 = vld [vmem:[%s329 + $0x150] sm:$0xff]
      %v475 = vld [vmem:[%s329 + $0x158] sm:$0xff]
      %v476 = vld [vmem:[%s329 + $0x160] sm:$0xff]
      %v477 = vld [vmem:[%s329 + $0x168] sm:$0xff]
      %v478 = vld [vmem:[%s329 + $0x170] sm:$0xff]
      %v479 = vld [vmem:[%s329 + $0x178] sm:$0xff]
      %v480 = vld [vmem:[%s329 + $0x180] sm:$0xff]
      %v481 = vld [vmem:[%s329 + $0x188] sm:$0xff]
      %v482 = vld [vmem:[%s329 + $0x190] sm:$0xff]
      %v483 = vld [vmem:[%s329 + $0x198] sm:$0xff]
      %v484 = vld [vmem:[%s329 + $0x1a0] sm:$0xff]
      %v485 = vld [vmem:[%s329 + $0x1a8] sm:$0xff]
      %v486 = vld [vmem:[%s329 + $0x1b0] sm:$0xff]
      %v487 = vld [vmem:[%s329 + $0x1b8] sm:$0xff]
      %v488 = vld [vmem:[%s329 + $0x1c0] sm:$0xff]
      %v489 = vld [vmem:[%s329 + $0x1c8] sm:$0xff]
      %v490 = vld [vmem:[%s329 + $0x1d0] sm:$0xff]
      %v491 = vld [vmem:[%s329 + $0x1d8] sm:$0xff]
      %v492 = vld [vmem:[%s329 + $0x1e0] sm:$0xff]
      %v493 = vld [vmem:[%s329 + $0x1e8] sm:$0xff]
      %v494 = vld [vmem:[%s329 + $0x1f0] sm:$0xff]
      %v495 = vld [vmem:[%s329 + $0x1f8] sm:$0xff]
      %v496 = vld [vmem:[%s329 + $0x200] sm:$0xff]
      %v497 = vld [vmem:[%s329 + $0x208] sm:$0xff]
      %v498 = vld [vmem:[%s329 + $0x210] sm:$0xff]
      %v499 = vld [vmem:[%s329 + $0x218] sm:$0xff]
      %v500 = vld [vmem:[%s329 + $0x220] sm:$0xff]
      %v501 = vld [vmem:[%s329 + $0x228] sm:$0xff]
      %v502 = vld [vmem:[%s329 + $0x230] sm:$0xff]
      %v503 = vld [vmem:[%s329 + $0x238] sm:$0xff]
      %v504 = vld [vmem:[%s329 + $0x240] sm:$0xff]
      %v505 = vld [vmem:[%s329 + $0x248] sm:$0xff]
      %v506 = vld [vmem:[%s329 + $0x250] sm:$0xff]
      %v507 = vld [vmem:[%s329 + $0x258] sm:$0xff]
      %v508 = vld [vmem:[%s329 + $0x260] sm:$0xff]
      %v509 = vld [vmem:[%s329 + $0x268] sm:$0xff]
      %v510 = vld [vmem:[%s329 + $0x270] sm:$0xff]
      %v511 = vld [vmem:[%s329 + $0x278] sm:$0xff]
      %v512 = vld [vmem:[%s329 + $0x280] sm:$0xff]
      %v513 = vld [vmem:[%s329 + $0x288] sm:$0xff]
      %v514 = vld [vmem:[%s329 + $0x290] sm:$0xff]
      %v515 = vld [vmem:[%s329 + $0x298] sm:$0xff]
      %v516 = vld [vmem:[%s329 + $0x2a0] sm:$0xff]
      %v517 = vld [vmem:[%s329 + $0x2a8] sm:$0xff]
      %v518 = vld [vmem:[%s329 + $0x2b0] sm:$0xff]
      %v519 = vld [vmem:[%s329 + $0x2b8] sm:$0xff]
      %v520 = vld [vmem:[%s329 + $0x2c0] sm:$0xff]
      %v521 = vld [vmem:[%s329 + $0x2c8] sm:$0xff]
      %v522 = vld [vmem:[%s329 + $0x2d0] sm:$0xff]
      %v523 = vld [vmem:[%s329 + $0x2d8] sm:$0xff]
      %v524 = vld [vmem:[%s329 + $0x2e0] sm:$0xff]
      %v525 = vld [vmem:[%s329 + $0x2e8] sm:$0xff]
      %v526 = vld [vmem:[%s329 + $0x2f0] sm:$0xff]
      %v527 = vld [vmem:[%s329 + $0x2f8] sm:$0xff]
      %v528 = vld [vmem:[%s2] sm:$0xff]
      %v529 = vld [vmem:[%s2 + $0x8] sm:$0xff]
      %vm530 = vcmask 130048
      %v532 = vsel %vm530, %v336, 0
      %v535 = vsel %vm530, %v337, 0
      %v538 = vsel %vm530, %v338, 0
      %v541 = vsel %vm530, %v339, 0
      %v544 = vsel %vm530, %v340, 0
      %v547 = vsel %vm530, %v341, 0
      %v550 = vsel %vm530, %v342, 0
      %v553 = vsel %vm530, %v343, 0
      %v556 = vsel %vm530, %v344, 0
      %v559 = vsel %vm530, %v345, 0
      %v562 = vsel %vm530, %v346, 0
      %v565 = vsel %vm530, %v347, 0
      %v568 = vsel %vm530, %v348, 0
      %v571 = vsel %vm530, %v349, 0
      %v574 = vsel %vm530, %v350, 0
      %v577 = vsel %vm530, %v351, 0
      %v580 = vsel %vm530, %v352, 0
      %v583 = vsel %vm530, %v353, 0
      %v586 = vsel %vm530, %v354, 0
      %v589 = vsel %vm530, %v355, 0
      %v592 = vsel %vm530, %v356, 0
      %v595 = vsel %vm530, %v357, 0
      %v598 = vsel %vm530, %v358, 0
      %v601 = vsel %vm530, %v359, 0
      %v604 = vsel %vm530, %v360, 0
      %v607 = vsel %vm530, %v361, 0
      %v610 = vsel %vm530, %v362, 0
      %v613 = vsel %vm530, %v363, 0
      %v616 = vsel %vm530, %v364, 0
      %v619 = vsel %vm530, %v365, 0
      %v622 = vsel %vm530, %v366, 0
      %v625 = vsel %vm530, %v367, 0
      %v628 = vsel %vm530, %v368, 0
      %v631 = vsel %vm530, %v369, 0
      %v634 = vsel %vm530, %v370, 0
      %v637 = vsel %vm530, %v371, 0
      %v640 = vsel %vm530, %v372, 0
      %v643 = vsel %vm530, %v373, 0
      %v646 = vsel %vm530, %v374, 0
      %v649 = vsel %vm530, %v375, 0
      %v652 = vsel %vm530, %v376, 0
      %v655 = vsel %vm530, %v377, 0
      %v658 = vsel %vm530, %v378, 0
      %v661 = vsel %vm530, %v379, 0
      %v664 = vsel %vm530, %v380, 0
      %v667 = vsel %vm530, %v381, 0
      %v670 = vsel %vm530, %v382, 0
      %v673 = vsel %vm530, %v383, 0
      %v676 = vsel %vm530, %v384, 0
      %v679 = vsel %vm530, %v385, 0
      %v682 = vsel %vm530, %v386, 0
      %v685 = vsel %vm530, %v387, 0
      %v688 = vsel %vm530, %v388, 0
      %v691 = vsel %vm530, %v389, 0
      %v694 = vsel %vm530, %v390, 0
      %v697 = vsel %vm530, %v391, 0
      %v700 = vsel %vm530, %v392, 0
      %v703 = vsel %vm530, %v393, 0
      %v706 = vsel %vm530, %v394, 0
      %v709 = vsel %vm530, %v395, 0
      %v712 = vsel %vm530, %v396, 0
      %v715 = vsel %vm530, %v397, 0
      %v718 = vsel %vm530, %v398, 0
      %v721 = vsel %vm530, %v399, 0
      %v724 = vsel %vm530, %v400, 0
      %v727 = vsel %vm530, %v401, 0
      %v730 = vsel %vm530, %v402, 0
      %v733 = vsel %vm530, %v403, 0
      %v736 = vsel %vm530, %v404, 0
      %v739 = vsel %vm530, %v405, 0
      %v742 = vsel %vm530, %v406, 0
      %v745 = vsel %vm530, %v407, 0
      %v748 = vsel %vm530, %v408, 0
      %v751 = vsel %vm530, %v409, 0
      %v754 = vsel %vm530, %v410, 0
      %v757 = vsel %vm530, %v411, 0
      %v760 = vsel %vm530, %v412, 0
      %v763 = vsel %vm530, %v413, 0
      %v766 = vsel %vm530, %v414, 0
      %v769 = vsel %vm530, %v415, 0
      %v772 = vsel %vm530, %v416, 0
      %v775 = vsel %vm530, %v417, 0
      %v778 = vsel %vm530, %v418, 0
      %v781 = vsel %vm530, %v419, 0
      %v784 = vsel %vm530, %v420, 0
      %v787 = vsel %vm530, %v421, 0
      %v790 = vsel %vm530, %v422, 0
      %v793 = vsel %vm530, %v423, 0
      %v796 = vsel %vm530, %v424, 0
      %v799 = vsel %vm530, %v425, 0
      %v802 = vsel %vm530, %v426, 0
      %v805 = vsel %vm530, %v427, 0
      %v808 = vsel %vm530, %v428, 0
      %v811 = vsel %vm530, %v429, 0
      %v814 = vsel %vm530, %v430, 0
      %v817 = vsel %vm530, %v431, 0
      %819 = vmatprep.subr.mxu0 0.0
      %820 = vmatpush1.msra.mxu0 0.0
      %821 = vmatprep.subr.mxu0 0.0
      %822 = vmatpush1.msra.mxu0 0.0
      %823 = vmatprep.subr.mxu0 0.0
      %824 = vmatpush1.msra.mxu0 0.0
      %825 = vmatprep.subr.mxu0 0.0
      %826 = vmatpush1.msra.mxu0 0.0
      %827 = vmatprep.subr.mxu0 0.0
      %828 = vmatpush1.msra.mxu0 0.0
      %829 = vmatprep.subr.mxu0 0.0
      %830 = vmatpush1.msra.mxu0 0.0
      %831 = vmatprep.subr.mxu0 0.0
      %832 = vmatpush1.msra.mxu0 0.0
      %833 = vmatprep.subr.mxu0 0.0
      %834 = vmatpush1.msra.mxu0 0.0
      %835 = vmatprep.subr.mxu0 0.0
      %836 = vmatpush1.msra.mxu0 0.0
      %837 = vmatprep.subr.mxu0 0.0
      %838 = vmatpush1.msra.mxu0 0.0
      %839 = vmatprep.subr.mxu0 0.0
      %840 = vmatpush1.msra.mxu0 0.0
      %841 = vmatprep.subr.mxu0 0.0
      %842 = vmatpush1.msra.mxu0 0.0
      %843 = vmatprep.subr.mxu0 0.0
      %844 = vmatpush1.msra.mxu0 0.0
      %845 = vmatprep.subr.mxu0 0.0
      %846 = vmatpush1.msra.mxu0 0.0
      %847 = vmatprep.subr.mxu0 0.0
      %848 = vmatpush1.msra.mxu0 %v529
      %849 = vmatprep.subr.mxu0 0.0
      %850 = vmatpush1.msra.mxu0 %v528
      %851 = vmatprep.subr.mxu0 0.0
      %852 = vmatpush2.msra.mxu0 0.0
      %853 = vmatprep.subr.mxu0 0.0
      %854 = vmatpush2.msra.mxu0 0.0
      %855 = vmatprep.subr.mxu0 0.0
      %856 = vmatpush2.msra.mxu0 0.0
      %857 = vmatprep.subr.mxu0 0.0
      %858 = vmatpush2.msra.mxu0 0.0
      %859 = vmatprep.subr.mxu0 0.0
      %860 = vmatpush2.msra.mxu0 0.0
      %861 = vmatprep.subr.mxu0 0.0
      %862 = vmatpush2.msra.mxu0 0.0
      %863 = vmatprep.subr.mxu0 0.0
      %864 = vmatpush2.msra.mxu0 0.0
      %865 = vmatprep.subr.mxu0 0.0
      %866 = vmatpush2.msra.mxu0 0.0
      %867 = vmatprep.subr.mxu0 0.0
      %868 = vmatpush2.msra.mxu0 0.0
      %869 = vmatprep.subr.mxu0 0.0
      %870 = vmatpush2.msra.mxu0 0.0
      %871 = vmatprep.subr.mxu0 0.0
      %872 = vmatpush2.msra.mxu0 0.0
      %873 = vmatprep.subr.mxu0 0.0
      %874 = vmatpush2.msra.mxu0 0.0
      %875 = vmatprep.subr.mxu0 0.0
      %876 = vmatpush2.msra.mxu0 0.0
      %877 = vmatprep.subr.mxu0 0.0
      %878 = vmatpush2.msra.mxu0 0.0
      %879 = vmatprep.subr.mxu0 0.0
      %880 = vmatpush2.msra.mxu0 0.0
      %881 = vmatprep.subr.mxu0 0.0
      %882 = vmatpush2.msra.mxu0 0.0
      %883 = vmatprep.mubr.f32.mxu0 0.0
      %884 = vmatmul.mubr.f32.gmra.mxu0 %v532
      %v885 = vpop.f32.mrf.mxu0
      %v886 = vadd.f32 0.0, %v885
      %v887 = vpop.f32.mrf.mxu0
      %888 = vmatprep.mubr.f32.mxu0 0.0
      %889 = vmatmul.mubr.f32.gmra.mxu0 %v535
      %v890 = vpop.f32.mrf.mxu0
      %v891 = vadd.f32 0.0, %v890
      %v892 = vpop.f32.mrf.mxu0
      %893 = vmatprep.mubr.f32.mxu0 0.0
      %894 = vmatmul.mubr.f32.gmra.mxu0 %v538
      %v895 = vpop.f32.mrf.mxu0
      %v896 = vadd.f32 0.0, %v895
      %v897 = vpop.f32.mrf.mxu0
      %898 = vmatprep.mubr.f32.mxu0 0.0
      %899 = vmatmul.mubr.f32.gmra.mxu0 %v541
      %v900 = vpop.f32.mrf.mxu0
      %v901 = vadd.f32 0.0, %v900
      %v902 = vpop.f32.mrf.mxu0
      %903 = vmatprep.mubr.f32.mxu0 0.0
      %904 = vmatmul.mubr.f32.gmra.mxu0 %v544
      %v905 = vpop.f32.mrf.mxu0
      %v906 = vadd.f32 0.0, %v905
      %v907 = vpop.f32.mrf.mxu0
      %908 = vmatprep.mubr.f32.mxu0 0.0
      %909 = vmatmul.mubr.f32.gmra.mxu0 %v547
      %v910 = vpop.f32.mrf.mxu0
      %v911 = vadd.f32 0.0, %v910
      %v912 = vpop.f32.mrf.mxu0
      %913 = vmatprep.mubr.f32.mxu0 0.0
      %914 = vmatmul.mubr.f32.gmra.mxu0 %v550
      %v915 = vpop.f32.mrf.mxu0
      %v916 = vadd.f32 0.0, %v915
      %v917 = vpop.f32.mrf.mxu0
      %918 = vmatprep.mubr.f32.mxu0 0.0
      %919 = vmatmul.mubr.f32.gmra.mxu0 %v553
      %v920 = vpop.f32.mrf.mxu0
      %v921 = vadd.f32 0.0, %v920
      %v922 = vpop.f32.mrf.mxu0
      %923 = vmatprep.mubr.f32.mxu0 0.0
      %924 = vmatmul.mubr.f32.gmra.mxu0 %v556
      %v925 = vpop.f32.mrf.mxu0
      %v926 = vadd.f32 0.0, %v925
      %v927 = vpop.f32.mrf.mxu0
      %928 = vmatprep.mubr.f32.mxu0 0.0
      %929 = vmatmul.mubr.f32.gmra.mxu0 %v559
      %v930 = vpop.f32.mrf.mxu0
      %v931 = vadd.f32 0.0, %v930
      %v932 = vpop.f32.mrf.mxu0
      %933 = vmatprep.mubr.f32.mxu0 0.0
      %934 = vmatmul.mubr.f32.gmra.mxu0 %v562
      %v935 = vpop.f32.mrf.mxu0
      %v936 = vadd.f32 0.0, %v935
      %v937 = vpop.f32.mrf.mxu0
      %938 = vmatprep.mubr.f32.mxu0 0.0
      %939 = vmatmul.mubr.f32.gmra.mxu0 %v565
      %v940 = vpop.f32.mrf.mxu0
      %v941 = vadd.f32 0.0, %v940
      %v942 = vpop.f32.mrf.mxu0
      %943 = vmatprep.mubr.f32.mxu0 0.0
      %944 = vmatmul.mubr.f32.gmra.mxu0 %v568
      %v945 = vpop.f32.mrf.mxu0
      %v946 = vadd.f32 0.0, %v945
      %v947 = vpop.f32.mrf.mxu0
      %948 = vmatprep.mubr.f32.mxu0 0.0
      %949 = vmatmul.mubr.f32.gmra.mxu0 %v571
      %v950 = vpop.f32.mrf.mxu0
      %v951 = vadd.f32 0.0, %v950
      %v952 = vpop.f32.mrf.mxu0
      %953 = vmatprep.mubr.f32.mxu0 0.0
      %954 = vmatmul.mubr.f32.gmra.mxu0 %v574
      %v955 = vpop.f32.mrf.mxu0
      %v956 = vadd.f32 0.0, %v955
      %v957 = vpop.f32.mrf.mxu0
      %958 = vmatprep.mubr.f32.mxu0 0.0
      %959 = vmatmul.mubr.f32.gmra.mxu0 %v577
      %v960 = vpop.f32.mrf.mxu0
      %v961 = vadd.f32 0.0, %v960
      %v962 = vpop.f32.mrf.mxu0
      %963 = vmatprep.mubr.f32.mxu0 0.0
      %964 = vmatmul.mubr.f32.gmra.mxu0 %v580
      %v965 = vpop.f32.mrf.mxu0
      %v966 = vadd.f32 0.0, %v965
      %v967 = vpop.f32.mrf.mxu0
      %968 = vmatprep.mubr.f32.mxu0 0.0
      %969 = vmatmul.mubr.f32.gmra.mxu0 %v583
      %v970 = vpop.f32.mrf.mxu0
      %v971 = vadd.f32 0.0, %v970
      %v972 = vpop.f32.mrf.mxu0
      %973 = vmatprep.mubr.f32.mxu0 0.0
      %974 = vmatmul.mubr.f32.gmra.mxu0 %v586
      %v975 = vpop.f32.mrf.mxu0
      %v976 = vadd.f32 0.0, %v975
      %v977 = vpop.f32.mrf.mxu0
      %978 = vmatprep.mubr.f32.mxu0 0.0
      %979 = vmatmul.mubr.f32.gmra.mxu0 %v589
      %v980 = vpop.f32.mrf.mxu0
      %v981 = vadd.f32 0.0, %v980
      %v982 = vpop.f32.mrf.mxu0
      %983 = vmatprep.mubr.f32.mxu0 0.0
      %984 = vmatmul.mubr.f32.gmra.mxu0 %v592
      %v985 = vpop.f32.mrf.mxu0
      %v986 = vadd.f32 0.0, %v985
      %v987 = vpop.f32.mrf.mxu0
      %988 = vmatprep.mubr.f32.mxu0 0.0
      %989 = vmatmul.mubr.f32.gmra.mxu0 %v595
      %v990 = vpop.f32.mrf.mxu0
      %v991 = vadd.f32 0.0, %v990
      %v992 = vpop.f32.mrf.mxu0
      %993 = vmatprep.mubr.f32.mxu0 0.0
      %994 = vmatmul.mubr.f32.gmra.mxu0 %v598
      %v995 = vpop.f32.mrf.mxu0
      %v996 = vadd.f32 0.0, %v995
      %v997 = vpop.f32.mrf.mxu0
      %998 = vmatprep.mubr.f32.mxu0 0.0
      %999 = vmatmul.mubr.f32.gmra.mxu0 %v601
      %v1000 = vpop.f32.mrf.mxu0
      %v1001 = vadd.f32 0.0, %v1000
      %v1002 = vpop.f32.mrf.mxu0
      %1003 = vmatprep.mubr.f32.mxu0 0.0
      %1004 = vmatmul.mubr.f32.gmra.mxu0 %v604
      %v1005 = vpop.f32.mrf.mxu0
      %v1006 = vadd.f32 0.0, %v1005
      %v1007 = vpop.f32.mrf.mxu0
      %1008 = vmatprep.mubr.f32.mxu0 0.0
      %1009 = vmatmul.mubr.f32.gmra.mxu0 %v607
      %v1010 = vpop.f32.mrf.mxu0
      %v1011 = vadd.f32 0.0, %v1010
      %v1012 = vpop.f32.mrf.mxu0
      %1013 = vmatprep.mubr.f32.mxu0 0.0
      %1014 = vmatmul.mubr.f32.gmra.mxu0 %v610
      %v1015 = vpop.f32.mrf.mxu0
      %v1016 = vadd.f32 0.0, %v1015
      %v1017 = vpop.f32.mrf.mxu0
      %1018 = vmatprep.mubr.f32.mxu0 0.0
      %1019 = vmatmul.mubr.f32.gmra.mxu0 %v613
      %v1020 = vpop.f32.mrf.mxu0
      %v1021 = vadd.f32 0.0, %v1020
      %v1022 = vpop.f32.mrf.mxu0
      %1023 = vmatprep.mubr.f32.mxu0 0.0
      %1024 = vmatmul.mubr.f32.gmra.mxu0 %v616
      %v1025 = vpop.f32.mrf.mxu0
      %v1026 = vadd.f32 0.0, %v1025
      %v1027 = vpop.f32.mrf.mxu0
      %1028 = vmatprep.mubr.f32.mxu0 0.0
      %1029 = vmatmul.mubr.f32.gmra.mxu0 %v619
      %v1030 = vpop.f32.mrf.mxu0
      %v1031 = vadd.f32 0.0, %v1030
      %v1032 = vpop.f32.mrf.mxu0
      %1033 = vmatprep.mubr.f32.mxu0 0.0
      %1034 = vmatmul.mubr.f32.gmra.mxu0 %v622
      %v1035 = vpop.f32.mrf.mxu0
      %v1036 = vadd.f32 0.0, %v1035
      %v1037 = vpop.f32.mrf.mxu0
      %1038 = vmatprep.mubr.f32.mxu0 0.0
      %1039 = vmatmul.mubr.f32.gmra.mxu0 %v625
      %v1040 = vpop.f32.mrf.mxu0
      %v1041 = vadd.f32 0.0, %v1040
      %v1042 = vpop.f32.mrf.mxu0
      %1043 = vmatprep.mubr.f32.mxu0 0.0
      %1044 = vmatmul.mubr.f32.gmra.mxu0 %v628
      %v1045 = vpop.f32.mrf.mxu0
      %v1046 = vadd.f32 0.0, %v1045
      %v1047 = vpop.f32.mrf.mxu0
      %1048 = vmatprep.mubr.f32.mxu0 0.0
      %1049 = vmatmul.mubr.f32.gmra.mxu0 %v631
      %v1050 = vpop.f32.mrf.mxu0
      %v1051 = vadd.f32 0.0, %v1050
      %v1052 = vpop.f32.mrf.mxu0
      %1053 = vmatprep.mubr.f32.mxu0 0.0
      %1054 = vmatmul.mubr.f32.gmra.mxu0 %v634
      %v1055 = vpop.f32.mrf.mxu0
      %v1056 = vadd.f32 0.0, %v1055
      %v1057 = vpop.f32.mrf.mxu0
      %1058 = vmatprep.mubr.f32.mxu0 0.0
      %1059 = vmatmul.mubr.f32.gmra.mxu0 %v637
      %v1060 = vpop.f32.mrf.mxu0
      %v1061 = vadd.f32 0.0, %v1060
      %v1062 = vpop.f32.mrf.mxu0
      %1063 = vmatprep.mubr.f32.mxu0 0.0
      %1064 = vmatmul.mubr.f32.gmra.mxu0 %v640
      %v1065 = vpop.f32.mrf.mxu0
      %v1066 = vadd.f32 0.0, %v1065
      %v1067 = vpop.f32.mrf.mxu0
      %1068 = vmatprep.mubr.f32.mxu0 0.0
      %1069 = vmatmul.mubr.f32.gmra.mxu0 %v643
      %v1070 = vpop.f32.mrf.mxu0
      %v1071 = vadd.f32 0.0, %v1070
      %v1072 = vpop.f32.mrf.mxu0
      %1073 = vmatprep.mubr.f32.mxu0 0.0
      %1074 = vmatmul.mubr.f32.gmra.mxu0 %v646
      %v1075 = vpop.f32.mrf.mxu0
      %v1076 = vadd.f32 0.0, %v1075
      %v1077 = vpop.f32.mrf.mxu0
      %1078 = vmatprep.mubr.f32.mxu0 0.0
      %1079 = vmatmul.mubr.f32.gmra.mxu0 %v649
      %v1080 = vpop.f32.mrf.mxu0
      %v1081 = vadd.f32 0.0, %v1080
      %v1082 = vpop.f32.mrf.mxu0
      %1083 = vmatprep.mubr.f32.mxu0 0.0
      %1084 = vmatmul.mubr.f32.gmra.mxu0 %v652
      %v1085 = vpop.f32.mrf.mxu0
      %v1086 = vadd.f32 0.0, %v1085
      %v1087 = vpop.f32.mrf.mxu0
      %1088 = vmatprep.mubr.f32.mxu0 0.0
      %1089 = vmatmul.mubr.f32.gmra.mxu0 %v655
      %v1090 = vpop.f32.mrf.mxu0
      %v1091 = vadd.f32 0.0, %v1090
      %v1092 = vpop.f32.mrf.mxu0
      %1093 = vmatprep.mubr.f32.mxu0 0.0
      %1094 = vmatmul.mubr.f32.gmra.mxu0 %v658
      %v1095 = vpop.f32.mrf.mxu0
      %v1096 = vadd.f32 0.0, %v1095
      %v1097 = vpop.f32.mrf.mxu0
      %1098 = vmatprep.mubr.f32.mxu0 0.0
      %1099 = vmatmul.mubr.f32.gmra.mxu0 %v661
      %v1100 = vpop.f32.mrf.mxu0
      %v1101 = vadd.f32 0.0, %v1100
      %v1102 = vpop.f32.mrf.mxu0
      %1103 = vmatprep.mubr.f32.mxu0 0.0
      %1104 = vmatmul.mubr.f32.gmra.mxu0 %v664
      %v1105 = vpop.f32.mrf.mxu0
      %v1106 = vadd.f32 0.0, %v1105
      %v1107 = vpop.f32.mrf.mxu0
      %1108 = vmatprep.mubr.f32.mxu0 0.0
      %1109 = vmatmul.mubr.f32.gmra.mxu0 %v667
      %v1110 = vpop.f32.mrf.mxu0
      %v1111 = vadd.f32 0.0, %v1110
      %v1112 = vpop.f32.mrf.mxu0
      %1113 = vmatprep.mubr.f32.mxu0 0.0
      %1114 = vmatmul.mubr.f32.gmra.mxu0 %v670
      %v1115 = vpop.f32.mrf.mxu0
      %v1116 = vadd.f32 0.0, %v1115
      %v1117 = vpop.f32.mrf.mxu0
      %1118 = vmatprep.mubr.f32.mxu0 0.0
      %1119 = vmatmul.mubr.f32.gmra.mxu0 %v673
      %v1120 = vpop.f32.mrf.mxu0
      %v1121 = vadd.f32 0.0, %v1120
      %v1122 = vpop.f32.mrf.mxu0
      %1123 = vmatprep.mubr.f32.mxu0 0.0
      %1124 = vmatmul.mubr.f32.gmra.mxu0 %v676
      %v1125 = vpop.f32.mrf.mxu0
      %v1126 = vadd.f32 0.0, %v1125
      %v1127 = vpop.f32.mrf.mxu0
      %1128 = vmatprep.mubr.f32.mxu0 0.0
      %1129 = vmatmul.mubr.f32.gmra.mxu0 %v679
      %v1130 = vpop.f32.mrf.mxu0
      %v1131 = vadd.f32 0.0, %v1130
      %v1132 = vpop.f32.mrf.mxu0
      %1133 = vmatprep.mubr.f32.mxu0 0.0
      %1134 = vmatmul.mubr.f32.gmra.mxu0 %v682
      %v1135 = vpop.f32.mrf.mxu0
      %v1136 = vadd.f32 0.0, %v1135
      %v1137 = vpop.f32.mrf.mxu0
      %1138 = vmatprep.mubr.f32.mxu0 0.0
      %1139 = vmatmul.mubr.f32.gmra.mxu0 %v685
      %v1140 = vpop.f32.mrf.mxu0
      %v1141 = vadd.f32 0.0, %v1140
      %v1142 = vpop.f32.mrf.mxu0
      %1143 = vmatprep.mubr.f32.mxu0 0.0
      %1144 = vmatmul.mubr.f32.gmra.mxu0 %v688
      %v1145 = vpop.f32.mrf.mxu0
      %v1146 = vadd.f32 0.0, %v1145
      %v1147 = vpop.f32.mrf.mxu0
      %1148 = vmatprep.mubr.f32.mxu0 0.0
      %1149 = vmatmul.mubr.f32.gmra.mxu0 %v691
      %v1150 = vpop.f32.mrf.mxu0
      %v1151 = vadd.f32 0.0, %v1150
      %v1152 = vpop.f32.mrf.mxu0
      %1153 = vmatprep.mubr.f32.mxu0 0.0
      %1154 = vmatmul.mubr.f32.gmra.mxu0 %v694
      %v1155 = vpop.f32.mrf.mxu0
      %v1156 = vadd.f32 0.0, %v1155
      %v1157 = vpop.f32.mrf.mxu0
      %1158 = vmatprep.mubr.f32.mxu0 0.0
      %1159 = vmatmul.mubr.f32.gmra.mxu0 %v697
      %v1160 = vpop.f32.mrf.mxu0
      %v1161 = vadd.f32 0.0, %v1160
      %v1162 = vpop.f32.mrf.mxu0
      %1163 = vmatprep.mubr.f32.mxu0 0.0
      %1164 = vmatmul.mubr.f32.gmra.mxu0 %v700
      %v1165 = vpop.f32.mrf.mxu0
      %v1166 = vadd.f32 0.0, %v1165
      %v1167 = vpop.f32.mrf.mxu0
      %1168 = vmatprep.mubr.f32.mxu0 0.0
      %1169 = vmatmul.mubr.f32.gmra.mxu0 %v703
      %v1170 = vpop.f32.mrf.mxu0
      %v1171 = vadd.f32 0.0, %v1170
      %v1172 = vpop.f32.mrf.mxu0
      %1173 = vmatprep.mubr.f32.mxu0 0.0
      %1174 = vmatmul.mubr.f32.gmra.mxu0 %v706
      %v1175 = vpop.f32.mrf.mxu0
      %v1176 = vadd.f32 0.0, %v1175
      %v1177 = vpop.f32.mrf.mxu0
      %1178 = vmatprep.mubr.f32.mxu0 0.0
      %1179 = vmatmul.mubr.f32.gmra.mxu0 %v709
      %v1180 = vpop.f32.mrf.mxu0
      %v1181 = vadd.f32 0.0, %v1180
      %v1182 = vpop.f32.mrf.mxu0
      %1183 = vmatprep.mubr.f32.mxu0 0.0
      %1184 = vmatmul.mubr.f32.gmra.mxu0 %v712
      %v1185 = vpop.f32.mrf.mxu0
      %v1186 = vadd.f32 0.0, %v1185
      %v1187 = vpop.f32.mrf.mxu0
      %1188 = vmatprep.mubr.f32.mxu0 0.0
      %1189 = vmatmul.mubr.f32.gmra.mxu0 %v715
      %v1190 = vpop.f32.mrf.mxu0
      %v1191 = vadd.f32 0.0, %v1190
      %v1192 = vpop.f32.mrf.mxu0
      %1193 = vmatprep.mubr.f32.mxu0 0.0
      %1194 = vmatmul.mubr.f32.gmra.mxu0 %v718
      %v1195 = vpop.f32.mrf.mxu0
      %v1196 = vadd.f32 0.0, %v1195
      %v1197 = vpop.f32.mrf.mxu0
      %1198 = vmatprep.mubr.f32.mxu0 0.0
      %1199 = vmatmul.mubr.f32.gmra.mxu0 %v721
      %v1200 = vpop.f32.mrf.mxu0
      %v1201 = vadd.f32 0.0, %v1200
      %v1202 = vpop.f32.mrf.mxu0
      %1203 = vmatprep.mubr.f32.mxu0 0.0
      %1204 = vmatmul.mubr.f32.gmra.mxu0 %v724
      %v1205 = vpop.f32.mrf.mxu0
      %v1206 = vadd.f32 0.0, %v1205
      %v1207 = vpop.f32.mrf.mxu0
      %1208 = vmatprep.mubr.f32.mxu0 0.0
      %1209 = vmatmul.mubr.f32.gmra.mxu0 %v727
      %v1210 = vpop.f32.mrf.mxu0
      %v1211 = vadd.f32 0.0, %v1210
      %v1212 = vpop.f32.mrf.mxu0
      %1213 = vmatprep.mubr.f32.mxu0 0.0
      %1214 = vmatmul.mubr.f32.gmra.mxu0 %v730
      %v1215 = vpop.f32.mrf.mxu0
      %v1216 = vadd.f32 0.0, %v1215
      %v1217 = vpop.f32.mrf.mxu0
      %1218 = vmatprep.mubr.f32.mxu0 0.0
      %1219 = vmatmul.mubr.f32.gmra.mxu0 %v733
      %v1220 = vpop.f32.mrf.mxu0
      %v1221 = vadd.f32 0.0, %v1220
      %v1222 = vpop.f32.mrf.mxu0
      %1223 = vmatprep.mubr.f32.mxu0 0.0
      %1224 = vmatmul.mubr.f32.gmra.mxu0 %v736
      %v1225 = vpop.f32.mrf.mxu0
      %v1226 = vadd.f32 0.0, %v1225
      %v1227 = vpop.f32.mrf.mxu0
      %1228 = vmatprep.mubr.f32.mxu0 0.0
      %1229 = vmatmul.mubr.f32.gmra.mxu0 %v739
      %v1230 = vpop.f32.mrf.mxu0
      %v1231 = vadd.f32 0.0, %v1230
      %v1232 = vpop.f32.mrf.mxu0
      %1233 = vmatprep.mubr.f32.mxu0 0.0
      %1234 = vmatmul.mubr.f32.gmra.mxu0 %v742
      %v1235 = vpop.f32.mrf.mxu0
      %v1236 = vadd.f32 0.0, %v1235
      %v1237 = vpop.f32.mrf.mxu0
      %1238 = vmatprep.mubr.f32.mxu0 0.0
      %1239 = vmatmul.mubr.f32.gmra.mxu0 %v745
      %v1240 = vpop.f32.mrf.mxu0
      %v1241 = vadd.f32 0.0, %v1240
      %v1242 = vpop.f32.mrf.mxu0
      %1243 = vmatprep.mubr.f32.mxu0 0.0
      %1244 = vmatmul.mubr.f32.gmra.mxu0 %v748
      %v1245 = vpop.f32.mrf.mxu0
      %v1246 = vadd.f32 0.0, %v1245
      %v1247 = vpop.f32.mrf.mxu0
      %1248 = vmatprep.mubr.f32.mxu0 0.0
      %1249 = vmatmul.mubr.f32.gmra.mxu0 %v751
      %v1250 = vpop.f32.mrf.mxu0
      %v1251 = vadd.f32 0.0, %v1250
      %v1252 = vpop.f32.mrf.mxu0
      %1253 = vmatprep.mubr.f32.mxu0 0.0
      %1254 = vmatmul.mubr.f32.gmra.mxu0 %v754
      %v1255 = vpop.f32.mrf.mxu0
      %v1256 = vadd.f32 0.0, %v1255
      %v1257 = vpop.f32.mrf.mxu0
      %1258 = vmatprep.mubr.f32.mxu0 0.0
      %1259 = vmatmul.mubr.f32.gmra.mxu0 %v757
      %v1260 = vpop.f32.mrf.mxu0
      %v1261 = vadd.f32 0.0, %v1260
      %v1262 = vpop.f32.mrf.mxu0
      %1263 = vmatprep.mubr.f32.mxu0 0.0
      %1264 = vmatmul.mubr.f32.gmra.mxu0 %v760
      %v1265 = vpop.f32.mrf.mxu0
      %v1266 = vadd.f32 0.0, %v1265
      %v1267 = vpop.f32.mrf.mxu0
      %1268 = vmatprep.mubr.f32.mxu0 0.0
      %1269 = vmatmul.mubr.f32.gmra.mxu0 %v763
      %v1270 = vpop.f32.mrf.mxu0
      %v1271 = vadd.f32 0.0, %v1270
      %v1272 = vpop.f32.mrf.mxu0
      %1273 = vmatprep.mubr.f32.mxu0 0.0
      %1274 = vmatmul.mubr.f32.gmra.mxu0 %v766
      %v1275 = vpop.f32.mrf.mxu0
      %v1276 = vadd.f32 0.0, %v1275
      %v1277 = vpop.f32.mrf.mxu0
      %1278 = vmatprep.mubr.f32.mxu0 0.0
      %1279 = vmatmul.mubr.f32.gmra.mxu0 %v769
      %v1280 = vpop.f32.mrf.mxu0
      %v1281 = vadd.f32 0.0, %v1280
      %v1282 = vpop.f32.mrf.mxu0
      %1283 = vmatprep.mubr.f32.mxu0 0.0
      %1284 = vmatmul.mubr.f32.gmra.mxu0 %v772
      %v1285 = vpop.f32.mrf.mxu0
      %v1286 = vadd.f32 0.0, %v1285
      %v1287 = vpop.f32.mrf.mxu0
      %1288 = vmatprep.mubr.f32.mxu0 0.0
      %1289 = vmatmul.mubr.f32.gmra.mxu0 %v775
      %v1290 = vpop.f32.mrf.mxu0
      %v1291 = vadd.f32 0.0, %v1290
      %v1292 = vpop.f32.mrf.mxu0
      %1293 = vmatprep.mubr.f32.mxu0 0.0
      %1294 = vmatmul.mubr.f32.gmra.mxu0 %v778
      %v1295 = vpop.f32.mrf.mxu0
      %v1296 = vadd.f32 0.0, %v1295
      %v1297 = vpop.f32.mrf.mxu0
      %1298 = vmatprep.mubr.f32.mxu0 0.0
      %1299 = vmatmul.mubr.f32.gmra.mxu0 %v781
      %v1300 = vpop.f32.mrf.mxu0
      %v1301 = vadd.f32 0.0, %v1300
      %v1302 = vpop.f32.mrf.mxu0
      %1303 = vmatprep.mubr.f32.mxu0 0.0
      %1304 = vmatmul.mubr.f32.gmra.mxu0 %v784
      %v1305 = vpop.f32.mrf.mxu0
      %v1306 = vadd.f32 0.0, %v1305
      %v1307 = vpop.f32.mrf.mxu0
      %1308 = vmatprep.mubr.f32.mxu0 0.0
      %1309 = vmatmul.mubr.f32.gmra.mxu0 %v787
      %v1310 = vpop.f32.mrf.mxu0
      %v1311 = vadd.f32 0.0, %v1310
      %v1312 = vpop.f32.mrf.mxu0
      %1313 = vmatprep.mubr.f32.mxu0 0.0
      %1314 = vmatmul.mubr.f32.gmra.mxu0 %v790
      %v1315 = vpop.f32.mrf.mxu0
      %v1316 = vadd.f32 0.0, %v1315
      %v1317 = vpop.f32.mrf.mxu0
      %1318 = vmatprep.mubr.f32.mxu0 0.0
      %1319 = vmatmul.mubr.f32.gmra.mxu0 %v793
      %v1320 = vpop.f32.mrf.mxu0
      %v1321 = vadd.f32 0.0, %v1320
      %v1322 = vpop.f32.mrf.mxu0
      %1323 = vmatprep.mubr.f32.mxu0 0.0
      %1324 = vmatmul.mubr.f32.gmra.mxu0 %v796
      %v1325 = vpop.f32.mrf.mxu0
      %v1326 = vadd.f32 0.0, %v1325
      %v1327 = vpop.f32.mrf.mxu0
      %1328 = vmatprep.mubr.f32.mxu0 0.0
      %1329 = vmatmul.mubr.f32.gmra.mxu0 %v799
      %v1330 = vpop.f32.mrf.mxu0
      %v1331 = vadd.f32 0.0, %v1330
      %v1332 = vpop.f32.mrf.mxu0
      %1333 = vmatprep.mubr.f32.mxu0 0.0
      %1334 = vmatmul.mubr.f32.gmra.mxu0 %v802
      %v1335 = vpop.f32.mrf.mxu0
      %v1336 = vadd.f32 0.0, %v1335
      %v1337 = vpop.f32.mrf.mxu0
      %1338 = vmatprep.mubr.f32.mxu0 0.0
      %1339 = vmatmul.mubr.f32.gmra.mxu0 %v805
      %v1340 = vpop.f32.mrf.mxu0
      %v1341 = vadd.f32 0.0, %v1340
      %v1342 = vpop.f32.mrf.mxu0
      %1343 = vmatprep.mubr.f32.mxu0 0.0
      %1344 = vmatmul.mubr.f32.gmra.mxu0 %v808
      %v1345 = vpop.f32.mrf.mxu0
      %v1346 = vadd.f32 0.0, %v1345
      %v1347 = vpop.f32.mrf.mxu0
      %1348 = vmatprep.mubr.f32.mxu0 0.0
      %1349 = vmatmul.mubr.f32.gmra.mxu0 %v811
      %v1350 = vpop.f32.mrf.mxu0
      %v1351 = vadd.f32 0.0, %v1350
      %v1352 = vpop.f32.mrf.mxu0
      %1353 = vmatprep.mubr.f32.mxu0 0.0
      %1354 = vmatmul.mubr.f32.gmra.mxu0 %v814
      %v1355 = vpop.f32.mrf.mxu0
      %v1356 = vadd.f32 0.0, %v1355
      %v1357 = vpop.f32.mrf.mxu0
      %1358 = vmatprep.mubr.f32.mxu0 0.0
      %1359 = vmatmul.mubr.f32.gmra.mxu0 %v817
      %v1360 = vpop.f32.mrf.mxu0
      %v1361 = vadd.f32 0.0, %v1360
      %v1362 = vpop.f32.mrf.mxu0
      %1363 = vdwg.mxu0
      %vm1364 = vcmask 523264
      %v1366 = vsel %vm1364, %v432, 0
      %v1369 = vsel %vm1364, %v433, 0
      %v1372 = vsel %vm1364, %v434, 0
      %v1375 = vsel %vm1364, %v435, 0
      %v1378 = vsel %vm1364, %v436, 0
      %v1381 = vsel %vm1364, %v437, 0
      %v1384 = vsel %vm1364, %v438, 0
      %v1387 = vsel %vm1364, %v439, 0
      %1389 = vmatprep.subr.mxu0 0.0
      %1390 = vmatpush1.msra.mxu0 0.0
      %1391 = vmatprep.subr.mxu0 0.0
      %1392 = vmatpush1.msra.mxu0 0.0
      %1393 = vmatprep.subr.mxu0 0.0
      %1394 = vmatpush1.msra.mxu0 0.0
      %1395 = vmatprep.subr.mxu0 0.0
      %1396 = vmatpush1.msra.mxu0 0.0
      %1397 = vmatprep.subr.mxu0 0.0
      %1398 = vmatpush1.msra.mxu0 0.0
      %1399 = vmatprep.subr.mxu0 0.0
      %1400 = vmatpush1.msra.mxu0 0.0
      %1401 = vmatprep.subr.mxu0 0.0
      %1402 = vmatpush1.msra.mxu0 0.0
      %1403 = vmatprep.subr.mxu0 0.0
      %1404 = vmatpush1.msra.mxu0 0.0
      %1405 = vmatprep.subr.mxu0 0.0
      %1406 = vmatpush1.msra.mxu0 %v921
      %1407 = vmatprep.subr.mxu0 0.0
      %1408 = vmatpush1.msra.mxu0 %v916
      %1409 = vmatprep.subr.mxu0 0.0
      %1410 = vmatpush1.msra.mxu0 %v911
      %1411 = vmatprep.subr.mxu0 0.0
      %1412 = vmatpush1.msra.mxu0 %v906
      %1413 = vmatprep.subr.mxu0 0.0
      %1414 = vmatpush1.msra.mxu0 %v901
      %1415 = vmatprep.subr.mxu0 0.0
      %1416 = vmatpush1.msra.mxu0 %v896
      %1417 = vmatprep.subr.mxu0 0.0
      %1418 = vmatpush1.msra.mxu0 %v891
      %1419 = vmatprep.subr.mxu0 0.0
      %1420 = vmatpush1.msra.mxu0 %v886
      %1421 = vmatprep.subr.mxu0 0.0
      %1422 = vmatpush2.msra.mxu0 0.0
      %1423 = vmatprep.subr.mxu0 0.0
      %1424 = vmatpush2.msra.mxu0 0.0
      %1425 = vmatprep.subr.mxu0 0.0
      %1426 = vmatpush2.msra.mxu0 0.0
      %1427 = vmatprep.subr.mxu0 0.0
      %1428 = vmatpush2.msra.mxu0 0.0
      %1429 = vmatprep.subr.mxu0 0.0
      %1430 = vmatpush2.msra.mxu0 0.0
      %1431 = vmatprep.subr.mxu0 0.0
      %1432 = vmatpush2.msra.mxu0 0.0
      %1433 = vmatprep.subr.mxu0 0.0
      %1434 = vmatpush2.msra.mxu0 0.0
      %1435 = vmatprep.subr.mxu0 0.0
      %1436 = vmatpush2.msra.mxu0 0.0
      %1437 = vmatprep.subr.mxu0 0.0
      %1438 = vmatpush2.msra.mxu0 0.0
      %1439 = vmatprep.subr.mxu0 0.0
      %1440 = vmatpush2.msra.mxu0 0.0
      %1441 = vmatprep.subr.mxu0 0.0
      %1442 = vmatpush2.msra.mxu0 0.0
      %1443 = vmatprep.subr.mxu0 0.0
      %1444 = vmatpush2.msra.mxu0 0.0
      %1445 = vmatprep.subr.mxu0 0.0
      %1446 = vmatpush2.msra.mxu0 0.0
      %1447 = vmatprep.subr.mxu0 0.0
      %1448 = vmatpush2.msra.mxu0 0.0
      %1449 = vmatprep.subr.mxu0 0.0
      %1450 = vmatpush2.msra.mxu0 0.0
      %1451 = vmatprep.subr.mxu0 0.0
      %1452 = vmatpush2.msra.mxu0 0.0
      %1453 = vmatprep.mubr.f32.mxu0 0.0
      %1454 = vmatmul.mubr.f32.gmra.mxu0 %v1366
      %v1455 = vpop.f32.mrf.mxu0
      %v1456 = vadd.f32 0.0, %v1455
      %v1457 = vpop.f32.mrf.mxu0
      %1458 = vmatprep.mubr.f32.mxu0 0.0
      %1459 = vmatmul.mubr.f32.gmra.mxu0 %v1369
      %v1460 = vpop.f32.mrf.mxu0
      %v1461 = vadd.f32 0.0, %v1460
      %v1462 = vpop.f32.mrf.mxu0
      %1463 = vmatprep.mubr.f32.mxu0 0.0
      %1464 = vmatmul.mubr.f32.gmra.mxu0 %v1372
      %v1465 = vpop.f32.mrf.mxu0
      %v1466 = vadd.f32 0.0, %v1465
      %v1467 = vpop.f32.mrf.mxu0
      %1468 = vmatprep.mubr.f32.mxu0 0.0
      %1469 = vmatmul.mubr.f32.gmra.mxu0 %v1375
      %v1470 = vpop.f32.mrf.mxu0
      %v1471 = vadd.f32 0.0, %v1470
      %v1472 = vpop.f32.mrf.mxu0
      %1473 = vmatprep.mubr.f32.mxu0 0.0
      %1474 = vmatmul.mubr.f32.gmra.mxu0 %v1378
      %v1475 = vpop.f32.mrf.mxu0
      %v1476 = vadd.f32 0.0, %v1475
      %v1477 = vpop.f32.mrf.mxu0
      %1478 = vmatprep.mubr.f32.mxu0 0.0
      %1479 = vmatmul.mubr.f32.gmra.mxu0 %v1381
      %v1480 = vpop.f32.mrf.mxu0
      %v1481 = vadd.f32 0.0, %v1480
      %v1482 = vpop.f32.mrf.mxu0
      %1483 = vmatprep.mubr.f32.mxu0 0.0
      %1484 = vmatmul.mubr.f32.gmra.mxu0 %v1384
      %v1485 = vpop.f32.mrf.mxu0
      %v1486 = vadd.f32 0.0, %v1485
      %v1487 = vpop.f32.mrf.mxu0
      %1488 = vmatprep.mubr.f32.mxu0 0.0
      %1489 = vmatmul.mubr.f32.gmra.mxu0 %v1387
      %v1490 = vpop.f32.mrf.mxu0
      %v1491 = vadd.f32 0.0, %v1490
      %v1492 = vpop.f32.mrf.mxu0
      %1493 = vdwg.mxu0
      %v1495 = vsel %vm1364, %v440, 0
      %v1498 = vsel %vm1364, %v441, 0
      %v1501 = vsel %vm1364, %v442, 0
      %v1504 = vsel %vm1364, %v443, 0
      %v1507 = vsel %vm1364, %v444, 0
      %v1510 = vsel %vm1364, %v445, 0
      %v1513 = vsel %vm1364, %v446, 0
      %v1516 = vsel %vm1364, %v447, 0
      %1518 = vmatprep.subr.mxu0 0.0
      %1519 = vmatpush1.msra.mxu0 0.0
      %1520 = vmatprep.subr.mxu0 0.0
      %1521 = vmatpush1.msra.mxu0 0.0
      %1522 = vmatprep.subr.mxu0 0.0
      %1523 = vmatpush1.msra.mxu0 0.0
      %1524 = vmatprep.subr.mxu0 0.0
      %1525 = vmatpush1.msra.mxu0 0.0
      %1526 = vmatprep.subr.mxu0 0.0
      %1527 = vmatpush1.msra.mxu0 0.0
      %1528 = vmatprep.subr.mxu0 0.0
      %1529 = vmatpush1.msra.mxu0 0.0
      %1530 = vmatprep.subr.mxu0 0.0
      %1531 = vmatpush1.msra.mxu0 0.0
      %1532 = vmatprep.subr.mxu0 0.0
      %1533 = vmatpush1.msra.mxu0 0.0
      %1534 = vmatprep.subr.mxu0 0.0
      %1535 = vmatpush1.msra.mxu0 %v961
      %1536 = vmatprep.subr.mxu0 0.0
      %1537 = vmatpush1.msra.mxu0 %v956
      %1538 = vmatprep.subr.mxu0 0.0
      %1539 = vmatpush1.msra.mxu0 %v951
      %1540 = vmatprep.subr.mxu0 0.0
      %1541 = vmatpush1.msra.mxu0 %v946
      %1542 = vmatprep.subr.mxu0 0.0
      %1543 = vmatpush1.msra.mxu0 %v941
      %1544 = vmatprep.subr.mxu0 0.0
      %1545 = vmatpush1.msra.mxu0 %v936
      %1546 = vmatprep.subr.mxu0 0.0
      %1547 = vmatpush1.msra.mxu0 %v931
      %1548 = vmatprep.subr.mxu0 0.0
      %1549 = vmatpush1.msra.mxu0 %v926
      %1550 = vmatprep.subr.mxu0 0.0
      %1551 = vmatpush2.msra.mxu0 0.0
      %1552 = vmatprep.subr.mxu0 0.0
      %1553 = vmatpush2.msra.mxu0 0.0
      %1554 = vmatprep.subr.mxu0 0.0
      %1555 = vmatpush2.msra.mxu0 0.0
      %1556 = vmatprep.subr.mxu0 0.0
      %1557 = vmatpush2.msra.mxu0 0.0
      %1558 = vmatprep.subr.mxu0 0.0
      %1559 = vmatpush2.msra.mxu0 0.0
      %1560 = vmatprep.subr.mxu0 0.0
      %1561 = vmatpush2.msra.mxu0 0.0
      %1562 = vmatprep.subr.mxu0 0.0
      %1563 = vmatpush2.msra.mxu0 0.0
      %1564 = vmatprep.subr.mxu0 0.0
      %1565 = vmatpush2.msra.mxu0 0.0
      %1566 = vmatprep.subr.mxu0 0.0
      %1567 = vmatpush2.msra.mxu0 0.0
      %1568 = vmatprep.subr.mxu0 0.0
      %1569 = vmatpush2.msra.mxu0 0.0
      %1570 = vmatprep.subr.mxu0 0.0
      %1571 = vmatpush2.msra.mxu0 0.0
      %1572 = vmatprep.subr.mxu0 0.0
      %1573 = vmatpush2.msra.mxu0 0.0
      %1574 = vmatprep.subr.mxu0 0.0
      %1575 = vmatpush2.msra.mxu0 0.0
      %1576 = vmatprep.subr.mxu0 0.0
      %1577 = vmatpush2.msra.mxu0 0.0
      %1578 = vmatprep.subr.mxu0 0.0
      %1579 = vmatpush2.msra.mxu0 0.0
      %1580 = vmatprep.subr.mxu0 0.0
      %1581 = vmatpush2.msra.mxu0 0.0
      %1582 = vmatprep.mubr.f32.mxu0 0.0
      %1583 = vmatmul.mubr.f32.gmra.mxu0 %v1495
      %v1584 = vpop.f32.mrf.mxu0
      %v1585 = vadd.f32 0.0, %v1584
      %v1586 = vpop.f32.mrf.mxu0
      %1587 = vmatprep.mubr.f32.mxu0 0.0
      %1588 = vmatmul.mubr.f32.gmra.mxu0 %v1498
      %v1589 = vpop.f32.mrf.mxu0
      %v1590 = vadd.f32 0.0, %v1589
      %v1591 = vpop.f32.mrf.mxu0
      %1592 = vmatprep.mubr.f32.mxu0 0.0
      %1593 = vmatmul.mubr.f32.gmra.mxu0 %v1501
      %v1594 = vpop.f32.mrf.mxu0
      %v1595 = vadd.f32 0.0, %v1594
      %v1596 = vpop.f32.mrf.mxu0
      %1597 = vmatprep.mubr.f32.mxu0 0.0
      %1598 = vmatmul.mubr.f32.gmra.mxu0 %v1504
      %v1599 = vpop.f32.mrf.mxu0
      %v1600 = vadd.f32 0.0, %v1599
      %v1601 = vpop.f32.mrf.mxu0
      %1602 = vmatprep.mubr.f32.mxu0 0.0
      %1603 = vmatmul.mubr.f32.gmra.mxu0 %v1507
      %v1604 = vpop.f32.mrf.mxu0
      %v1605 = vadd.f32 0.0, %v1604
      %v1606 = vpop.f32.mrf.mxu0
      %1607 = vmatprep.mubr.f32.mxu0 0.0
      %1608 = vmatmul.mubr.f32.gmra.mxu0 %v1510
      %v1609 = vpop.f32.mrf.mxu0
      %v1610 = vadd.f32 0.0, %v1609
      %v1611 = vpop.f32.mrf.mxu0
      %1612 = vmatprep.mubr.f32.mxu0 0.0
      %1613 = vmatmul.mubr.f32.gmra.mxu0 %v1513
      %v1614 = vpop.f32.mrf.mxu0
      %v1615 = vadd.f32 0.0, %v1614
      %v1616 = vpop.f32.mrf.mxu0
      %1617 = vmatprep.mubr.f32.mxu0 0.0
      %1618 = vmatmul.mubr.f32.gmra.mxu0 %v1516
      %v1619 = vpop.f32.mrf.mxu0
      %v1620 = vadd.f32 0.0, %v1619
      %v1621 = vpop.f32.mrf.mxu0
      %1622 = vdwg.mxu0
      %v1624 = vsel %vm1364, %v448, 0
      %v1627 = vsel %vm1364, %v449, 0
      %v1630 = vsel %vm1364, %v450, 0
      %v1633 = vsel %vm1364, %v451, 0
      %v1636 = vsel %vm1364, %v452, 0
      %v1639 = vsel %vm1364, %v453, 0
      %v1642 = vsel %vm1364, %v454, 0
      %v1645 = vsel %vm1364, %v455, 0
      %1647 = vmatprep.subr.mxu0 0.0
      %1648 = vmatpush1.msra.mxu0 0.0
      %1649 = vmatprep.subr.mxu0 0.0
      %1650 = vmatpush1.msra.mxu0 0.0
      %1651 = vmatprep.subr.mxu0 0.0
      %1652 = vmatpush1.msra.mxu0 0.0
      %1653 = vmatprep.subr.mxu0 0.0
      %1654 = vmatpush1.msra.mxu0 0.0
      %1655 = vmatprep.subr.mxu0 0.0
      %1656 = vmatpush1.msra.mxu0 0.0
      %1657 = vmatprep.subr.mxu0 0.0
      %1658 = vmatpush1.msra.mxu0 0.0
      %1659 = vmatprep.subr.mxu0 0.0
      %1660 = vmatpush1.msra.mxu0 0.0
      %1661 = vmatprep.subr.mxu0 0.0
      %1662 = vmatpush1.msra.mxu0 0.0
      %1663 = vmatprep.subr.mxu0 0.0
      %1664 = vmatpush1.msra.mxu0 %v1001
      %1665 = vmatprep.subr.mxu0 0.0
      %1666 = vmatpush1.msra.mxu0 %v996
      %1667 = vmatprep.subr.mxu0 0.0
      %1668 = vmatpush1.msra.mxu0 %v991
      %1669 = vmatprep.subr.mxu0 0.0
      %1670 = vmatpush1.msra.mxu0 %v986
      %1671 = vmatprep.subr.mxu0 0.0
      %1672 = vmatpush1.msra.mxu0 %v981
      %1673 = vmatprep.subr.mxu0 0.0
      %1674 = vmatpush1.msra.mxu0 %v976
      %1675 = vmatprep.subr.mxu0 0.0
      %1676 = vmatpush1.msra.mxu0 %v971
      %1677 = vmatprep.subr.mxu0 0.0
      %1678 = vmatpush1.msra.mxu0 %v966
      %1679 = vmatprep.subr.mxu0 0.0
      %1680 = vmatpush2.msra.mxu0 0.0
      %1681 = vmatprep.subr.mxu0 0.0
      %1682 = vmatpush2.msra.mxu0 0.0
      %1683 = vmatprep.subr.mxu0 0.0
      %1684 = vmatpush2.msra.mxu0 0.0
      %1685 = vmatprep.subr.mxu0 0.0
      %1686 = vmatpush2.msra.mxu0 0.0
      %1687 = vmatprep.subr.mxu0 0.0
      %1688 = vmatpush2.msra.mxu0 0.0
      %1689 = vmatprep.subr.mxu0 0.0
      %1690 = vmatpush2.msra.mxu0 0.0
      %1691 = vmatprep.subr.mxu0 0.0
      %1692 = vmatpush2.msra.mxu0 0.0
      %1693 = vmatprep.subr.mxu0 0.0
      %1694 = vmatpush2.msra.mxu0 0.0
      %1695 = vmatprep.subr.mxu0 0.0
      %1696 = vmatpush2.msra.mxu0 0.0
      %1697 = vmatprep.subr.mxu0 0.0
      %1698 = vmatpush2.msra.mxu0 0.0
      %1699 = vmatprep.subr.mxu0 0.0
      %1700 = vmatpush2.msra.mxu0 0.0
      %1701 = vmatprep.subr.mxu0 0.0
      %1702 = vmatpush2.msra.mxu0 0.0
      %1703 = vmatprep.subr.mxu0 0.0
      %1704 = vmatpush2.msra.mxu0 0.0
      %1705 = vmatprep.subr.mxu0 0.0
      %1706 = vmatpush2.msra.mxu0 0.0
      %1707 = vmatprep.subr.mxu0 0.0
      %1708 = vmatpush2.msra.mxu0 0.0
      %1709 = vmatprep.subr.mxu0 0.0
      %1710 = vmatpush2.msra.mxu0 0.0
      %1711 = vmatprep.mubr.f32.mxu0 0.0
      %1712 = vmatmul.mubr.f32.gmra.mxu0 %v1624
      %v1713 = vpop.f32.mrf.mxu0
      %v1714 = vadd.f32 0.0, %v1713
      %v1715 = vpop.f32.mrf.mxu0
      %1716 = vmatprep.mubr.f32.mxu0 0.0
      %1717 = vmatmul.mubr.f32.gmra.mxu0 %v1627
      %v1718 = vpop.f32.mrf.mxu0
      %v1719 = vadd.f32 0.0, %v1718
      %v1720 = vpop.f32.mrf.mxu0
      %1721 = vmatprep.mubr.f32.mxu0 0.0
      %1722 = vmatmul.mubr.f32.gmra.mxu0 %v1630
      %v1723 = vpop.f32.mrf.mxu0
      %v1724 = vadd.f32 0.0, %v1723
      %v1725 = vpop.f32.mrf.mxu0
      %1726 = vmatprep.mubr.f32.mxu0 0.0
      %1727 = vmatmul.mubr.f32.gmra.mxu0 %v1633
      %v1728 = vpop.f32.mrf.mxu0
      %v1729 = vadd.f32 0.0, %v1728
      %v1730 = vpop.f32.mrf.mxu0
      %1731 = vmatprep.mubr.f32.mxu0 0.0
      %1732 = vmatmul.mubr.f32.gmra.mxu0 %v1636
      %v1733 = vpop.f32.mrf.mxu0
      %v1734 = vadd.f32 0.0, %v1733
      %v1735 = vpop.f32.mrf.mxu0
      %1736 = vmatprep.mubr.f32.mxu0 0.0
      %1737 = vmatmul.mubr.f32.gmra.mxu0 %v1639
      %v1738 = vpop.f32.mrf.mxu0
      %v1739 = vadd.f32 0.0, %v1738
      %v1740 = vpop.f32.mrf.mxu0
      %1741 = vmatprep.mubr.f32.mxu0 0.0
      %1742 = vmatmul.mubr.f32.gmra.mxu0 %v1642
      %v1743 = vpop.f32.mrf.mxu0
      %v1744 = vadd.f32 0.0, %v1743
      %v1745 = vpop.f32.mrf.mxu0
      %1746 = vmatprep.mubr.f32.mxu0 0.0
      %1747 = vmatmul.mubr.f32.gmra.mxu0 %v1645
      %v1748 = vpop.f32.mrf.mxu0
      %v1749 = vadd.f32 0.0, %v1748
      %v1750 = vpop.f32.mrf.mxu0
      %1751 = vdwg.mxu0
      %v1753 = vsel %vm1364, %v456, 0
      %v1756 = vsel %vm1364, %v457, 0
      %v1759 = vsel %vm1364, %v458, 0
      %v1762 = vsel %vm1364, %v459, 0
      %v1765 = vsel %vm1364, %v460, 0
      %v1768 = vsel %vm1364, %v461, 0
      %v1771 = vsel %vm1364, %v462, 0
      %v1774 = vsel %vm1364, %v463, 0
      %1776 = vmatprep.subr.mxu0 0.0
      %1777 = vmatpush1.msra.mxu0 0.0
      %1778 = vmatprep.subr.mxu0 0.0
      %1779 = vmatpush1.msra.mxu0 0.0
      %1780 = vmatprep.subr.mxu0 0.0
      %1781 = vmatpush1.msra.mxu0 0.0
      %1782 = vmatprep.subr.mxu0 0.0
      %1783 = vmatpush1.msra.mxu0 0.0
      %1784 = vmatprep.subr.mxu0 0.0
      %1785 = vmatpush1.msra.mxu0 0.0
      %1786 = vmatprep.subr.mxu0 0.0
      %1787 = vmatpush1.msra.mxu0 0.0
      %1788 = vmatprep.subr.mxu0 0.0
      %1789 = vmatpush1.msra.mxu0 0.0
      %1790 = vmatprep.subr.mxu0 0.0
      %1791 = vmatpush1.msra.mxu0 0.0
      %1792 = vmatprep.subr.mxu0 0.0
      %1793 = vmatpush1.msra.mxu0 %v1041
      %1794 = vmatprep.subr.mxu0 0.0
      %1795 = vmatpush1.msra.mxu0 %v1036
      %1796 = vmatprep.subr.mxu0 0.0
      %1797 = vmatpush1.msra.mxu0 %v1031
      %1798 = vmatprep.subr.mxu0 0.0
      %1799 = vmatpush1.msra.mxu0 %v1026
      %1800 = vmatprep.subr.mxu0 0.0
      %1801 = vmatpush1.msra.mxu0 %v1021
      %1802 = vmatprep.subr.mxu0 0.0
      %1803 = vmatpush1.msra.mxu0 %v1016
      %1804 = vmatprep.subr.mxu0 0.0
      %1805 = vmatpush1.msra.mxu0 %v1011
      %1806 = vmatprep.subr.mxu0 0.0
      %1807 = vmatpush1.msra.mxu0 %v1006
      %1808 = vmatprep.subr.mxu0 0.0
      %1809 = vmatpush2.msra.mxu0 0.0
      %1810 = vmatprep.subr.mxu0 0.0
      %1811 = vmatpush2.msra.mxu0 0.0
      %1812 = vmatprep.subr.mxu0 0.0
      %1813 = vmatpush2.msra.mxu0 0.0
      %1814 = vmatprep.subr.mxu0 0.0
      %1815 = vmatpush2.msra.mxu0 0.0
      %1816 = vmatprep.subr.mxu0 0.0
      %1817 = vmatpush2.msra.mxu0 0.0
      %1818 = vmatprep.subr.mxu0 0.0
      %1819 = vmatpush2.msra.mxu0 0.0
      %1820 = vmatprep.subr.mxu0 0.0
      %1821 = vmatpush2.msra.mxu0 0.0
      %1822 = vmatprep.subr.mxu0 0.0
      %1823 = vmatpush2.msra.mxu0 0.0
      %1824 = vmatprep.subr.mxu0 0.0
      %1825 = vmatpush2.msra.mxu0 0.0
      %1826 = vmatprep.subr.mxu0 0.0
      %1827 = vmatpush2.msra.mxu0 0.0
      %1828 = vmatprep.subr.mxu0 0.0
      %1829 = vmatpush2.msra.mxu0 0.0
      %1830 = vmatprep.subr.mxu0 0.0
      %1831 = vmatpush2.msra.mxu0 0.0
      %1832 = vmatprep.subr.mxu0 0.0
      %1833 = vmatpush2.msra.mxu0 0.0
      %1834 = vmatprep.subr.mxu0 0.0
      %1835 = vmatpush2.msra.mxu0 0.0
      %1836 = vmatprep.subr.mxu0 0.0
      %1837 = vmatpush2.msra.mxu0 0.0
      %1838 = vmatprep.subr.mxu0 0.0
      %1839 = vmatpush2.msra.mxu0 0.0
      %1840 = vmatprep.mubr.f32.mxu0 0.0
      %1841 = vmatmul.mubr.f32.gmra.mxu0 %v1753
      %v1842 = vpop.f32.mrf.mxu0
      %v1843 = vadd.f32 0.0, %v1842
      %v1844 = vpop.f32.mrf.mxu0
      %1845 = vmatprep.mubr.f32.mxu0 0.0
      %1846 = vmatmul.mubr.f32.gmra.mxu0 %v1756
      %v1847 = vpop.f32.mrf.mxu0
      %v1848 = vadd.f32 0.0, %v1847
      %v1849 = vpop.f32.mrf.mxu0
      %1850 = vmatprep.mubr.f32.mxu0 0.0
      %1851 = vmatmul.mubr.f32.gmra.mxu0 %v1759
      %v1852 = vpop.f32.mrf.mxu0
      %v1853 = vadd.f32 0.0, %v1852
      %v1854 = vpop.f32.mrf.mxu0
      %1855 = vmatprep.mubr.f32.mxu0 0.0
      %1856 = vmatmul.mubr.f32.gmra.mxu0 %v1762
      %v1857 = vpop.f32.mrf.mxu0
      %v1858 = vadd.f32 0.0, %v1857
      %v1859 = vpop.f32.mrf.mxu0
      %1860 = vmatprep.mubr.f32.mxu0 0.0
      %1861 = vmatmul.mubr.f32.gmra.mxu0 %v1765
      %v1862 = vpop.f32.mrf.mxu0
      %v1863 = vadd.f32 0.0, %v1862
      %v1864 = vpop.f32.mrf.mxu0
      %1865 = vmatprep.mubr.f32.mxu0 0.0
      %1866 = vmatmul.mubr.f32.gmra.mxu0 %v1768
      %v1867 = vpop.f32.mrf.mxu0
      %v1868 = vadd.f32 0.0, %v1867
      %v1869 = vpop.f32.mrf.mxu0
      %1870 = vmatprep.mubr.f32.mxu0 0.0
      %1871 = vmatmul.mubr.f32.gmra.mxu0 %v1771
      %v1872 = vpop.f32.mrf.mxu0
      %v1873 = vadd.f32 0.0, %v1872
      %v1874 = vpop.f32.mrf.mxu0
      %1875 = vmatprep.mubr.f32.mxu0 0.0
      %1876 = vmatmul.mubr.f32.gmra.mxu0 %v1774
      %v1877 = vpop.f32.mrf.mxu0
      %v1878 = vadd.f32 0.0, %v1877
      %v1879 = vpop.f32.mrf.mxu0
      %1880 = vdwg.mxu0
      %v1882 = vsel %vm1364, %v464, 0
      %v1885 = vsel %vm1364, %v465, 0
      %v1888 = vsel %vm1364, %v466, 0
      %v1891 = vsel %vm1364, %v467, 0
      %v1894 = vsel %vm1364, %v468, 0
      %v1897 = vsel %vm1364, %v469, 0
      %v1900 = vsel %vm1364, %v470, 0
      %v1903 = vsel %vm1364, %v471, 0
      %1905 = vmatprep.subr.mxu0 0.0
      %1906 = vmatpush1.msra.mxu0 0.0
      %1907 = vmatprep.subr.mxu0 0.0
      %1908 = vmatpush1.msra.mxu0 0.0
      %1909 = vmatprep.subr.mxu0 0.0
      %1910 = vmatpush1.msra.mxu0 0.0
      %1911 = vmatprep.subr.mxu0 0.0
      %1912 = vmatpush1.msra.mxu0 0.0
      %1913 = vmatprep.subr.mxu0 0.0
      %1914 = vmatpush1.msra.mxu0 0.0
      %1915 = vmatprep.subr.mxu0 0.0
      %1916 = vmatpush1.msra.mxu0 0.0
      %1917 = vmatprep.subr.mxu0 0.0
      %1918 = vmatpush1.msra.mxu0 0.0
      %1919 = vmatprep.subr.mxu0 0.0
      %1920 = vmatpush1.msra.mxu0 0.0
      %1921 = vmatprep.subr.mxu0 0.0
      %1922 = vmatpush1.msra.mxu0 %v1081
      %1923 = vmatprep.subr.mxu0 0.0
      %1924 = vmatpush1.msra.mxu0 %v1076
      %1925 = vmatprep.subr.mxu0 0.0
      %1926 = vmatpush1.msra.mxu0 %v1071
      %1927 = vmatprep.subr.mxu0 0.0
      %1928 = vmatpush1.msra.mxu0 %v1066
      %1929 = vmatprep.subr.mxu0 0.0
      %1930 = vmatpush1.msra.mxu0 %v1061
      %1931 = vmatprep.subr.mxu0 0.0
      %1932 = vmatpush1.msra.mxu0 %v1056
      %1933 = vmatprep.subr.mxu0 0.0
      %1934 = vmatpush1.msra.mxu0 %v1051
      %1935 = vmatprep.subr.mxu0 0.0
      %1936 = vmatpush1.msra.mxu0 %v1046
      %1937 = vmatprep.subr.mxu0 0.0
      %1938 = vmatpush2.msra.mxu0 0.0
      %1939 = vmatprep.subr.mxu0 0.0
      %1940 = vmatpush2.msra.mxu0 0.0
      %1941 = vmatprep.subr.mxu0 0.0
      %1942 = vmatpush2.msra.mxu0 0.0
      %1943 = vmatprep.subr.mxu0 0.0
      %1944 = vmatpush2.msra.mxu0 0.0
      %1945 = vmatprep.subr.mxu0 0.0
      %1946 = vmatpush2.msra.mxu0 0.0
      %1947 = vmatprep.subr.mxu0 0.0
      %1948 = vmatpush2.msra.mxu0 0.0
      %1949 = vmatprep.subr.mxu0 0.0
      %1950 = vmatpush2.msra.mxu0 0.0
      %1951 = vmatprep.subr.mxu0 0.0
      %1952 = vmatpush2.msra.mxu0 0.0
      %1953 = vmatprep.subr.mxu0 0.0
      %1954 = vmatpush2.msra.mxu0 0.0
      %1955 = vmatprep.subr.mxu0 0.0
      %1956 = vmatpush2.msra.mxu0 0.0
      %1957 = vmatprep.subr.mxu0 0.0
      %1958 = vmatpush2.msra.mxu0 0.0
      %1959 = vmatprep.subr.mxu0 0.0
      %1960 = vmatpush2.msra.mxu0 0.0
      %1961 = vmatprep.subr.mxu0 0.0
      %1962 = vmatpush2.msra.mxu0 0.0
      %1963 = vmatprep.subr.mxu0 0.0
      %1964 = vmatpush2.msra.mxu0 0.0
      %1965 = vmatprep.subr.mxu0 0.0
      %1966 = vmatpush2.msra.mxu0 0.0
      %1967 = vmatprep.subr.mxu0 0.0
      %1968 = vmatpush2.msra.mxu0 0.0
      %1969 = vmatprep.mubr.f32.mxu0 0.0
      %1970 = vmatmul.mubr.f32.gmra.mxu0 %v1882
      %v1971 = vpop.f32.mrf.mxu0
      %v1972 = vadd.f32 0.0, %v1971
      %v1973 = vpop.f32.mrf.mxu0
      %1974 = vmatprep.mubr.f32.mxu0 0.0
      %1975 = vmatmul.mubr.f32.gmra.mxu0 %v1885
      %v1976 = vpop.f32.mrf.mxu0
      %v1977 = vadd.f32 0.0, %v1976
      %v1978 = vpop.f32.mrf.mxu0
      %1979 = vmatprep.mubr.f32.mxu0 0.0
      %1980 = vmatmul.mubr.f32.gmra.mxu0 %v1888
      %v1981 = vpop.f32.mrf.mxu0
      %v1982 = vadd.f32 0.0, %v1981
      %v1983 = vpop.f32.mrf.mxu0
      %1984 = vmatprep.mubr.f32.mxu0 0.0
      %1985 = vmatmul.mubr.f32.gmra.mxu0 %v1891
      %v1986 = vpop.f32.mrf.mxu0
      %v1987 = vadd.f32 0.0, %v1986
      %v1988 = vpop.f32.mrf.mxu0
      %1989 = vmatprep.mubr.f32.mxu0 0.0
      %1990 = vmatmul.mubr.f32.gmra.mxu0 %v1894
      %v1991 = vpop.f32.mrf.mxu0
      %v1992 = vadd.f32 0.0, %v1991
      %v1993 = vpop.f32.mrf.mxu0
      %1994 = vmatprep.mubr.f32.mxu0 0.0
      %1995 = vmatmul.mubr.f32.gmra.mxu0 %v1897
      %v1996 = vpop.f32.mrf.mxu0
      %v1997 = vadd.f32 0.0, %v1996
      %v1998 = vpop.f32.mrf.mxu0
      %1999 = vmatprep.mubr.f32.mxu0 0.0
      %2000 = vmatmul.mubr.f32.gmra.mxu0 %v1900
      %v2001 = vpop.f32.mrf.mxu0
      %v2002 = vadd.f32 0.0, %v2001
      %v2003 = vpop.f32.mrf.mxu0
      %2004 = vmatprep.mubr.f32.mxu0 0.0
      %2005 = vmatmul.mubr.f32.gmra.mxu0 %v1903
      %v2006 = vpop.f32.mrf.mxu0
      %v2007 = vadd.f32 0.0, %v2006
      %v2008 = vpop.f32.mrf.mxu0
      %2009 = vdwg.mxu0
      %v2011 = vsel %vm1364, %v472, 0
      %v2014 = vsel %vm1364, %v473, 0
      %v2017 = vsel %vm1364, %v474, 0
      %v2020 = vsel %vm1364, %v475, 0
      %v2023 = vsel %vm1364, %v476, 0
      %v2026 = vsel %vm1364, %v477, 0
      %v2029 = vsel %vm1364, %v478, 0
      %v2032 = vsel %vm1364, %v479, 0
      %2034 = vmatprep.subr.mxu0 0.0
      %2035 = vmatpush1.msra.mxu0 0.0
      %2036 = vmatprep.subr.mxu0 0.0
      %2037 = vmatpush1.msra.mxu0 0.0
      %2038 = vmatprep.subr.mxu0 0.0
      %2039 = vmatpush1.msra.mxu0 0.0
      %2040 = vmatprep.subr.mxu0 0.0
      %2041 = vmatpush1.msra.mxu0 0.0
      %2042 = vmatprep.subr.mxu0 0.0
      %2043 = vmatpush1.msra.mxu0 0.0
      %2044 = vmatprep.subr.mxu0 0.0
      %2045 = vmatpush1.msra.mxu0 0.0
      %2046 = vmatprep.subr.mxu0 0.0
      %2047 = vmatpush1.msra.mxu0 0.0
      %2048 = vmatprep.subr.mxu0 0.0
      %2049 = vmatpush1.msra.mxu0 0.0
      %2050 = vmatprep.subr.mxu0 0.0
      %2051 = vmatpush1.msra.mxu0 %v1121
      %2052 = vmatprep.subr.mxu0 0.0
      %2053 = vmatpush1.msra.mxu0 %v1116
      %2054 = vmatprep.subr.mxu0 0.0
      %2055 = vmatpush1.msra.mxu0 %v1111
      %2056 = vmatprep.subr.mxu0 0.0
      %2057 = vmatpush1.msra.mxu0 %v1106
      %2058 = vmatprep.subr.mxu0 0.0
      %2059 = vmatpush1.msra.mxu0 %v1101
      %2060 = vmatprep.subr.mxu0 0.0
      %2061 = vmatpush1.msra.mxu0 %v1096
      %2062 = vmatprep.subr.mxu0 0.0
      %2063 = vmatpush1.msra.mxu0 %v1091
      %2064 = vmatprep.subr.mxu0 0.0
      %2065 = vmatpush1.msra.mxu0 %v1086
      %2066 = vmatprep.subr.mxu0 0.0
      %2067 = vmatpush2.msra.mxu0 0.0
      %2068 = vmatprep.subr.mxu0 0.0
      %2069 = vmatpush2.msra.mxu0 0.0
      %2070 = vmatprep.subr.mxu0 0.0
      %2071 = vmatpush2.msra.mxu0 0.0
      %2072 = vmatprep.subr.mxu0 0.0
      %2073 = vmatpush2.msra.mxu0 0.0
      %2074 = vmatprep.subr.mxu0 0.0
      %2075 = vmatpush2.msra.mxu0 0.0
      %2076 = vmatprep.subr.mxu0 0.0
      %2077 = vmatpush2.msra.mxu0 0.0
      %2078 = vmatprep.subr.mxu0 0.0
      %2079 = vmatpush2.msra.mxu0 0.0
      %2080 = vmatprep.subr.mxu0 0.0
      %2081 = vmatpush2.msra.mxu0 0.0
      %2082 = vmatprep.subr.mxu0 0.0
      %2083 = vmatpush2.msra.mxu0 0.0
      %2084 = vmatprep.subr.mxu0 0.0
      %2085 = vmatpush2.msra.mxu0 0.0
      %2086 = vmatprep.subr.mxu0 0.0
      %2087 = vmatpush2.msra.mxu0 0.0
      %2088 = vmatprep.subr.mxu0 0.0
      %2089 = vmatpush2.msra.mxu0 0.0
      %2090 = vmatprep.subr.mxu0 0.0
      %2091 = vmatpush2.msra.mxu0 0.0
      %2092 = vmatprep.subr.mxu0 0.0
      %2093 = vmatpush2.msra.mxu0 0.0
      %2094 = vmatprep.subr.mxu0 0.0
      %2095 = vmatpush2.msra.mxu0 0.0
      %2096 = vmatprep.subr.mxu0 0.0
      %2097 = vmatpush2.msra.mxu0 0.0
      %2098 = vmatprep.mubr.f32.mxu0 0.0
      %2099 = vmatmul.mubr.f32.gmra.mxu0 %v2011
      %v2100 = vpop.f32.mrf.mxu0
      %v2101 = vadd.f32 0.0, %v2100
      %v2102 = vpop.f32.mrf.mxu0
      %2103 = vmatprep.mubr.f32.mxu0 0.0
      %2104 = vmatmul.mubr.f32.gmra.mxu0 %v2014
      %v2105 = vpop.f32.mrf.mxu0
      %v2106 = vadd.f32 0.0, %v2105
      %v2107 = vpop.f32.mrf.mxu0
      %2108 = vmatprep.mubr.f32.mxu0 0.0
      %2109 = vmatmul.mubr.f32.gmra.mxu0 %v2017
      %v2110 = vpop.f32.mrf.mxu0
      %v2111 = vadd.f32 0.0, %v2110
      %v2112 = vpop.f32.mrf.mxu0
      %2113 = vmatprep.mubr.f32.mxu0 0.0
      %2114 = vmatmul.mubr.f32.gmra.mxu0 %v2020
      %v2115 = vpop.f32.mrf.mxu0
      %v2116 = vadd.f32 0.0, %v2115
      %v2117 = vpop.f32.mrf.mxu0
      %2118 = vmatprep.mubr.f32.mxu0 0.0
      %2119 = vmatmul.mubr.f32.gmra.mxu0 %v2023
      %v2120 = vpop.f32.mrf.mxu0
      %v2121 = vadd.f32 0.0, %v2120
      %v2122 = vpop.f32.mrf.mxu0
      %2123 = vmatprep.mubr.f32.mxu0 0.0
      %2124 = vmatmul.mubr.f32.gmra.mxu0 %v2026
      %v2125 = vpop.f32.mrf.mxu0
      %v2126 = vadd.f32 0.0, %v2125
      %v2127 = vpop.f32.mrf.mxu0
      %2128 = vmatprep.mubr.f32.mxu0 0.0
      %2129 = vmatmul.mubr.f32.gmra.mxu0 %v2029
      %v2130 = vpop.f32.mrf.mxu0
      %v2131 = vadd.f32 0.0, %v2130
      %v2132 = vpop.f32.mrf.mxu0
      %2133 = vmatprep.mubr.f32.mxu0 0.0
      %2134 = vmatmul.mubr.f32.gmra.mxu0 %v2032
      %v2135 = vpop.f32.mrf.mxu0
      %v2136 = vadd.f32 0.0, %v2135
      %v2137 = vpop.f32.mrf.mxu0
      %2138 = vdwg.mxu0
      %v2140 = vsel %vm1364, %v480, 0
      %v2143 = vsel %vm1364, %v481, 0
      %v2146 = vsel %vm1364, %v482, 0
      %v2149 = vsel %vm1364, %v483, 0
      %v2152 = vsel %vm1364, %v484, 0
      %v2155 = vsel %vm1364, %v485, 0
      %v2158 = vsel %vm1364, %v486, 0
      %v2161 = vsel %vm1364, %v487, 0
      %2163 = vmatprep.subr.mxu0 0.0
      %2164 = vmatpush1.msra.mxu0 0.0
      %2165 = vmatprep.subr.mxu0 0.0
      %2166 = vmatpush1.msra.mxu0 0.0
      %2167 = vmatprep.subr.mxu0 0.0
      %2168 = vmatpush1.msra.mxu0 0.0
      %2169 = vmatprep.subr.mxu0 0.0
      %2170 = vmatpush1.msra.mxu0 0.0
      %2171 = vmatprep.subr.mxu0 0.0
      %2172 = vmatpush1.msra.mxu0 0.0
      %2173 = vmatprep.subr.mxu0 0.0
      %2174 = vmatpush1.msra.mxu0 0.0
      %2175 = vmatprep.subr.mxu0 0.0
      %2176 = vmatpush1.msra.mxu0 0.0
      %2177 = vmatprep.subr.mxu0 0.0
      %2178 = vmatpush1.msra.mxu0 0.0
      %2179 = vmatprep.subr.mxu0 0.0
      %2180 = vmatpush1.msra.mxu0 %v1161
      %2181 = vmatprep.subr.mxu0 0.0
      %2182 = vmatpush1.msra.mxu0 %v1156
      %2183 = vmatprep.subr.mxu0 0.0
      %2184 = vmatpush1.msra.mxu0 %v1151
      %2185 = vmatprep.subr.mxu0 0.0
      %2186 = vmatpush1.msra.mxu0 %v1146
      %2187 = vmatprep.subr.mxu0 0.0
      %2188 = vmatpush1.msra.mxu0 %v1141
      %2189 = vmatprep.subr.mxu0 0.0
      %2190 = vmatpush1.msra.mxu0 %v1136
      %2191 = vmatprep.subr.mxu0 0.0
      %2192 = vmatpush1.msra.mxu0 %v1131
      %2193 = vmatprep.subr.mxu0 0.0
      %2194 = vmatpush1.msra.mxu0 %v1126
      %2195 = vmatprep.subr.mxu0 0.0
      %2196 = vmatpush2.msra.mxu0 0.0
      %2197 = vmatprep.subr.mxu0 0.0
      %2198 = vmatpush2.msra.mxu0 0.0
      %2199 = vmatprep.subr.mxu0 0.0
      %2200 = vmatpush2.msra.mxu0 0.0
      %2201 = vmatprep.subr.mxu0 0.0
      %2202 = vmatpush2.msra.mxu0 0.0
      %2203 = vmatprep.subr.mxu0 0.0
      %2204 = vmatpush2.msra.mxu0 0.0
      %2205 = vmatprep.subr.mxu0 0.0
      %2206 = vmatpush2.msra.mxu0 0.0
      %2207 = vmatprep.subr.mxu0 0.0
      %2208 = vmatpush2.msra.mxu0 0.0
      %2209 = vmatprep.subr.mxu0 0.0
      %2210 = vmatpush2.msra.mxu0 0.0
      %2211 = vmatprep.subr.mxu0 0.0
      %2212 = vmatpush2.msra.mxu0 0.0
      %2213 = vmatprep.subr.mxu0 0.0
      %2214 = vmatpush2.msra.mxu0 0.0
      %2215 = vmatprep.subr.mxu0 0.0
      %2216 = vmatpush2.msra.mxu0 0.0
      %2217 = vmatprep.subr.mxu0 0.0
      %2218 = vmatpush2.msra.mxu0 0.0
      %2219 = vmatprep.subr.mxu0 0.0
      %2220 = vmatpush2.msra.mxu0 0.0
      %2221 = vmatprep.subr.mxu0 0.0
      %2222 = vmatpush2.msra.mxu0 0.0
      %2223 = vmatprep.subr.mxu0 0.0
      %2224 = vmatpush2.msra.mxu0 0.0
      %2225 = vmatprep.subr.mxu0 0.0
      %2226 = vmatpush2.msra.mxu0 0.0
      %2227 = vmatprep.mubr.f32.mxu0 0.0
      %2228 = vmatmul.mubr.f32.gmra.mxu0 %v2140
      %v2229 = vpop.f32.mrf.mxu0
      %v2230 = vadd.f32 0.0, %v2229
      %v2231 = vpop.f32.mrf.mxu0
      %2232 = vmatprep.mubr.f32.mxu0 0.0
      %2233 = vmatmul.mubr.f32.gmra.mxu0 %v2143
      %v2234 = vpop.f32.mrf.mxu0
      %v2235 = vadd.f32 0.0, %v2234
      %v2236 = vpop.f32.mrf.mxu0
      %2237 = vmatprep.mubr.f32.mxu0 0.0
      %2238 = vmatmul.mubr.f32.gmra.mxu0 %v2146
      %v2239 = vpop.f32.mrf.mxu0
      %v2240 = vadd.f32 0.0, %v2239
      %v2241 = vpop.f32.mrf.mxu0
      %2242 = vmatprep.mubr.f32.mxu0 0.0
      %2243 = vmatmul.mubr.f32.gmra.mxu0 %v2149
      %v2244 = vpop.f32.mrf.mxu0
      %v2245 = vadd.f32 0.0, %v2244
      %v2246 = vpop.f32.mrf.mxu0
      %2247 = vmatprep.mubr.f32.mxu0 0.0
      %2248 = vmatmul.mubr.f32.gmra.mxu0 %v2152
      %v2249 = vpop.f32.mrf.mxu0
      %v2250 = vadd.f32 0.0, %v2249
      %v2251 = vpop.f32.mrf.mxu0
      %2252 = vmatprep.mubr.f32.mxu0 0.0
      %2253 = vmatmul.mubr.f32.gmra.mxu0 %v2155
      %v2254 = vpop.f32.mrf.mxu0
      %v2255 = vadd.f32 0.0, %v2254
      %v2256 = vpop.f32.mrf.mxu0
      %2257 = vmatprep.mubr.f32.mxu0 0.0
      %2258 = vmatmul.mubr.f32.gmra.mxu0 %v2158
      %v2259 = vpop.f32.mrf.mxu0
      %v2260 = vadd.f32 0.0, %v2259
      %v2261 = vpop.f32.mrf.mxu0
      %2262 = vmatprep.mubr.f32.mxu0 0.0
      %2263 = vmatmul.mubr.f32.gmra.mxu0 %v2161
      %v2264 = vpop.f32.mrf.mxu0
      %v2265 = vadd.f32 0.0, %v2264
      %v2266 = vpop.f32.mrf.mxu0
      %2267 = vdwg.mxu0
      %v2269 = vsel %vm1364, %v488, 0
      %v2272 = vsel %vm1364, %v489, 0
      %v2275 = vsel %vm1364, %v490, 0
      %v2278 = vsel %vm1364, %v491, 0
      %v2281 = vsel %vm1364, %v492, 0
      %v2284 = vsel %vm1364, %v493, 0
      %v2287 = vsel %vm1364, %v494, 0
      %v2290 = vsel %vm1364, %v495, 0
      %2292 = vmatprep.subr.mxu0 0.0
      %2293 = vmatpush1.msra.mxu0 0.0
      %2294 = vmatprep.subr.mxu0 0.0
      %2295 = vmatpush1.msra.mxu0 0.0
      %2296 = vmatprep.subr.mxu0 0.0
      %2297 = vmatpush1.msra.mxu0 0.0
      %2298 = vmatprep.subr.mxu0 0.0
      %2299 = vmatpush1.msra.mxu0 0.0
      %2300 = vmatprep.subr.mxu0 0.0
      %2301 = vmatpush1.msra.mxu0 0.0
      %2302 = vmatprep.subr.mxu0 0.0
      %2303 = vmatpush1.msra.mxu0 0.0
      %2304 = vmatprep.subr.mxu0 0.0
      %2305 = vmatpush1.msra.mxu0 0.0
      %2306 = vmatprep.subr.mxu0 0.0
      %2307 = vmatpush1.msra.mxu0 0.0
      %2308 = vmatprep.subr.mxu0 0.0
      %2309 = vmatpush1.msra.mxu0 %v1201
      %2310 = vmatprep.subr.mxu0 0.0
      %2311 = vmatpush1.msra.mxu0 %v1196
      %2312 = vmatprep.subr.mxu0 0.0
      %2313 = vmatpush1.msra.mxu0 %v1191
      %2314 = vmatprep.subr.mxu0 0.0
      %2315 = vmatpush1.msra.mxu0 %v1186
      %2316 = vmatprep.subr.mxu0 0.0
      %2317 = vmatpush1.msra.mxu0 %v1181
      %2318 = vmatprep.subr.mxu0 0.0
      %2319 = vmatpush1.msra.mxu0 %v1176
      %2320 = vmatprep.subr.mxu0 0.0
      %2321 = vmatpush1.msra.mxu0 %v1171
      %2322 = vmatprep.subr.mxu0 0.0
      %2323 = vmatpush1.msra.mxu0 %v1166
      %2324 = vmatprep.subr.mxu0 0.0
      %2325 = vmatpush2.msra.mxu0 0.0
      %2326 = vmatprep.subr.mxu0 0.0
      %2327 = vmatpush2.msra.mxu0 0.0
      %2328 = vmatprep.subr.mxu0 0.0
      %2329 = vmatpush2.msra.mxu0 0.0
      %2330 = vmatprep.subr.mxu0 0.0
      %2331 = vmatpush2.msra.mxu0 0.0
      %2332 = vmatprep.subr.mxu0 0.0
      %2333 = vmatpush2.msra.mxu0 0.0
      %2334 = vmatprep.subr.mxu0 0.0
      %2335 = vmatpush2.msra.mxu0 0.0
      %2336 = vmatprep.subr.mxu0 0.0
      %2337 = vmatpush2.msra.mxu0 0.0
      %2338 = vmatprep.subr.mxu0 0.0
      %2339 = vmatpush2.msra.mxu0 0.0
      %2340 = vmatprep.subr.mxu0 0.0
      %2341 = vmatpush2.msra.mxu0 0.0
      %2342 = vmatprep.subr.mxu0 0.0
      %2343 = vmatpush2.msra.mxu0 0.0
      %2344 = vmatprep.subr.mxu0 0.0
      %2345 = vmatpush2.msra.mxu0 0.0
      %2346 = vmatprep.subr.mxu0 0.0
      %2347 = vmatpush2.msra.mxu0 0.0
      %2348 = vmatprep.subr.mxu0 0.0
      %2349 = vmatpush2.msra.mxu0 0.0
      %2350 = vmatprep.subr.mxu0 0.0
      %2351 = vmatpush2.msra.mxu0 0.0
      %2352 = vmatprep.subr.mxu0 0.0
      %2353 = vmatpush2.msra.mxu0 0.0
      %2354 = vmatprep.subr.mxu0 0.0
      %2355 = vmatpush2.msra.mxu0 0.0
      %2356 = vmatprep.mubr.f32.mxu0 0.0
      %2357 = vmatmul.mubr.f32.gmra.mxu0 %v2269
      %v2358 = vpop.f32.mrf.mxu0
      %v2359 = vadd.f32 0.0, %v2358
      %v2360 = vpop.f32.mrf.mxu0
      %2361 = vmatprep.mubr.f32.mxu0 0.0
      %2362 = vmatmul.mubr.f32.gmra.mxu0 %v2272
      %v2363 = vpop.f32.mrf.mxu0
      %v2364 = vadd.f32 0.0, %v2363
      %v2365 = vpop.f32.mrf.mxu0
      %2366 = vmatprep.mubr.f32.mxu0 0.0
      %2367 = vmatmul.mubr.f32.gmra.mxu0 %v2275
      %v2368 = vpop.f32.mrf.mxu0
      %v2369 = vadd.f32 0.0, %v2368
      %v2370 = vpop.f32.mrf.mxu0
      %2371 = vmatprep.mubr.f32.mxu0 0.0
      %2372 = vmatmul.mubr.f32.gmra.mxu0 %v2278
      %v2373 = vpop.f32.mrf.mxu0
      %v2374 = vadd.f32 0.0, %v2373
      %v2375 = vpop.f32.mrf.mxu0
      %2376 = vmatprep.mubr.f32.mxu0 0.0
      %2377 = vmatmul.mubr.f32.gmra.mxu0 %v2281
      %v2378 = vpop.f32.mrf.mxu0
      %v2379 = vadd.f32 0.0, %v2378
      %v2380 = vpop.f32.mrf.mxu0
      %2381 = vmatprep.mubr.f32.mxu0 0.0
      %2382 = vmatmul.mubr.f32.gmra.mxu0 %v2284
      %v2383 = vpop.f32.mrf.mxu0
      %v2384 = vadd.f32 0.0, %v2383
      %v2385 = vpop.f32.mrf.mxu0
      %2386 = vmatprep.mubr.f32.mxu0 0.0
      %2387 = vmatmul.mubr.f32.gmra.mxu0 %v2287
      %v2388 = vpop.f32.mrf.mxu0
      %v2389 = vadd.f32 0.0, %v2388
      %v2390 = vpop.f32.mrf.mxu0
      %2391 = vmatprep.mubr.f32.mxu0 0.0
      %2392 = vmatmul.mubr.f32.gmra.mxu0 %v2290
      %v2393 = vpop.f32.mrf.mxu0
      %v2394 = vadd.f32 0.0, %v2393
      %v2395 = vpop.f32.mrf.mxu0
      %2396 = vdwg.mxu0
      %v2398 = vsel %vm1364, %v496, 0
      %v2401 = vsel %vm1364, %v497, 0
      %v2404 = vsel %vm1364, %v498, 0
      %v2407 = vsel %vm1364, %v499, 0
      %v2410 = vsel %vm1364, %v500, 0
      %v2413 = vsel %vm1364, %v501, 0
      %v2416 = vsel %vm1364, %v502, 0
      %v2419 = vsel %vm1364, %v503, 0
      %2421 = vmatprep.subr.mxu0 0.0
      %2422 = vmatpush1.msra.mxu0 0.0
      %2423 = vmatprep.subr.mxu0 0.0
      %2424 = vmatpush1.msra.mxu0 0.0
      %2425 = vmatprep.subr.mxu0 0.0
      %2426 = vmatpush1.msra.mxu0 0.0
      %2427 = vmatprep.subr.mxu0 0.0
      %2428 = vmatpush1.msra.mxu0 0.0
      %2429 = vmatprep.subr.mxu0 0.0
      %2430 = vmatpush1.msra.mxu0 0.0
      %2431 = vmatprep.subr.mxu0 0.0
      %2432 = vmatpush1.msra.mxu0 0.0
      %2433 = vmatprep.subr.mxu0 0.0
      %2434 = vmatpush1.msra.mxu0 0.0
      %2435 = vmatprep.subr.mxu0 0.0
      %2436 = vmatpush1.msra.mxu0 0.0
      %2437 = vmatprep.subr.mxu0 0.0
      %2438 = vmatpush1.msra.mxu0 %v1241
      %2439 = vmatprep.subr.mxu0 0.0
      %2440 = vmatpush1.msra.mxu0 %v1236
      %2441 = vmatprep.subr.mxu0 0.0
      %2442 = vmatpush1.msra.mxu0 %v1231
      %2443 = vmatprep.subr.mxu0 0.0
      %2444 = vmatpush1.msra.mxu0 %v1226
      %2445 = vmatprep.subr.mxu0 0.0
      %2446 = vmatpush1.msra.mxu0 %v1221
      %2447 = vmatprep.subr.mxu0 0.0
      %2448 = vmatpush1.msra.mxu0 %v1216
      %2449 = vmatprep.subr.mxu0 0.0
      %2450 = vmatpush1.msra.mxu0 %v1211
      %2451 = vmatprep.subr.mxu0 0.0
      %2452 = vmatpush1.msra.mxu0 %v1206
      %2453 = vmatprep.subr.mxu0 0.0
      %2454 = vmatpush2.msra.mxu0 0.0
      %2455 = vmatprep.subr.mxu0 0.0
      %2456 = vmatpush2.msra.mxu0 0.0
      %2457 = vmatprep.subr.mxu0 0.0
      %2458 = vmatpush2.msra.mxu0 0.0
      %2459 = vmatprep.subr.mxu0 0.0
      %2460 = vmatpush2.msra.mxu0 0.0
      %2461 = vmatprep.subr.mxu0 0.0
      %2462 = vmatpush2.msra.mxu0 0.0
      %2463 = vmatprep.subr.mxu0 0.0
      %2464 = vmatpush2.msra.mxu0 0.0
      %2465 = vmatprep.subr.mxu0 0.0
      %2466 = vmatpush2.msra.mxu0 0.0
      %2467 = vmatprep.subr.mxu0 0.0
      %2468 = vmatpush2.msra.mxu0 0.0
      %2469 = vmatprep.subr.mxu0 0.0
      %2470 = vmatpush2.msra.mxu0 0.0
      %2471 = vmatprep.subr.mxu0 0.0
      %2472 = vmatpush2.msra.mxu0 0.0
      %2473 = vmatprep.subr.mxu0 0.0
      %2474 = vmatpush2.msra.mxu0 0.0
      %2475 = vmatprep.subr.mxu0 0.0
      %2476 = vmatpush2.msra.mxu0 0.0
      %2477 = vmatprep.subr.mxu0 0.0
      %2478 = vmatpush2.msra.mxu0 0.0
      %2479 = vmatprep.subr.mxu0 0.0
      %2480 = vmatpush2.msra.mxu0 0.0
      %2481 = vmatprep.subr.mxu0 0.0
      %2482 = vmatpush2.msra.mxu0 0.0
      %2483 = vmatprep.subr.mxu0 0.0
      %2484 = vmatpush2.msra.mxu0 0.0
      %2485 = vmatprep.mubr.f32.mxu0 0.0
      %2486 = vmatmul.mubr.f32.gmra.mxu0 %v2398
      %v2487 = vpop.f32.mrf.mxu0
      %v2488 = vadd.f32 0.0, %v2487
      %v2489 = vpop.f32.mrf.mxu0
      %2490 = vmatprep.mubr.f32.mxu0 0.0
      %2491 = vmatmul.mubr.f32.gmra.mxu0 %v2401
      %v2492 = vpop.f32.mrf.mxu0
      %v2493 = vadd.f32 0.0, %v2492
      %v2494 = vpop.f32.mrf.mxu0
      %2495 = vmatprep.mubr.f32.mxu0 0.0
      %2496 = vmatmul.mubr.f32.gmra.mxu0 %v2404
      %v2497 = vpop.f32.mrf.mxu0
      %v2498 = vadd.f32 0.0, %v2497
      %v2499 = vpop.f32.mrf.mxu0
      %2500 = vmatprep.mubr.f32.mxu0 0.0
      %2501 = vmatmul.mubr.f32.gmra.mxu0 %v2407
      %v2502 = vpop.f32.mrf.mxu0
      %v2503 = vadd.f32 0.0, %v2502
      %v2504 = vpop.f32.mrf.mxu0
      %2505 = vmatprep.mubr.f32.mxu0 0.0
      %2506 = vmatmul.mubr.f32.gmra.mxu0 %v2410
      %v2507 = vpop.f32.mrf.mxu0
      %v2508 = vadd.f32 0.0, %v2507
      %v2509 = vpop.f32.mrf.mxu0
      %2510 = vmatprep.mubr.f32.mxu0 0.0
      %2511 = vmatmul.mubr.f32.gmra.mxu0 %v2413
      %v2512 = vpop.f32.mrf.mxu0
      %v2513 = vadd.f32 0.0, %v2512
      %v2514 = vpop.f32.mrf.mxu0
      %2515 = vmatprep.mubr.f32.mxu0 0.0
      %2516 = vmatmul.mubr.f32.gmra.mxu0 %v2416
      %v2517 = vpop.f32.mrf.mxu0
      %v2518 = vadd.f32 0.0, %v2517
      %v2519 = vpop.f32.mrf.mxu0
      %2520 = vmatprep.mubr.f32.mxu0 0.0
      %2521 = vmatmul.mubr.f32.gmra.mxu0 %v2419
      %v2522 = vpop.f32.mrf.mxu0
      %v2523 = vadd.f32 0.0, %v2522
      %v2524 = vpop.f32.mrf.mxu0
      %2525 = vdwg.mxu0
      %v2527 = vsel %vm1364, %v504, 0
      %v2530 = vsel %vm1364, %v505, 0
      %v2533 = vsel %vm1364, %v506, 0
      %v2536 = vsel %vm1364, %v507, 0
      %v2539 = vsel %vm1364, %v508, 0
      %v2542 = vsel %vm1364, %v509, 0
      %v2545 = vsel %vm1364, %v510, 0
      %v2548 = vsel %vm1364, %v511, 0
      %2550 = vmatprep.subr.mxu0 0.0
      %2551 = vmatpush1.msra.mxu0 0.0
      %2552 = vmatprep.subr.mxu0 0.0
      %2553 = vmatpush1.msra.mxu0 0.0
      %2554 = vmatprep.subr.mxu0 0.0
      %2555 = vmatpush1.msra.mxu0 0.0
      %2556 = vmatprep.subr.mxu0 0.0
      %2557 = vmatpush1.msra.mxu0 0.0
      %2558 = vmatprep.subr.mxu0 0.0
      %2559 = vmatpush1.msra.mxu0 0.0
      %2560 = vmatprep.subr.mxu0 0.0
      %2561 = vmatpush1.msra.mxu0 0.0
      %2562 = vmatprep.subr.mxu0 0.0
      %2563 = vmatpush1.msra.mxu0 0.0
      %2564 = vmatprep.subr.mxu0 0.0
      %2565 = vmatpush1.msra.mxu0 0.0
      %2566 = vmatprep.subr.mxu0 0.0
      %2567 = vmatpush1.msra.mxu0 %v1281
      %2568 = vmatprep.subr.mxu0 0.0
      %2569 = vmatpush1.msra.mxu0 %v1276
      %2570 = vmatprep.subr.mxu0 0.0
      %2571 = vmatpush1.msra.mxu0 %v1271
      %2572 = vmatprep.subr.mxu0 0.0
      %2573 = vmatpush1.msra.mxu0 %v1266
      %2574 = vmatprep.subr.mxu0 0.0
      %2575 = vmatpush1.msra.mxu0 %v1261
      %2576 = vmatprep.subr.mxu0 0.0
      %2577 = vmatpush1.msra.mxu0 %v1256
      %2578 = vmatprep.subr.mxu0 0.0
      %2579 = vmatpush1.msra.mxu0 %v1251
      %2580 = vmatprep.subr.mxu0 0.0
      %2581 = vmatpush1.msra.mxu0 %v1246
      %2582 = vmatprep.subr.mxu0 0.0
      %2583 = vmatpush2.msra.mxu0 0.0
      %2584 = vmatprep.subr.mxu0 0.0
      %2585 = vmatpush2.msra.mxu0 0.0
      %2586 = vmatprep.subr.mxu0 0.0
      %2587 = vmatpush2.msra.mxu0 0.0
      %2588 = vmatprep.subr.mxu0 0.0
      %2589 = vmatpush2.msra.mxu0 0.0
      %2590 = vmatprep.subr.mxu0 0.0
      %2591 = vmatpush2.msra.mxu0 0.0
      %2592 = vmatprep.subr.mxu0 0.0
      %2593 = vmatpush2.msra.mxu0 0.0
      %2594 = vmatprep.subr.mxu0 0.0
      %2595 = vmatpush2.msra.mxu0 0.0
      %2596 = vmatprep.subr.mxu0 0.0
      %2597 = vmatpush2.msra.mxu0 0.0
      %2598 = vmatprep.subr.mxu0 0.0
      %2599 = vmatpush2.msra.mxu0 0.0
      %2600 = vmatprep.subr.mxu0 0.0
      %2601 = vmatpush2.msra.mxu0 0.0
      %2602 = vmatprep.subr.mxu0 0.0
      %2603 = vmatpush2.msra.mxu0 0.0
      %2604 = vmatprep.subr.mxu0 0.0
      %2605 = vmatpush2.msra.mxu0 0.0
      %2606 = vmatprep.subr.mxu0 0.0
      %2607 = vmatpush2.msra.mxu0 0.0
      %2608 = vmatprep.subr.mxu0 0.0
      %2609 = vmatpush2.msra.mxu0 0.0
      %2610 = vmatprep.subr.mxu0 0.0
      %2611 = vmatpush2.msra.mxu0 0.0
      %2612 = vmatprep.subr.mxu0 0.0
      %2613 = vmatpush2.msra.mxu0 0.0
      %2614 = vmatprep.mubr.f32.mxu0 0.0
      %2615 = vmatmul.mubr.f32.gmra.mxu0 %v2527
      %v2616 = vpop.f32.mrf.mxu0
      %v2617 = vadd.f32 0.0, %v2616
      %v2618 = vpop.f32.mrf.mxu0
      %2619 = vmatprep.mubr.f32.mxu0 0.0
      %2620 = vmatmul.mubr.f32.gmra.mxu0 %v2530
      %v2621 = vpop.f32.mrf.mxu0
      %v2622 = vadd.f32 0.0, %v2621
      %v2623 = vpop.f32.mrf.mxu0
      %2624 = vmatprep.mubr.f32.mxu0 0.0
      %2625 = vmatmul.mubr.f32.gmra.mxu0 %v2533
      %v2626 = vpop.f32.mrf.mxu0
      %v2627 = vadd.f32 0.0, %v2626
      %v2628 = vpop.f32.mrf.mxu0
      %2629 = vmatprep.mubr.f32.mxu0 0.0
      %2630 = vmatmul.mubr.f32.gmra.mxu0 %v2536
      %v2631 = vpop.f32.mrf.mxu0
      %v2632 = vadd.f32 0.0, %v2631
      %v2633 = vpop.f32.mrf.mxu0
      %2634 = vmatprep.mubr.f32.mxu0 0.0
      %2635 = vmatmul.mubr.f32.gmra.mxu0 %v2539
      %v2636 = vpop.f32.mrf.mxu0
      %v2637 = vadd.f32 0.0, %v2636
      %v2638 = vpop.f32.mrf.mxu0
      %2639 = vmatprep.mubr.f32.mxu0 0.0
      %2640 = vmatmul.mubr.f32.gmra.mxu0 %v2542
      %v2641 = vpop.f32.mrf.mxu0
      %v2642 = vadd.f32 0.0, %v2641
      %v2643 = vpop.f32.mrf.mxu0
      %2644 = vmatprep.mubr.f32.mxu0 0.0
      %2645 = vmatmul.mubr.f32.gmra.mxu0 %v2545
      %v2646 = vpop.f32.mrf.mxu0
      %v2647 = vadd.f32 0.0, %v2646
      %v2648 = vpop.f32.mrf.mxu0
      %2649 = vmatprep.mubr.f32.mxu0 0.0
      %2650 = vmatmul.mubr.f32.gmra.mxu0 %v2548
      %v2651 = vpop.f32.mrf.mxu0
      %v2652 = vadd.f32 0.0, %v2651
      %v2653 = vpop.f32.mrf.mxu0
      %2654 = vdwg.mxu0
      %v2656 = vsel %vm1364, %v512, 0
      %v2659 = vsel %vm1364, %v513, 0
      %v2662 = vsel %vm1364, %v514, 0
      %v2665 = vsel %vm1364, %v515, 0
      %v2668 = vsel %vm1364, %v516, 0
      %v2671 = vsel %vm1364, %v517, 0
      %v2674 = vsel %vm1364, %v518, 0
      %v2677 = vsel %vm1364, %v519, 0
      %2679 = vmatprep.subr.mxu0 0.0
      %2680 = vmatpush1.msra.mxu0 0.0
      %2681 = vmatprep.subr.mxu0 0.0
      %2682 = vmatpush1.msra.mxu0 0.0
      %2683 = vmatprep.subr.mxu0 0.0
      %2684 = vmatpush1.msra.mxu0 0.0
      %2685 = vmatprep.subr.mxu0 0.0
      %2686 = vmatpush1.msra.mxu0 0.0
      %2687 = vmatprep.subr.mxu0 0.0
      %2688 = vmatpush1.msra.mxu0 0.0
      %2689 = vmatprep.subr.mxu0 0.0
      %2690 = vmatpush1.msra.mxu0 0.0
      %2691 = vmatprep.subr.mxu0 0.0
      %2692 = vmatpush1.msra.mxu0 0.0
      %2693 = vmatprep.subr.mxu0 0.0
      %2694 = vmatpush1.msra.mxu0 0.0
      %2695 = vmatprep.subr.mxu0 0.0
      %2696 = vmatpush1.msra.mxu0 %v1321
      %2697 = vmatprep.subr.mxu0 0.0
      %2698 = vmatpush1.msra.mxu0 %v1316
      %2699 = vmatprep.subr.mxu0 0.0
      %2700 = vmatpush1.msra.mxu0 %v1311
      %2701 = vmatprep.subr.mxu0 0.0
      %2702 = vmatpush1.msra.mxu0 %v1306
      %2703 = vmatprep.subr.mxu0 0.0
      %2704 = vmatpush1.msra.mxu0 %v1301
      %2705 = vmatprep.subr.mxu0 0.0
      %2706 = vmatpush1.msra.mxu0 %v1296
      %2707 = vmatprep.subr.mxu0 0.0
      %2708 = vmatpush1.msra.mxu0 %v1291
      %2709 = vmatprep.subr.mxu0 0.0
      %2710 = vmatpush1.msra.mxu0 %v1286
      %2711 = vmatprep.subr.mxu0 0.0
      %2712 = vmatpush2.msra.mxu0 0.0
      %2713 = vmatprep.subr.mxu0 0.0
      %2714 = vmatpush2.msra.mxu0 0.0
      %2715 = vmatprep.subr.mxu0 0.0
      %2716 = vmatpush2.msra.mxu0 0.0
      %2717 = vmatprep.subr.mxu0 0.0
      %2718 = vmatpush2.msra.mxu0 0.0
      %2719 = vmatprep.subr.mxu0 0.0
      %2720 = vmatpush2.msra.mxu0 0.0
      %2721 = vmatprep.subr.mxu0 0.0
      %2722 = vmatpush2.msra.mxu0 0.0
      %2723 = vmatprep.subr.mxu0 0.0
      %2724 = vmatpush2.msra.mxu0 0.0
      %2725 = vmatprep.subr.mxu0 0.0
      %2726 = vmatpush2.msra.mxu0 0.0
      %2727 = vmatprep.subr.mxu0 0.0
      %2728 = vmatpush2.msra.mxu0 0.0
      %2729 = vmatprep.subr.mxu0 0.0
      %2730 = vmatpush2.msra.mxu0 0.0
      %2731 = vmatprep.subr.mxu0 0.0
      %2732 = vmatpush2.msra.mxu0 0.0
      %2733 = vmatprep.subr.mxu0 0.0
      %2734 = vmatpush2.msra.mxu0 0.0
      %2735 = vmatprep.subr.mxu0 0.0
      %2736 = vmatpush2.msra.mxu0 0.0
      %2737 = vmatprep.subr.mxu0 0.0
      %2738 = vmatpush2.msra.mxu0 0.0
      %2739 = vmatprep.subr.mxu0 0.0
      %2740 = vmatpush2.msra.mxu0 0.0
      %2741 = vmatprep.subr.mxu0 0.0
      %2742 = vmatpush2.msra.mxu0 0.0
      %2743 = vmatprep.mubr.f32.mxu0 0.0
      %2744 = vmatmul.mubr.f32.gmra.mxu0 %v2656
      %v2745 = vpop.f32.mrf.mxu0
      %v2746 = vadd.f32 0.0, %v2745
      %v2747 = vpop.f32.mrf.mxu0
      %2748 = vmatprep.mubr.f32.mxu0 0.0
      %2749 = vmatmul.mubr.f32.gmra.mxu0 %v2659
      %v2750 = vpop.f32.mrf.mxu0
      %v2751 = vadd.f32 0.0, %v2750
      %v2752 = vpop.f32.mrf.mxu0
      %2753 = vmatprep.mubr.f32.mxu0 0.0
      %2754 = vmatmul.mubr.f32.gmra.mxu0 %v2662
      %v2755 = vpop.f32.mrf.mxu0
      %v2756 = vadd.f32 0.0, %v2755
      %v2757 = vpop.f32.mrf.mxu0
      %2758 = vmatprep.mubr.f32.mxu0 0.0
      %2759 = vmatmul.mubr.f32.gmra.mxu0 %v2665
      %v2760 = vpop.f32.mrf.mxu0
      %v2761 = vadd.f32 0.0, %v2760
      %v2762 = vpop.f32.mrf.mxu0
      %2763 = vmatprep.mubr.f32.mxu0 0.0
      %2764 = vmatmul.mubr.f32.gmra.mxu0 %v2668
      %v2765 = vpop.f32.mrf.mxu0
      %v2766 = vadd.f32 0.0, %v2765
      %v2767 = vpop.f32.mrf.mxu0
      %2768 = vmatprep.mubr.f32.mxu0 0.0
      %2769 = vmatmul.mubr.f32.gmra.mxu0 %v2671
      %v2770 = vpop.f32.mrf.mxu0
      %v2771 = vadd.f32 0.0, %v2770
      %v2772 = vpop.f32.mrf.mxu0
      %2773 = vmatprep.mubr.f32.mxu0 0.0
      %2774 = vmatmul.mubr.f32.gmra.mxu0 %v2674
      %v2775 = vpop.f32.mrf.mxu0
      %v2776 = vadd.f32 0.0, %v2775
      %v2777 = vpop.f32.mrf.mxu0
      %2778 = vmatprep.mubr.f32.mxu0 0.0
      %2779 = vmatmul.mubr.f32.gmra.mxu0 %v2677
      %v2780 = vpop.f32.mrf.mxu0
      %v2781 = vadd.f32 0.0, %v2780
      %v2782 = vpop.f32.mrf.mxu0
      %2783 = vdwg.mxu0
      %v2785 = vsel %vm1364, %v520, 0
      %v2788 = vsel %vm1364, %v521, 0
      %v2791 = vsel %vm1364, %v522, 0
      %v2794 = vsel %vm1364, %v523, 0
      %v2797 = vsel %vm1364, %v524, 0
      %v2800 = vsel %vm1364, %v525, 0
      %v2803 = vsel %vm1364, %v526, 0
      %v2806 = vsel %vm1364, %v527, 0
      %2808 = vmatprep.subr.mxu0 0.0
      %2809 = vmatpush1.msra.mxu0 0.0
      %2810 = vmatprep.subr.mxu0 0.0
      %2811 = vmatpush1.msra.mxu0 0.0
      %2812 = vmatprep.subr.mxu0 0.0
      %2813 = vmatpush1.msra.mxu0 0.0
      %2814 = vmatprep.subr.mxu0 0.0
      %2815 = vmatpush1.msra.mxu0 0.0
      %2816 = vmatprep.subr.mxu0 0.0
      %2817 = vmatpush1.msra.mxu0 0.0
      %2818 = vmatprep.subr.mxu0 0.0
      %2819 = vmatpush1.msra.mxu0 0.0
      %2820 = vmatprep.subr.mxu0 0.0
      %2821 = vmatpush1.msra.mxu0 0.0
      %2822 = vmatprep.subr.mxu0 0.0
      %2823 = vmatpush1.msra.mxu0 0.0
      %2824 = vmatprep.subr.mxu0 0.0
      %2825 = vmatpush1.msra.mxu0 %v1361
      %2826 = vmatprep.subr.mxu0 0.0
      %2827 = vmatpush1.msra.mxu0 %v1356
      %2828 = vmatprep.subr.mxu0 0.0
      %2829 = vmatpush1.msra.mxu0 %v1351
      %2830 = vmatprep.subr.mxu0 0.0
      %2831 = vmatpush1.msra.mxu0 %v1346
      %2832 = vmatprep.subr.mxu0 0.0
      %2833 = vmatpush1.msra.mxu0 %v1341
      %2834 = vmatprep.subr.mxu0 0.0
      %2835 = vmatpush1.msra.mxu0 %v1336
      %2836 = vmatprep.subr.mxu0 0.0
      %2837 = vmatpush1.msra.mxu0 %v1331
      %2838 = vmatprep.subr.mxu0 0.0
      %2839 = vmatpush1.msra.mxu0 %v1326
      %2840 = vmatprep.subr.mxu0 0.0
      %2841 = vmatpush2.msra.mxu0 0.0
      %2842 = vmatprep.subr.mxu0 0.0
      %2843 = vmatpush2.msra.mxu0 0.0
      %2844 = vmatprep.subr.mxu0 0.0
      %2845 = vmatpush2.msra.mxu0 0.0
      %2846 = vmatprep.subr.mxu0 0.0
      %2847 = vmatpush2.msra.mxu0 0.0
      %2848 = vmatprep.subr.mxu0 0.0
      %2849 = vmatpush2.msra.mxu0 0.0
      %2850 = vmatprep.subr.mxu0 0.0
      %2851 = vmatpush2.msra.mxu0 0.0
      %2852 = vmatprep.subr.mxu0 0.0
      %2853 = vmatpush2.msra.mxu0 0.0
      %2854 = vmatprep.subr.mxu0 0.0
      %2855 = vmatpush2.msra.mxu0 0.0
      %2856 = vmatprep.subr.mxu0 0.0
      %2857 = vmatpush2.msra.mxu0 0.0
      %2858 = vmatprep.subr.mxu0 0.0
      %2859 = vmatpush2.msra.mxu0 0.0
      %2860 = vmatprep.subr.mxu0 0.0
      %2861 = vmatpush2.msra.mxu0 0.0
      %2862 = vmatprep.subr.mxu0 0.0
      %2863 = vmatpush2.msra.mxu0 0.0
      %2864 = vmatprep.subr.mxu0 0.0
      %2865 = vmatpush2.msra.mxu0 0.0
      %2866 = vmatprep.subr.mxu0 0.0
      %2867 = vmatpush2.msra.mxu0 0.0
      %2868 = vmatprep.subr.mxu0 0.0
      %2869 = vmatpush2.msra.mxu0 0.0
      %2870 = vmatprep.subr.mxu0 0.0
      %2871 = vmatpush2.msra.mxu0 0.0
      %2872 = vmatprep.mubr.f32.mxu0 0.0
      %2873 = vmatmul.mubr.f32.gmra.mxu0 %v2785
      %v2874 = vpop.f32.mrf.mxu0
      %v2875 = vadd.f32 0.0, %v2874
      %v2876 = vpop.f32.mrf.mxu0
      %2877 = vmatprep.mubr.f32.mxu0 0.0
      %2878 = vmatmul.mubr.f32.gmra.mxu0 %v2788
      %v2879 = vpop.f32.mrf.mxu0
      %v2880 = vadd.f32 0.0, %v2879
      %v2881 = vpop.f32.mrf.mxu0
      %2882 = vmatprep.mubr.f32.mxu0 0.0
      %2883 = vmatmul.mubr.f32.gmra.mxu0 %v2791
      %v2884 = vpop.f32.mrf.mxu0
      %v2885 = vadd.f32 0.0, %v2884
      %v2886 = vpop.f32.mrf.mxu0
      %2887 = vmatprep.mubr.f32.mxu0 0.0
      %2888 = vmatmul.mubr.f32.gmra.mxu0 %v2794
      %v2889 = vpop.f32.mrf.mxu0
      %v2890 = vadd.f32 0.0, %v2889
      %v2891 = vpop.f32.mrf.mxu0
      %2892 = vmatprep.mubr.f32.mxu0 0.0
      %2893 = vmatmul.mubr.f32.gmra.mxu0 %v2797
      %v2894 = vpop.f32.mrf.mxu0
      %v2895 = vadd.f32 0.0, %v2894
      %v2896 = vpop.f32.mrf.mxu0
      %2897 = vmatprep.mubr.f32.mxu0 0.0
      %2898 = vmatmul.mubr.f32.gmra.mxu0 %v2800
      %v2899 = vpop.f32.mrf.mxu0
      %v2900 = vadd.f32 0.0, %v2899
      %v2901 = vpop.f32.mrf.mxu0
      %2902 = vmatprep.mubr.f32.mxu0 0.0
      %2903 = vmatmul.mubr.f32.gmra.mxu0 %v2803
      %v2904 = vpop.f32.mrf.mxu0
      %v2905 = vadd.f32 0.0, %v2904
      %v2906 = vpop.f32.mrf.mxu0
      %2907 = vmatprep.mubr.f32.mxu0 0.0
      %2908 = vmatmul.mubr.f32.gmra.mxu0 %v2806
      %v2909 = vpop.f32.mrf.mxu0
      %v2910 = vadd.f32 0.0, %v2909
      %v2911 = vpop.f32.mrf.mxu0
      %2912 = vdwg.mxu0
      %v2913 = vmax.f32 %v1456, 0.0
      %v2914 = vmax.f32 %v1461, 0.0
      %v2915 = vmax.f32 %v1466, 0.0
      %v2916 = vmax.f32 %v1471, 0.0
      %v2917 = vmax.f32 %v1476, 0.0
      %v2918 = vmax.f32 %v1481, 0.0
      %v2919 = vmax.f32 %v1486, 0.0
      %v2920 = vmax.f32 %v1491, 0.0
      %v2921 = vmax.f32 %v1585, 0.0
      %v2922 = vmax.f32 %v1590, 0.0
      %v2923 = vmax.f32 %v1595, 0.0
      %v2924 = vmax.f32 %v1600, 0.0
      %v2925 = vmax.f32 %v1605, 0.0
      %v2926 = vmax.f32 %v1610, 0.0
      %v2927 = vmax.f32 %v1615, 0.0
      %v2928 = vmax.f32 %v1620, 0.0
      %v2929 = vmax.f32 %v1714, 0.0
      %v2930 = vmax.f32 %v1719, 0.0
      %v2931 = vmax.f32 %v1724, 0.0
      %v2932 = vmax.f32 %v1729, 0.0
      %v2933 = vmax.f32 %v1734, 0.0
      %v2934 = vmax.f32 %v1739, 0.0
      %v2935 = vmax.f32 %v1744, 0.0
      %v2936 = vmax.f32 %v1749, 0.0
      %v2937 = vmax.f32 %v1843, 0.0
      %v2938 = vmax.f32 %v1848, 0.0
      %v2939 = vmax.f32 %v1853, 0.0
      %v2940 = vmax.f32 %v1858, 0.0
      %v2941 = vmax.f32 %v1863, 0.0
      %v2942 = vmax.f32 %v1868, 0.0
      %v2943 = vmax.f32 %v1873, 0.0
      %v2944 = vmax.f32 %v1878, 0.0
      %v2945 = vmax.f32 %v1972, 0.0
      %v2946 = vmax.f32 %v1977, 0.0
      %v2947 = vmax.f32 %v1982, 0.0
      %v2948 = vmax.f32 %v1987, 0.0
      %v2949 = vmax.f32 %v1992, 0.0
      %v2950 = vmax.f32 %v1997, 0.0
      %v2951 = vmax.f32 %v2002, 0.0
      %v2952 = vmax.f32 %v2007, 0.0
      %v2953 = vmax.f32 %v2101, 0.0
      %v2954 = vmax.f32 %v2106, 0.0
      %v2955 = vmax.f32 %v2111, 0.0
      %v2956 = vmax.f32 %v2116, 0.0
      %v2957 = vmax.f32 %v2121, 0.0
      %v2958 = vmax.f32 %v2126, 0.0
      %v2959 = vmax.f32 %v2131, 0.0
      %v2960 = vmax.f32 %v2136, 0.0
      %v2961 = vmax.f32 %v2230, 0.0
      %v2962 = vmax.f32 %v2235, 0.0
      %v2963 = vmax.f32 %v2240, 0.0
      %v2964 = vmax.f32 %v2245, 0.0
      %v2965 = vmax.f32 %v2250, 0.0
      %v2966 = vmax.f32 %v2255, 0.0
      %v2967 = vmax.f32 %v2260, 0.0
      %v2968 = vmax.f32 %v2265, 0.0
      %v2969 = vmax.f32 %v2359, 0.0
      %v2970 = vmax.f32 %v2364, 0.0
      %v2971 = vmax.f32 %v2369, 0.0
      %v2972 = vmax.f32 %v2374, 0.0
      %v2973 = vmax.f32 %v2379, 0.0
      %v2974 = vmax.f32 %v2384, 0.0
      %v2975 = vmax.f32 %v2389, 0.0
      %v2976 = vmax.f32 %v2394, 0.0
      %v2977 = vmax.f32 %v2488, 0.0
      %v2978 = vmax.f32 %v2493, 0.0
      %v2979 = vmax.f32 %v2498, 0.0
      %v2980 = vmax.f32 %v2503, 0.0
      %v2981 = vmax.f32 %v2508, 0.0
      %v2982 = vmax.f32 %v2513, 0.0
      %v2983 = vmax.f32 %v2518, 0.0
      %v2984 = vmax.f32 %v2523, 0.0
      %v2985 = vmax.f32 %v2617, 0.0
      %v2986 = vmax.f32 %v2622, 0.0
      %v2987 = vmax.f32 %v2627, 0.0
      %v2988 = vmax.f32 %v2632, 0.0
      %v2989 = vmax.f32 %v2637, 0.0
      %v2990 = vmax.f32 %v2642, 0.0
      %v2991 = vmax.f32 %v2647, 0.0
      %v2992 = vmax.f32 %v2652, 0.0
      %v2993 = vmax.f32 %v2746, 0.0
      %v2994 = vmax.f32 %v2751, 0.0
      %v2995 = vmax.f32 %v2756, 0.0
      %v2996 = vmax.f32 %v2761, 0.0
      %v2997 = vmax.f32 %v2766, 0.0
      %v2998 = vmax.f32 %v2771, 0.0
      %v2999 = vmax.f32 %v2776, 0.0
      %v3000 = vmax.f32 %v2781, 0.0
      %v3001 = vmax.f32 %v2875, 0.0
      %v3002 = vmax.f32 %v2880, 0.0
      %v3003 = vmax.f32 %v2885, 0.0
      %v3004 = vmax.f32 %v2890, 0.0
      %v3005 = vmax.f32 %v2895, 0.0
      %v3006 = vmax.f32 %v2900, 0.0
      %v3007 = vmax.f32 %v2905, 0.0
      %v3008 = vmax.f32 %v2910, 0.0
      %v3009 = vld [vmem:[%s3] sm:$0xff]
      %v3010 = vld [vmem:[%s3 + $0x8] sm:$0xff]
      %v3011 = vld [vmem:[%s3 + $0x10] sm:$0xff]
      %v3012 = vld [vmem:[%s3 + $0x18] sm:$0xff]
      %vm3013 = vcmask 261120
      %v3015 = vsel %vm3013, %v2913, 0
      %v3018 = vsel %vm3013, %v2914, 0
      %v3021 = vsel %vm3013, %v2915, 0
      %v3024 = vsel %vm3013, %v2916, 0
      %v3027 = vsel %vm3013, %v2917, 0
      %v3030 = vsel %vm3013, %v2918, 0
      %v3033 = vsel %vm3013, %v2919, 0
      %v3036 = vsel %vm3013, %v2920, 0
      %v3039 = vsel %vm3013, %v2921, 0
      %v3042 = vsel %vm3013, %v2922, 0
      %v3045 = vsel %vm3013, %v2923, 0
      %v3048 = vsel %vm3013, %v2924, 0
      %v3051 = vsel %vm3013, %v2925, 0
      %v3054 = vsel %vm3013, %v2926, 0
      %v3057 = vsel %vm3013, %v2927, 0
      %v3060 = vsel %vm3013, %v2928, 0
      %v3063 = vsel %vm3013, %v2929, 0
      %v3066 = vsel %vm3013, %v2930, 0
      %v3069 = vsel %vm3013, %v2931, 0
      %v3072 = vsel %vm3013, %v2932, 0
      %v3075 = vsel %vm3013, %v2933, 0
      %v3078 = vsel %vm3013, %v2934, 0
      %v3081 = vsel %vm3013, %v2935, 0
      %v3084 = vsel %vm3013, %v2936, 0
      %v3087 = vsel %vm3013, %v2937, 0
      %v3090 = vsel %vm3013, %v2938, 0
      %v3093 = vsel %vm3013, %v2939, 0
      %v3096 = vsel %vm3013, %v2940, 0
      %v3099 = vsel %vm3013, %v2941, 0
      %v3102 = vsel %vm3013, %v2942, 0
      %v3105 = vsel %vm3013, %v2943, 0
      %v3108 = vsel %vm3013, %v2944, 0
      %v3111 = vsel %vm3013, %v2945, 0
      %v3114 = vsel %vm3013, %v2946, 0
      %v3117 = vsel %vm3013, %v2947, 0
      %v3120 = vsel %vm3013, %v2948, 0
      %v3123 = vsel %vm3013, %v2949, 0
      %v3126 = vsel %vm3013, %v2950, 0
      %v3129 = vsel %vm3013, %v2951, 0
      %v3132 = vsel %vm3013, %v2952, 0
      %v3135 = vsel %vm3013, %v2953, 0
      %v3138 = vsel %vm3013, %v2954, 0
      %v3141 = vsel %vm3013, %v2955, 0
      %v3144 = vsel %vm3013, %v2956, 0
      %v3147 = vsel %vm3013, %v2957, 0
      %v3150 = vsel %vm3013, %v2958, 0
      %v3153 = vsel %vm3013, %v2959, 0
      %v3156 = vsel %vm3013, %v2960, 0
      %v3159 = vsel %vm3013, %v2961, 0
      %v3162 = vsel %vm3013, %v2962, 0
      %v3165 = vsel %vm3013, %v2963, 0
      %v3168 = vsel %vm3013, %v2964, 0
      %v3171 = vsel %vm3013, %v2965, 0
      %v3174 = vsel %vm3013, %v2966, 0
      %v3177 = vsel %vm3013, %v2967, 0
      %v3180 = vsel %vm3013, %v2968, 0
      %v3183 = vsel %vm3013, %v2969, 0
      %v3186 = vsel %vm3013, %v2970, 0
      %v3189 = vsel %vm3013, %v2971, 0
      %v3192 = vsel %vm3013, %v2972, 0
      %v3195 = vsel %vm3013, %v2973, 0
      %v3198 = vsel %vm3013, %v2974, 0
      %v3201 = vsel %vm3013, %v2975, 0
      %v3204 = vsel %vm3013, %v2976, 0
      %v3207 = vsel %vm3013, %v2977, 0
      %v3210 = vsel %vm3013, %v2978, 0
      %v3213 = vsel %vm3013, %v2979, 0
      %v3216 = vsel %vm3013, %v2980, 0
      %v3219 = vsel %vm3013, %v2981, 0
      %v3222 = vsel %vm3013, %v2982, 0
      %v3225 = vsel %vm3013, %v2983, 0
      %v3228 = vsel %vm3013, %v2984, 0
      %v3231 = vsel %vm3013, %v2985, 0
      %v3234 = vsel %vm3013, %v2986, 0
      %v3237 = vsel %vm3013, %v2987, 0
      %v3240 = vsel %vm3013, %v2988, 0
      %v3243 = vsel %vm3013, %v2989, 0
      %v3246 = vsel %vm3013, %v2990, 0
      %v3249 = vsel %vm3013, %v2991, 0
      %v3252 = vsel %vm3013, %v2992, 0
      %v3255 = vsel %vm3013, %v2993, 0
      %v3258 = vsel %vm3013, %v2994, 0
      %v3261 = vsel %vm3013, %v2995, 0
      %v3264 = vsel %vm3013, %v2996, 0
      %v3267 = vsel %vm3013, %v2997, 0
      %v3270 = vsel %vm3013, %v2998, 0
      %v3273 = vsel %vm3013, %v2999, 0
      %v3276 = vsel %vm3013, %v3000, 0
      %v3279 = vsel %vm3013, %v3001, 0
      %v3282 = vsel %vm3013, %v3002, 0
      %v3285 = vsel %vm3013, %v3003, 0
      %v3288 = vsel %vm3013, %v3004, 0
      %v3291 = vsel %vm3013, %v3005, 0
      %v3294 = vsel %vm3013, %v3006, 0
      %v3297 = vsel %vm3013, %v3007, 0
      %v3300 = vsel %vm3013, %v3008, 0
      %3302 = vmatprep.subr.mxu0 0.0
      %3303 = vmatpush1.msra.mxu0 0.0
      %3304 = vmatprep.subr.mxu0 0.0
      %3305 = vmatpush1.msra.mxu0 0.0
      %3306 = vmatprep.subr.mxu0 0.0
      %3307 = vmatpush1.msra.mxu0 0.0
      %3308 = vmatprep.subr.mxu0 0.0
      %3309 = vmatpush1.msra.mxu0 0.0
      %3310 = vmatprep.subr.mxu0 0.0
      %3311 = vmatpush1.msra.mxu0 0.0
      %3312 = vmatprep.subr.mxu0 0.0
      %3313 = vmatpush1.msra.mxu0 0.0
      %3314 = vmatprep.subr.mxu0 0.0
      %3315 = vmatpush1.msra.mxu0 0.0
      %3316 = vmatprep.subr.mxu0 0.0
      %3317 = vmatpush1.msra.mxu0 0.0
      %3318 = vmatprep.subr.mxu0 0.0
      %3319 = vmatpush1.msra.mxu0 0.0
      %3320 = vmatprep.subr.mxu0 0.0
      %3321 = vmatpush1.msra.mxu0 0.0
      %3322 = vmatprep.subr.mxu0 0.0
      %3323 = vmatpush1.msra.mxu0 0.0
      %3324 = vmatprep.subr.mxu0 0.0
      %3325 = vmatpush1.msra.mxu0 0.0
      %3326 = vmatprep.subr.mxu0 0.0
      %3327 = vmatpush1.msra.mxu0 %v3012
      %3328 = vmatprep.subr.mxu0 0.0
      %3329 = vmatpush1.msra.mxu0 %v3011
      %3330 = vmatprep.subr.mxu0 0.0
      %3331 = vmatpush1.msra.mxu0 %v3010
      %3332 = vmatprep.subr.mxu0 0.0
      %3333 = vmatpush1.msra.mxu0 %v3009
      %3334 = vmatprep.subr.mxu0 0.0
      %3335 = vmatpush2.msra.mxu0 0.0
      %3336 = vmatprep.subr.mxu0 0.0
      %3337 = vmatpush2.msra.mxu0 0.0
      %3338 = vmatprep.subr.mxu0 0.0
      %3339 = vmatpush2.msra.mxu0 0.0
      %3340 = vmatprep.subr.mxu0 0.0
      %3341 = vmatpush2.msra.mxu0 0.0
      %3342 = vmatprep.subr.mxu0 0.0
      %3343 = vmatpush2.msra.mxu0 0.0
      %3344 = vmatprep.subr.mxu0 0.0
      %3345 = vmatpush2.msra.mxu0 0.0
      %3346 = vmatprep.subr.mxu0 0.0
      %3347 = vmatpush2.msra.mxu0 0.0
      %3348 = vmatprep.subr.mxu0 0.0
      %3349 = vmatpush2.msra.mxu0 0.0
      %3350 = vmatprep.subr.mxu0 0.0
      %3351 = vmatpush2.msra.mxu0 0.0
      %3352 = vmatprep.subr.mxu0 0.0
      %3353 = vmatpush2.msra.mxu0 0.0
      %3354 = vmatprep.subr.mxu0 0.0
      %3355 = vmatpush2.msra.mxu0 0.0
      %3356 = vmatprep.subr.mxu0 0.0
      %3357 = vmatpush2.msra.mxu0 0.0
      %3358 = vmatprep.subr.mxu0 0.0
      %3359 = vmatpush2.msra.mxu0 0.0
      %3360 = vmatprep.subr.mxu0 0.0
      %3361 = vmatpush2.msra.mxu0 0.0
      %3362 = vmatprep.subr.mxu0 0.0
      %3363 = vmatpush2.msra.mxu0 0.0
      %3364 = vmatprep.subr.mxu0 0.0
      %3365 = vmatpush2.msra.mxu0 0.0
      %3366 = vmatprep.mubr.f32.mxu0 0.0
      %3367 = vmatmul.mubr.f32.gmra.mxu0 %v3015
      %v3368 = vpop.f32.mrf.mxu0
      %v3369 = vadd.f32 0.0, %v3368
      %v3370 = vpop.f32.mrf.mxu0
      %3371 = vmatprep.mubr.f32.mxu0 0.0
      %3372 = vmatmul.mubr.f32.gmra.mxu0 %v3018
      %v3373 = vpop.f32.mrf.mxu0
      %v3374 = vadd.f32 0.0, %v3373
      %v3375 = vpop.f32.mrf.mxu0
      %3376 = vmatprep.mubr.f32.mxu0 0.0
      %3377 = vmatmul.mubr.f32.gmra.mxu0 %v3021
      %v3378 = vpop.f32.mrf.mxu0
      %v3379 = vadd.f32 0.0, %v3378
      %v3380 = vpop.f32.mrf.mxu0
      %3381 = vmatprep.mubr.f32.mxu0 0.0
      %3382 = vmatmul.mubr.f32.gmra.mxu0 %v3024
      %v3383 = vpop.f32.mrf.mxu0
      %v3384 = vadd.f32 0.0, %v3383
      %v3385 = vpop.f32.mrf.mxu0
      %3386 = vmatprep.mubr.f32.mxu0 0.0
      %3387 = vmatmul.mubr.f32.gmra.mxu0 %v3027
      %v3388 = vpop.f32.mrf.mxu0
      %v3389 = vadd.f32 0.0, %v3388
      %v3390 = vpop.f32.mrf.mxu0
      %3391 = vmatprep.mubr.f32.mxu0 0.0
      %3392 = vmatmul.mubr.f32.gmra.mxu0 %v3030
      %v3393 = vpop.f32.mrf.mxu0
      %v3394 = vadd.f32 0.0, %v3393
      %v3395 = vpop.f32.mrf.mxu0
      %3396 = vmatprep.mubr.f32.mxu0 0.0
      %3397 = vmatmul.mubr.f32.gmra.mxu0 %v3033
      %v3398 = vpop.f32.mrf.mxu0
      %v3399 = vadd.f32 0.0, %v3398
      %v3400 = vpop.f32.mrf.mxu0
      %3401 = vmatprep.mubr.f32.mxu0 0.0
      %3402 = vmatmul.mubr.f32.gmra.mxu0 %v3036
      %v3403 = vpop.f32.mrf.mxu0
      %v3404 = vadd.f32 0.0, %v3403
      %v3405 = vpop.f32.mrf.mxu0
      %3406 = vmatprep.mubr.f32.mxu0 0.0
      %3407 = vmatmul.mubr.f32.gmra.mxu0 %v3039
      %v3408 = vpop.f32.mrf.mxu0
      %v3409 = vadd.f32 0.0, %v3408
      %v3410 = vpop.f32.mrf.mxu0
      %3411 = vmatprep.mubr.f32.mxu0 0.0
      %3412 = vmatmul.mubr.f32.gmra.mxu0 %v3042
      %v3413 = vpop.f32.mrf.mxu0
      %v3414 = vadd.f32 0.0, %v3413
      %v3415 = vpop.f32.mrf.mxu0
      %3416 = vmatprep.mubr.f32.mxu0 0.0
      %3417 = vmatmul.mubr.f32.gmra.mxu0 %v3045
      %v3418 = vpop.f32.mrf.mxu0
      %v3419 = vadd.f32 0.0, %v3418
      %v3420 = vpop.f32.mrf.mxu0
      %3421 = vmatprep.mubr.f32.mxu0 0.0
      %3422 = vmatmul.mubr.f32.gmra.mxu0 %v3048
      %v3423 = vpop.f32.mrf.mxu0
      %v3424 = vadd.f32 0.0, %v3423
      %v3425 = vpop.f32.mrf.mxu0
      %3426 = vmatprep.mubr.f32.mxu0 0.0
      %3427 = vmatmul.mubr.f32.gmra.mxu0 %v3051
      %v3428 = vpop.f32.mrf.mxu0
      %v3429 = vadd.f32 0.0, %v3428
      %v3430 = vpop.f32.mrf.mxu0
      %3431 = vmatprep.mubr.f32.mxu0 0.0
      %3432 = vmatmul.mubr.f32.gmra.mxu0 %v3054
      %v3433 = vpop.f32.mrf.mxu0
      %v3434 = vadd.f32 0.0, %v3433
      %v3435 = vpop.f32.mrf.mxu0
      %3436 = vmatprep.mubr.f32.mxu0 0.0
      %3437 = vmatmul.mubr.f32.gmra.mxu0 %v3057
      %v3438 = vpop.f32.mrf.mxu0
      %v3439 = vadd.f32 0.0, %v3438
      %v3440 = vpop.f32.mrf.mxu0
      %3441 = vmatprep.mubr.f32.mxu0 0.0
      %3442 = vmatmul.mubr.f32.gmra.mxu0 %v3060
      %v3443 = vpop.f32.mrf.mxu0
      %v3444 = vadd.f32 0.0, %v3443
      %v3445 = vpop.f32.mrf.mxu0
      %3446 = vmatprep.mubr.f32.mxu0 0.0
      %3447 = vmatmul.mubr.f32.gmra.mxu0 %v3063
      %v3448 = vpop.f32.mrf.mxu0
      %v3449 = vadd.f32 0.0, %v3448
      %v3450 = vpop.f32.mrf.mxu0
      %3451 = vmatprep.mubr.f32.mxu0 0.0
      %3452 = vmatmul.mubr.f32.gmra.mxu0 %v3066
      %v3453 = vpop.f32.mrf.mxu0
      %v3454 = vadd.f32 0.0, %v3453
      %v3455 = vpop.f32.mrf.mxu0
      %3456 = vmatprep.mubr.f32.mxu0 0.0
      %3457 = vmatmul.mubr.f32.gmra.mxu0 %v3069
      %v3458 = vpop.f32.mrf.mxu0
      %v3459 = vadd.f32 0.0, %v3458
      %v3460 = vpop.f32.mrf.mxu0
      %3461 = vmatprep.mubr.f32.mxu0 0.0
      %3462 = vmatmul.mubr.f32.gmra.mxu0 %v3072
      %v3463 = vpop.f32.mrf.mxu0
      %v3464 = vadd.f32 0.0, %v3463
      %v3465 = vpop.f32.mrf.mxu0
      %3466 = vmatprep.mubr.f32.mxu0 0.0
      %3467 = vmatmul.mubr.f32.gmra.mxu0 %v3075
      %v3468 = vpop.f32.mrf.mxu0
      %v3469 = vadd.f32 0.0, %v3468
      %v3470 = vpop.f32.mrf.mxu0
      %3471 = vmatprep.mubr.f32.mxu0 0.0
      %3472 = vmatmul.mubr.f32.gmra.mxu0 %v3078
      %v3473 = vpop.f32.mrf.mxu0
      %v3474 = vadd.f32 0.0, %v3473
      %v3475 = vpop.f32.mrf.mxu0
      %3476 = vmatprep.mubr.f32.mxu0 0.0
      %3477 = vmatmul.mubr.f32.gmra.mxu0 %v3081
      %v3478 = vpop.f32.mrf.mxu0
      %v3479 = vadd.f32 0.0, %v3478
      %v3480 = vpop.f32.mrf.mxu0
      %3481 = vmatprep.mubr.f32.mxu0 0.0
      %3482 = vmatmul.mubr.f32.gmra.mxu0 %v3084
      %v3483 = vpop.f32.mrf.mxu0
      %v3484 = vadd.f32 0.0, %v3483
      %v3485 = vpop.f32.mrf.mxu0
      %3486 = vmatprep.mubr.f32.mxu0 0.0
      %3487 = vmatmul.mubr.f32.gmra.mxu0 %v3087
      %v3488 = vpop.f32.mrf.mxu0
      %v3489 = vadd.f32 0.0, %v3488
      %v3490 = vpop.f32.mrf.mxu0
      %3491 = vmatprep.mubr.f32.mxu0 0.0
      %3492 = vmatmul.mubr.f32.gmra.mxu0 %v3090
      %v3493 = vpop.f32.mrf.mxu0
      %v3494 = vadd.f32 0.0, %v3493
      %v3495 = vpop.f32.mrf.mxu0
      %3496 = vmatprep.mubr.f32.mxu0 0.0
      %3497 = vmatmul.mubr.f32.gmra.mxu0 %v3093
      %v3498 = vpop.f32.mrf.mxu0
      %v3499 = vadd.f32 0.0, %v3498
      %v3500 = vpop.f32.mrf.mxu0
      %3501 = vmatprep.mubr.f32.mxu0 0.0
      %3502 = vmatmul.mubr.f32.gmra.mxu0 %v3096
      %v3503 = vpop.f32.mrf.mxu0
      %v3504 = vadd.f32 0.0, %v3503
      %v3505 = vpop.f32.mrf.mxu0
      %3506 = vmatprep.mubr.f32.mxu0 0.0
      %3507 = vmatmul.mubr.f32.gmra.mxu0 %v3099
      %v3508 = vpop.f32.mrf.mxu0
      %v3509 = vadd.f32 0.0, %v3508
      %v3510 = vpop.f32.mrf.mxu0
      %3511 = vmatprep.mubr.f32.mxu0 0.0
      %3512 = vmatmul.mubr.f32.gmra.mxu0 %v3102
      %v3513 = vpop.f32.mrf.mxu0
      %v3514 = vadd.f32 0.0, %v3513
      %v3515 = vpop.f32.mrf.mxu0
      %3516 = vmatprep.mubr.f32.mxu0 0.0
      %3517 = vmatmul.mubr.f32.gmra.mxu0 %v3105
      %v3518 = vpop.f32.mrf.mxu0
      %v3519 = vadd.f32 0.0, %v3518
      %v3520 = vpop.f32.mrf.mxu0
      %3521 = vmatprep.mubr.f32.mxu0 0.0
      %3522 = vmatmul.mubr.f32.gmra.mxu0 %v3108
      %v3523 = vpop.f32.mrf.mxu0
      %v3524 = vadd.f32 0.0, %v3523
      %v3525 = vpop.f32.mrf.mxu0
      %3526 = vmatprep.mubr.f32.mxu0 0.0
      %3527 = vmatmul.mubr.f32.gmra.mxu0 %v3111
      %v3528 = vpop.f32.mrf.mxu0
      %v3529 = vadd.f32 0.0, %v3528
      %v3530 = vpop.f32.mrf.mxu0
      %3531 = vmatprep.mubr.f32.mxu0 0.0
      %3532 = vmatmul.mubr.f32.gmra.mxu0 %v3114
      %v3533 = vpop.f32.mrf.mxu0
      %v3534 = vadd.f32 0.0, %v3533
      %v3535 = vpop.f32.mrf.mxu0
      %3536 = vmatprep.mubr.f32.mxu0 0.0
      %3537 = vmatmul.mubr.f32.gmra.mxu0 %v3117
      %v3538 = vpop.f32.mrf.mxu0
      %v3539 = vadd.f32 0.0, %v3538
      %v3540 = vpop.f32.mrf.mxu0
      %3541 = vmatprep.mubr.f32.mxu0 0.0
      %3542 = vmatmul.mubr.f32.gmra.mxu0 %v3120
      %v3543 = vpop.f32.mrf.mxu0
      %v3544 = vadd.f32 0.0, %v3543
      %v3545 = vpop.f32.mrf.mxu0
      %3546 = vmatprep.mubr.f32.mxu0 0.0
      %3547 = vmatmul.mubr.f32.gmra.mxu0 %v3123
      %v3548 = vpop.f32.mrf.mxu0
      %v3549 = vadd.f32 0.0, %v3548
      %v3550 = vpop.f32.mrf.mxu0
      %3551 = vmatprep.mubr.f32.mxu0 0.0
      %3552 = vmatmul.mubr.f32.gmra.mxu0 %v3126
      %v3553 = vpop.f32.mrf.mxu0
      %v3554 = vadd.f32 0.0, %v3553
      %v3555 = vpop.f32.mrf.mxu0
      %3556 = vmatprep.mubr.f32.mxu0 0.0
      %3557 = vmatmul.mubr.f32.gmra.mxu0 %v3129
      %v3558 = vpop.f32.mrf.mxu0
      %v3559 = vadd.f32 0.0, %v3558
      %v3560 = vpop.f32.mrf.mxu0
      %3561 = vmatprep.mubr.f32.mxu0 0.0
      %3562 = vmatmul.mubr.f32.gmra.mxu0 %v3132
      %v3563 = vpop.f32.mrf.mxu0
      %v3564 = vadd.f32 0.0, %v3563
      %v3565 = vpop.f32.mrf.mxu0
      %3566 = vmatprep.mubr.f32.mxu0 0.0
      %3567 = vmatmul.mubr.f32.gmra.mxu0 %v3135
      %v3568 = vpop.f32.mrf.mxu0
      %v3569 = vadd.f32 0.0, %v3568
      %v3570 = vpop.f32.mrf.mxu0
      %3571 = vmatprep.mubr.f32.mxu0 0.0
      %3572 = vmatmul.mubr.f32.gmra.mxu0 %v3138
      %v3573 = vpop.f32.mrf.mxu0
      %v3574 = vadd.f32 0.0, %v3573
      %v3575 = vpop.f32.mrf.mxu0
      %3576 = vmatprep.mubr.f32.mxu0 0.0
      %3577 = vmatmul.mubr.f32.gmra.mxu0 %v3141
      %v3578 = vpop.f32.mrf.mxu0
      %v3579 = vadd.f32 0.0, %v3578
      %v3580 = vpop.f32.mrf.mxu0
      %3581 = vmatprep.mubr.f32.mxu0 0.0
      %3582 = vmatmul.mubr.f32.gmra.mxu0 %v3144
      %v3583 = vpop.f32.mrf.mxu0
      %v3584 = vadd.f32 0.0, %v3583
      %v3585 = vpop.f32.mrf.mxu0
      %3586 = vmatprep.mubr.f32.mxu0 0.0
      %3587 = vmatmul.mubr.f32.gmra.mxu0 %v3147
      %v3588 = vpop.f32.mrf.mxu0
      %v3589 = vadd.f32 0.0, %v3588
      %v3590 = vpop.f32.mrf.mxu0
      %3591 = vmatprep.mubr.f32.mxu0 0.0
      %3592 = vmatmul.mubr.f32.gmra.mxu0 %v3150
      %v3593 = vpop.f32.mrf.mxu0
      %v3594 = vadd.f32 0.0, %v3593
      %v3595 = vpop.f32.mrf.mxu0
      %3596 = vmatprep.mubr.f32.mxu0 0.0
      %3597 = vmatmul.mubr.f32.gmra.mxu0 %v3153
      %v3598 = vpop.f32.mrf.mxu0
      %v3599 = vadd.f32 0.0, %v3598
      %v3600 = vpop.f32.mrf.mxu0
      %3601 = vmatprep.mubr.f32.mxu0 0.0
      %3602 = vmatmul.mubr.f32.gmra.mxu0 %v3156
      %v3603 = vpop.f32.mrf.mxu0
      %v3604 = vadd.f32 0.0, %v3603
      %v3605 = vpop.f32.mrf.mxu0
      %3606 = vmatprep.mubr.f32.mxu0 0.0
      %3607 = vmatmul.mubr.f32.gmra.mxu0 %v3159
      %v3608 = vpop.f32.mrf.mxu0
      %v3609 = vadd.f32 0.0, %v3608
      %v3610 = vpop.f32.mrf.mxu0
      %3611 = vmatprep.mubr.f32.mxu0 0.0
      %3612 = vmatmul.mubr.f32.gmra.mxu0 %v3162
      %v3613 = vpop.f32.mrf.mxu0
      %v3614 = vadd.f32 0.0, %v3613
      %v3615 = vpop.f32.mrf.mxu0
      %3616 = vmatprep.mubr.f32.mxu0 0.0
      %3617 = vmatmul.mubr.f32.gmra.mxu0 %v3165
      %v3618 = vpop.f32.mrf.mxu0
      %v3619 = vadd.f32 0.0, %v3618
      %v3620 = vpop.f32.mrf.mxu0
      %3621 = vmatprep.mubr.f32.mxu0 0.0
      %3622 = vmatmul.mubr.f32.gmra.mxu0 %v3168
      %v3623 = vpop.f32.mrf.mxu0
      %v3624 = vadd.f32 0.0, %v3623
      %v3625 = vpop.f32.mrf.mxu0
      %3626 = vmatprep.mubr.f32.mxu0 0.0
      %3627 = vmatmul.mubr.f32.gmra.mxu0 %v3171
      %v3628 = vpop.f32.mrf.mxu0
      %v3629 = vadd.f32 0.0, %v3628
      %v3630 = vpop.f32.mrf.mxu0
      %3631 = vmatprep.mubr.f32.mxu0 0.0
      %3632 = vmatmul.mubr.f32.gmra.mxu0 %v3174
      %v3633 = vpop.f32.mrf.mxu0
      %v3634 = vadd.f32 0.0, %v3633
      %v3635 = vpop.f32.mrf.mxu0
      %3636 = vmatprep.mubr.f32.mxu0 0.0
      %3637 = vmatmul.mubr.f32.gmra.mxu0 %v3177
      %v3638 = vpop.f32.mrf.mxu0
      %v3639 = vadd.f32 0.0, %v3638
      %v3640 = vpop.f32.mrf.mxu0
      %3641 = vmatprep.mubr.f32.mxu0 0.0
      %3642 = vmatmul.mubr.f32.gmra.mxu0 %v3180
      %v3643 = vpop.f32.mrf.mxu0
      %v3644 = vadd.f32 0.0, %v3643
      %v3645 = vpop.f32.mrf.mxu0
      %3646 = vmatprep.mubr.f32.mxu0 0.0
      %3647 = vmatmul.mubr.f32.gmra.mxu0 %v3183
      %v3648 = vpop.f32.mrf.mxu0
      %v3649 = vadd.f32 0.0, %v3648
      %v3650 = vpop.f32.mrf.mxu0
      %3651 = vmatprep.mubr.f32.mxu0 0.0
      %3652 = vmatmul.mubr.f32.gmra.mxu0 %v3186
      %v3653 = vpop.f32.mrf.mxu0
      %v3654 = vadd.f32 0.0, %v3653
      %v3655 = vpop.f32.mrf.mxu0
      %3656 = vmatprep.mubr.f32.mxu0 0.0
      %3657 = vmatmul.mubr.f32.gmra.mxu0 %v3189
      %v3658 = vpop.f32.mrf.mxu0
      %v3659 = vadd.f32 0.0, %v3658
      %v3660 = vpop.f32.mrf.mxu0
      %3661 = vmatprep.mubr.f32.mxu0 0.0
      %3662 = vmatmul.mubr.f32.gmra.mxu0 %v3192
      %v3663 = vpop.f32.mrf.mxu0
      %v3664 = vadd.f32 0.0, %v3663
      %v3665 = vpop.f32.mrf.mxu0
      %3666 = vmatprep.mubr.f32.mxu0 0.0
      %3667 = vmatmul.mubr.f32.gmra.mxu0 %v3195
      %v3668 = vpop.f32.mrf.mxu0
      %v3669 = vadd.f32 0.0, %v3668
      %v3670 = vpop.f32.mrf.mxu0
      %3671 = vmatprep.mubr.f32.mxu0 0.0
      %3672 = vmatmul.mubr.f32.gmra.mxu0 %v3198
      %v3673 = vpop.f32.mrf.mxu0
      %v3674 = vadd.f32 0.0, %v3673
      %v3675 = vpop.f32.mrf.mxu0
      %3676 = vmatprep.mubr.f32.mxu0 0.0
      %3677 = vmatmul.mubr.f32.gmra.mxu0 %v3201
      %v3678 = vpop.f32.mrf.mxu0
      %v3679 = vadd.f32 0.0, %v3678
      %v3680 = vpop.f32.mrf.mxu0
      %3681 = vmatprep.mubr.f32.mxu0 0.0
      %3682 = vmatmul.mubr.f32.gmra.mxu0 %v3204
      %v3683 = vpop.f32.mrf.mxu0
      %v3684 = vadd.f32 0.0, %v3683
      %v3685 = vpop.f32.mrf.mxu0
      %3686 = vmatprep.mubr.f32.mxu0 0.0
      %3687 = vmatmul.mubr.f32.gmra.mxu0 %v3207
      %v3688 = vpop.f32.mrf.mxu0
      %v3689 = vadd.f32 0.0, %v3688
      %v3690 = vpop.f32.mrf.mxu0
      %3691 = vmatprep.mubr.f32.mxu0 0.0
      %3692 = vmatmul.mubr.f32.gmra.mxu0 %v3210
      %v3693 = vpop.f32.mrf.mxu0
      %v3694 = vadd.f32 0.0, %v3693
      %v3695 = vpop.f32.mrf.mxu0
      %3696 = vmatprep.mubr.f32.mxu0 0.0
      %3697 = vmatmul.mubr.f32.gmra.mxu0 %v3213
      %v3698 = vpop.f32.mrf.mxu0
      %v3699 = vadd.f32 0.0, %v3698
      %v3700 = vpop.f32.mrf.mxu0
      %3701 = vmatprep.mubr.f32.mxu0 0.0
      %3702 = vmatmul.mubr.f32.gmra.mxu0 %v3216
      %v3703 = vpop.f32.mrf.mxu0
      %v3704 = vadd.f32 0.0, %v3703
      %v3705 = vpop.f32.mrf.mxu0
      %3706 = vmatprep.mubr.f32.mxu0 0.0
      %3707 = vmatmul.mubr.f32.gmra.mxu0 %v3219
      %v3708 = vpop.f32.mrf.mxu0
      %v3709 = vadd.f32 0.0, %v3708
      %v3710 = vpop.f32.mrf.mxu0
      %3711 = vmatprep.mubr.f32.mxu0 0.0
      %3712 = vmatmul.mubr.f32.gmra.mxu0 %v3222
      %v3713 = vpop.f32.mrf.mxu0
      %v3714 = vadd.f32 0.0, %v3713
      %v3715 = vpop.f32.mrf.mxu0
      %3716 = vmatprep.mubr.f32.mxu0 0.0
      %3717 = vmatmul.mubr.f32.gmra.mxu0 %v3225
      %v3718 = vpop.f32.mrf.mxu0
      %v3719 = vadd.f32 0.0, %v3718
      %v3720 = vpop.f32.mrf.mxu0
      %3721 = vmatprep.mubr.f32.mxu0 0.0
      %3722 = vmatmul.mubr.f32.gmra.mxu0 %v3228
      %v3723 = vpop.f32.mrf.mxu0
      %v3724 = vadd.f32 0.0, %v3723
      %v3725 = vpop.f32.mrf.mxu0
      %3726 = vmatprep.mubr.f32.mxu0 0.0
      %3727 = vmatmul.mubr.f32.gmra.mxu0 %v3231
      %v3728 = vpop.f32.mrf.mxu0
      %v3729 = vadd.f32 0.0, %v3728
      %v3730 = vpop.f32.mrf.mxu0
      %3731 = vmatprep.mubr.f32.mxu0 0.0
      %3732 = vmatmul.mubr.f32.gmra.mxu0 %v3234
      %v3733 = vpop.f32.mrf.mxu0
      %v3734 = vadd.f32 0.0, %v3733
      %v3735 = vpop.f32.mrf.mxu0
      %3736 = vmatprep.mubr.f32.mxu0 0.0
      %3737 = vmatmul.mubr.f32.gmra.mxu0 %v3237
      %v3738 = vpop.f32.mrf.mxu0
      %v3739 = vadd.f32 0.0, %v3738
      %v3740 = vpop.f32.mrf.mxu0
      %3741 = vmatprep.mubr.f32.mxu0 0.0
      %3742 = vmatmul.mubr.f32.gmra.mxu0 %v3240
      %v3743 = vpop.f32.mrf.mxu0
      %v3744 = vadd.f32 0.0, %v3743
      %v3745 = vpop.f32.mrf.mxu0
      %3746 = vmatprep.mubr.f32.mxu0 0.0
      %3747 = vmatmul.mubr.f32.gmra.mxu0 %v3243
      %v3748 = vpop.f32.mrf.mxu0
      %v3749 = vadd.f32 0.0, %v3748
      %v3750 = vpop.f32.mrf.mxu0
      %3751 = vmatprep.mubr.f32.mxu0 0.0
      %3752 = vmatmul.mubr.f32.gmra.mxu0 %v3246
      %v3753 = vpop.f32.mrf.mxu0
      %v3754 = vadd.f32 0.0, %v3753
      %v3755 = vpop.f32.mrf.mxu0
      %3756 = vmatprep.mubr.f32.mxu0 0.0
      %3757 = vmatmul.mubr.f32.gmra.mxu0 %v3249
      %v3758 = vpop.f32.mrf.mxu0
      %v3759 = vadd.f32 0.0, %v3758
      %v3760 = vpop.f32.mrf.mxu0
      %3761 = vmatprep.mubr.f32.mxu0 0.0
      %3762 = vmatmul.mubr.f32.gmra.mxu0 %v3252
      %v3763 = vpop.f32.mrf.mxu0
      %v3764 = vadd.f32 0.0, %v3763
      %v3765 = vpop.f32.mrf.mxu0
      %3766 = vmatprep.mubr.f32.mxu0 0.0
      %3767 = vmatmul.mubr.f32.gmra.mxu0 %v3255
      %v3768 = vpop.f32.mrf.mxu0
      %v3769 = vadd.f32 0.0, %v3768
      %v3770 = vpop.f32.mrf.mxu0
      %3771 = vmatprep.mubr.f32.mxu0 0.0
      %3772 = vmatmul.mubr.f32.gmra.mxu0 %v3258
      %v3773 = vpop.f32.mrf.mxu0
      %v3774 = vadd.f32 0.0, %v3773
      %v3775 = vpop.f32.mrf.mxu0
      %3776 = vmatprep.mubr.f32.mxu0 0.0
      %3777 = vmatmul.mubr.f32.gmra.mxu0 %v3261
      %v3778 = vpop.f32.mrf.mxu0
      %v3779 = vadd.f32 0.0, %v3778
      %v3780 = vpop.f32.mrf.mxu0
      %3781 = vmatprep.mubr.f32.mxu0 0.0
      %3782 = vmatmul.mubr.f32.gmra.mxu0 %v3264
      %v3783 = vpop.f32.mrf.mxu0
      %v3784 = vadd.f32 0.0, %v3783
      %v3785 = vpop.f32.mrf.mxu0
      %3786 = vmatprep.mubr.f32.mxu0 0.0
      %3787 = vmatmul.mubr.f32.gmra.mxu0 %v3267
      %v3788 = vpop.f32.mrf.mxu0
      %v3789 = vadd.f32 0.0, %v3788
      %v3790 = vpop.f32.mrf.mxu0
      %3791 = vmatprep.mubr.f32.mxu0 0.0
      %3792 = vmatmul.mubr.f32.gmra.mxu0 %v3270
      %v3793 = vpop.f32.mrf.mxu0
      %v3794 = vadd.f32 0.0, %v3793
      %v3795 = vpop.f32.mrf.mxu0
      %3796 = vmatprep.mubr.f32.mxu0 0.0
      %3797 = vmatmul.mubr.f32.gmra.mxu0 %v3273
      %v3798 = vpop.f32.mrf.mxu0
      %v3799 = vadd.f32 0.0, %v3798
      %v3800 = vpop.f32.mrf.mxu0
      %3801 = vmatprep.mubr.f32.mxu0 0.0
      %3802 = vmatmul.mubr.f32.gmra.mxu0 %v3276
      %v3803 = vpop.f32.mrf.mxu0
      %v3804 = vadd.f32 0.0, %v3803
      %v3805 = vpop.f32.mrf.mxu0
      %3806 = vmatprep.mubr.f32.mxu0 0.0
      %3807 = vmatmul.mubr.f32.gmra.mxu0 %v3279
      %v3808 = vpop.f32.mrf.mxu0
      %v3809 = vadd.f32 0.0, %v3808
      %v3810 = vpop.f32.mrf.mxu0
      %3811 = vmatprep.mubr.f32.mxu0 0.0
      %3812 = vmatmul.mubr.f32.gmra.mxu0 %v3282
      %v3813 = vpop.f32.mrf.mxu0
      %v3814 = vadd.f32 0.0, %v3813
      %v3815 = vpop.f32.mrf.mxu0
      %3816 = vmatprep.mubr.f32.mxu0 0.0
      %3817 = vmatmul.mubr.f32.gmra.mxu0 %v3285
      %v3818 = vpop.f32.mrf.mxu0
      %v3819 = vadd.f32 0.0, %v3818
      %v3820 = vpop.f32.mrf.mxu0
      %3821 = vmatprep.mubr.f32.mxu0 0.0
      %3822 = vmatmul.mubr.f32.gmra.mxu0 %v3288
      %v3823 = vpop.f32.mrf.mxu0
      %v3824 = vadd.f32 0.0, %v3823
      %v3825 = vpop.f32.mrf.mxu0
      %3826 = vmatprep.mubr.f32.mxu0 0.0
      %3827 = vmatmul.mubr.f32.gmra.mxu0 %v3291
      %v3828 = vpop.f32.mrf.mxu0
      %v3829 = vadd.f32 0.0, %v3828
      %v3830 = vpop.f32.mrf.mxu0
      %3831 = vmatprep.mubr.f32.mxu0 0.0
      %3832 = vmatmul.mubr.f32.gmra.mxu0 %v3294
      %v3833 = vpop.f32.mrf.mxu0
      %v3834 = vadd.f32 0.0, %v3833
      %v3835 = vpop.f32.mrf.mxu0
      %3836 = vmatprep.mubr.f32.mxu0 0.0
      %3837 = vmatmul.mubr.f32.gmra.mxu0 %v3297
      %v3838 = vpop.f32.mrf.mxu0
      %v3839 = vadd.f32 0.0, %v3838
      %v3840 = vpop.f32.mrf.mxu0
      %3841 = vmatprep.mubr.f32.mxu0 0.0
      %3842 = vmatmul.mubr.f32.gmra.mxu0 %v3300
      %v3843 = vpop.f32.mrf.mxu0
      %v3844 = vadd.f32 0.0, %v3843
      %v3845 = vpop.f32.mrf.mxu0
      %3846 = vdwg.mxu0
      %3847 = vmatprep.subr.mxu0 0.0
      %3848 = vmatpush1.msra.mxu0 0.0
      %3849 = vmatprep.subr.mxu0 0.0
      %3850 = vmatpush1.msra.mxu0 0.0
      %3851 = vmatprep.subr.mxu0 0.0
      %3852 = vmatpush1.msra.mxu0 0.0
      %3853 = vmatprep.subr.mxu0 0.0
      %3854 = vmatpush1.msra.mxu0 0.0
      %3855 = vmatprep.subr.mxu0 0.0
      %3856 = vmatpush1.msra.mxu0 0.0
      %3857 = vmatprep.subr.mxu0 0.0
      %3858 = vmatpush1.msra.mxu0 0.0
      %3859 = vmatprep.subr.mxu0 0.0
      %3860 = vmatpush1.msra.mxu0 0.0
      %3861 = vmatprep.subr.mxu0 0.0
      %3862 = vmatpush1.msra.mxu0 0.0
      %3863 = vmatprep.subr.mxu0 0.0
      %3864 = vmatpush1.msra.mxu0 %v3404
      %3865 = vmatprep.subr.mxu0 0.0
      %3866 = vmatpush1.msra.mxu0 %v3399
      %3867 = vmatprep.subr.mxu0 0.0
      %3868 = vmatpush1.msra.mxu0 %v3394
      %3869 = vmatprep.subr.mxu0 0.0
      %3870 = vmatpush1.msra.mxu0 %v3389
      %3871 = vmatprep.subr.mxu0 0.0
      %3872 = vmatpush1.msra.mxu0 %v3384
      %3873 = vmatprep.subr.mxu0 0.0
      %3874 = vmatpush1.msra.mxu0 %v3379
      %3875 = vmatprep.subr.mxu0 0.0
      %3876 = vmatpush1.msra.mxu0 %v3374
      %3877 = vmatprep.subr.mxu0 0.0
      %3878 = vmatpush1.msra.mxu0 %v3369
      %3879 = vmatprep.subr.mxu0 0.0
      %3880 = vmatpush2.msra.mxu0 0.0
      %3881 = vmatprep.subr.mxu0 0.0
      %3882 = vmatpush2.msra.mxu0 0.0
      %3883 = vmatprep.subr.mxu0 0.0
      %3884 = vmatpush2.msra.mxu0 0.0
      %3885 = vmatprep.subr.mxu0 0.0
      %3886 = vmatpush2.msra.mxu0 0.0
      %3887 = vmatprep.subr.mxu0 0.0
      %3888 = vmatpush2.msra.mxu0 0.0
      %3889 = vmatprep.subr.mxu0 0.0
      %3890 = vmatpush2.msra.mxu0 0.0
      %3891 = vmatprep.subr.mxu0 0.0
      %3892 = vmatpush2.msra.mxu0 0.0
      %3893 = vmatprep.subr.mxu0 0.0
      %3894 = vmatpush2.msra.mxu0 0.0
      %3895 = vmatprep.subr.mxu0 0.0
      %3896 = vmatpush2.msra.mxu0 0.0
      %3897 = vmatprep.subr.mxu0 0.0
      %3898 = vmatpush2.msra.mxu0 0.0
      %3899 = vmatprep.subr.mxu0 0.0
      %3900 = vmatpush2.msra.mxu0 0.0
      %3901 = vmatprep.subr.mxu0 0.0
      %3902 = vmatpush2.msra.mxu0 0.0
      %3903 = vmatprep.subr.mxu0 0.0
      %3904 = vmatpush2.msra.mxu0 0.0
      %3905 = vmatprep.subr.mxu0 0.0
      %3906 = vmatpush2.msra.mxu0 0.0
      %3907 = vmatprep.subr.mxu0 0.0
      %3908 = vmatpush2.msra.mxu0 0.0
      %3909 = vmatprep.subr.mxu0 0.0
      %3910 = vmatpush2.msra.mxu0 0.0
      %3911 = vmatprep.mubr.f32.mxu0 0.0
      %3912 = vmatmul.mubr.f32.gmra.mxu0 %v1366
      %v3913 = vpop.f32.mrf.mxu0
      %v3914 = vadd.f32 0.0, %v3913
      %v3915 = vpop.f32.mrf.mxu0
      %3916 = vmatprep.mubr.f32.mxu0 0.0
      %3917 = vmatmul.mubr.f32.gmra.mxu0 %v1369
      %v3918 = vpop.f32.mrf.mxu0
      %v3919 = vadd.f32 0.0, %v3918
      %v3920 = vpop.f32.mrf.mxu0
      %3921 = vmatprep.mubr.f32.mxu0 0.0
      %3922 = vmatmul.mubr.f32.gmra.mxu0 %v1372
      %v3923 = vpop.f32.mrf.mxu0
      %v3924 = vadd.f32 0.0, %v3923
      %v3925 = vpop.f32.mrf.mxu0
      %3926 = vmatprep.mubr.f32.mxu0 0.0
      %3927 = vmatmul.mubr.f32.gmra.mxu0 %v1375
      %v3928 = vpop.f32.mrf.mxu0
      %v3929 = vadd.f32 0.0, %v3928
      %v3930 = vpop.f32.mrf.mxu0
      %3931 = vmatprep.mubr.f32.mxu0 0.0
      %3932 = vmatmul.mubr.f32.gmra.mxu0 %v1378
      %v3933 = vpop.f32.mrf.mxu0
      %v3934 = vadd.f32 0.0, %v3933
      %v3935 = vpop.f32.mrf.mxu0
      %3936 = vmatprep.mubr.f32.mxu0 0.0
      %3937 = vmatmul.mubr.f32.gmra.mxu0 %v1381
      %v3938 = vpop.f32.mrf.mxu0
      %v3939 = vadd.f32 0.0, %v3938
      %v3940 = vpop.f32.mrf.mxu0
      %3941 = vmatprep.mubr.f32.mxu0 0.0
      %3942 = vmatmul.mubr.f32.gmra.mxu0 %v1384
      %v3943 = vpop.f32.mrf.mxu0
      %v3944 = vadd.f32 0.0, %v3943
      %v3945 = vpop.f32.mrf.mxu0
      %3946 = vmatprep.mubr.f32.mxu0 0.0
      %3947 = vmatmul.mubr.f32.gmra.mxu0 %v1387
      %v3948 = vpop.f32.mrf.mxu0
      %v3949 = vadd.f32 0.0, %v3948
      %v3950 = vpop.f32.mrf.mxu0
      %3951 = vdwg.mxu0
      %3952 = vmatprep.subr.mxu0 0.0
      %3953 = vmatpush1.msra.mxu0 0.0
      %3954 = vmatprep.subr.mxu0 0.0
      %3955 = vmatpush1.msra.mxu0 0.0
      %3956 = vmatprep.subr.mxu0 0.0
      %3957 = vmatpush1.msra.mxu0 0.0
      %3958 = vmatprep.subr.mxu0 0.0
      %3959 = vmatpush1.msra.mxu0 0.0
      %3960 = vmatprep.subr.mxu0 0.0
      %3961 = vmatpush1.msra.mxu0 0.0
      %3962 = vmatprep.subr.mxu0 0.0
      %3963 = vmatpush1.msra.mxu0 0.0
      %3964 = vmatprep.subr.mxu0 0.0
      %3965 = vmatpush1.msra.mxu0 0.0
      %3966 = vmatprep.subr.mxu0 0.0
      %3967 = vmatpush1.msra.mxu0 0.0
      %3968 = vmatprep.subr.mxu0 0.0
      %3969 = vmatpush1.msra.mxu0 %v3444
      %3970 = vmatprep.subr.mxu0 0.0
      %3971 = vmatpush1.msra.mxu0 %v3439
      %3972 = vmatprep.subr.mxu0 0.0
      %3973 = vmatpush1.msra.mxu0 %v3434
      %3974 = vmatprep.subr.mxu0 0.0
      %3975 = vmatpush1.msra.mxu0 %v3429
      %3976 = vmatprep.subr.mxu0 0.0
      %3977 = vmatpush1.msra.mxu0 %v3424
      %3978 = vmatprep.subr.mxu0 0.0
      %3979 = vmatpush1.msra.mxu0 %v3419
      %3980 = vmatprep.subr.mxu0 0.0
      %3981 = vmatpush1.msra.mxu0 %v3414
      %3982 = vmatprep.subr.mxu0 0.0
      %3983 = vmatpush1.msra.mxu0 %v3409
      %3984 = vmatprep.subr.mxu0 0.0
      %3985 = vmatpush2.msra.mxu0 0.0
      %3986 = vmatprep.subr.mxu0 0.0
      %3987 = vmatpush2.msra.mxu0 0.0
      %3988 = vmatprep.subr.mxu0 0.0
      %3989 = vmatpush2.msra.mxu0 0.0
      %3990 = vmatprep.subr.mxu0 0.0
      %3991 = vmatpush2.msra.mxu0 0.0
      %3992 = vmatprep.subr.mxu0 0.0
      %3993 = vmatpush2.msra.mxu0 0.0
      %3994 = vmatprep.subr.mxu0 0.0
      %3995 = vmatpush2.msra.mxu0 0.0
      %3996 = vmatprep.subr.mxu0 0.0
      %3997 = vmatpush2.msra.mxu0 0.0
      %3998 = vmatprep.subr.mxu0 0.0
      %3999 = vmatpush2.msra.mxu0 0.0
      %4000 = vmatprep.subr.mxu0 0.0
      %4001 = vmatpush2.msra.mxu0 0.0
      %4002 = vmatprep.subr.mxu0 0.0
      %4003 = vmatpush2.msra.mxu0 0.0
      %4004 = vmatprep.subr.mxu0 0.0
      %4005 = vmatpush2.msra.mxu0 0.0
      %4006 = vmatprep.subr.mxu0 0.0
      %4007 = vmatpush2.msra.mxu0 0.0
      %4008 = vmatprep.subr.mxu0 0.0
      %4009 = vmatpush2.msra.mxu0 0.0
      %4010 = vmatprep.subr.mxu0 0.0
      %4011 = vmatpush2.msra.mxu0 0.0
      %4012 = vmatprep.subr.mxu0 0.0
      %4013 = vmatpush2.msra.mxu0 0.0
      %4014 = vmatprep.subr.mxu0 0.0
      %4015 = vmatpush2.msra.mxu0 0.0
      %4016 = vmatprep.mubr.f32.mxu0 0.0
      %4017 = vmatmul.mubr.f32.gmra.mxu0 %v1495
      %v4018 = vpop.f32.mrf.mxu0
      %v4019 = vadd.f32 0.0, %v4018
      %v4020 = vpop.f32.mrf.mxu0
      %4021 = vmatprep.mubr.f32.mxu0 0.0
      %4022 = vmatmul.mubr.f32.gmra.mxu0 %v1498
      %v4023 = vpop.f32.mrf.mxu0
      %v4024 = vadd.f32 0.0, %v4023
      %v4025 = vpop.f32.mrf.mxu0
      %4026 = vmatprep.mubr.f32.mxu0 0.0
      %4027 = vmatmul.mubr.f32.gmra.mxu0 %v1501
      %v4028 = vpop.f32.mrf.mxu0
      %v4029 = vadd.f32 0.0, %v4028
      %v4030 = vpop.f32.mrf.mxu0
      %4031 = vmatprep.mubr.f32.mxu0 0.0
      %4032 = vmatmul.mubr.f32.gmra.mxu0 %v1504
      %v4033 = vpop.f32.mrf.mxu0
      %v4034 = vadd.f32 0.0, %v4033
      %v4035 = vpop.f32.mrf.mxu0
      %4036 = vmatprep.mubr.f32.mxu0 0.0
      %4037 = vmatmul.mubr.f32.gmra.mxu0 %v1507
      %v4038 = vpop.f32.mrf.mxu0
      %v4039 = vadd.f32 0.0, %v4038
      %v4040 = vpop.f32.mrf.mxu0
      %4041 = vmatprep.mubr.f32.mxu0 0.0
      %4042 = vmatmul.mubr.f32.gmra.mxu0 %v1510
      %v4043 = vpop.f32.mrf.mxu0
      %v4044 = vadd.f32 0.0, %v4043
      %v4045 = vpop.f32.mrf.mxu0
      %4046 = vmatprep.mubr.f32.mxu0 0.0
      %4047 = vmatmul.mubr.f32.gmra.mxu0 %v1513
      %v4048 = vpop.f32.mrf.mxu0
      %v4049 = vadd.f32 0.0, %v4048
      %v4050 = vpop.f32.mrf.mxu0
      %4051 = vmatprep.mubr.f32.mxu0 0.0
      %4052 = vmatmul.mubr.f32.gmra.mxu0 %v1516
      %v4053 = vpop.f32.mrf.mxu0
      %v4054 = vadd.f32 0.0, %v4053
      %v4055 = vpop.f32.mrf.mxu0
      %4056 = vdwg.mxu0
      %4057 = vmatprep.subr.mxu0 0.0
      %4058 = vmatpush1.msra.mxu0 0.0
      %4059 = vmatprep.subr.mxu0 0.0
      %4060 = vmatpush1.msra.mxu0 0.0
      %4061 = vmatprep.subr.mxu0 0.0
      %4062 = vmatpush1.msra.mxu0 0.0
      %4063 = vmatprep.subr.mxu0 0.0
      %4064 = vmatpush1.msra.mxu0 0.0
      %4065 = vmatprep.subr.mxu0 0.0
      %4066 = vmatpush1.msra.mxu0 0.0
      %4067 = vmatprep.subr.mxu0 0.0
      %4068 = vmatpush1.msra.mxu0 0.0
      %4069 = vmatprep.subr.mxu0 0.0
      %4070 = vmatpush1.msra.mxu0 0.0
      %4071 = vmatprep.subr.mxu0 0.0
      %4072 = vmatpush1.msra.mxu0 0.0
      %4073 = vmatprep.subr.mxu0 0.0
      %4074 = vmatpush1.msra.mxu0 %v3484
      %4075 = vmatprep.subr.mxu0 0.0
      %4076 = vmatpush1.msra.mxu0 %v3479
      %4077 = vmatprep.subr.mxu0 0.0
      %4078 = vmatpush1.msra.mxu0 %v3474
      %4079 = vmatprep.subr.mxu0 0.0
      %4080 = vmatpush1.msra.mxu0 %v3469
      %4081 = vmatprep.subr.mxu0 0.0
      %4082 = vmatpush1.msra.mxu0 %v3464
      %4083 = vmatprep.subr.mxu0 0.0
      %4084 = vmatpush1.msra.mxu0 %v3459
      %4085 = vmatprep.subr.mxu0 0.0
      %4086 = vmatpush1.msra.mxu0 %v3454
      %4087 = vmatprep.subr.mxu0 0.0
      %4088 = vmatpush1.msra.mxu0 %v3449
      %4089 = vmatprep.subr.mxu0 0.0
      %4090 = vmatpush2.msra.mxu0 0.0
      %4091 = vmatprep.subr.mxu0 0.0
      %4092 = vmatpush2.msra.mxu0 0.0
      %4093 = vmatprep.subr.mxu0 0.0
      %4094 = vmatpush2.msra.mxu0 0.0
      %4095 = vmatprep.subr.mxu0 0.0
      %4096 = vmatpush2.msra.mxu0 0.0
      %4097 = vmatprep.subr.mxu0 0.0
      %4098 = vmatpush2.msra.mxu0 0.0
      %4099 = vmatprep.subr.mxu0 0.0
      %4100 = vmatpush2.msra.mxu0 0.0
      %4101 = vmatprep.subr.mxu0 0.0
      %4102 = vmatpush2.msra.mxu0 0.0
      %4103 = vmatprep.subr.mxu0 0.0
      %4104 = vmatpush2.msra.mxu0 0.0
      %4105 = vmatprep.subr.mxu0 0.0
      %4106 = vmatpush2.msra.mxu0 0.0
      %4107 = vmatprep.subr.mxu0 0.0
      %4108 = vmatpush2.msra.mxu0 0.0
      %4109 = vmatprep.subr.mxu0 0.0
      %4110 = vmatpush2.msra.mxu0 0.0
      %4111 = vmatprep.subr.mxu0 0.0
      %4112 = vmatpush2.msra.mxu0 0.0
      %4113 = vmatprep.subr.mxu0 0.0
      %4114 = vmatpush2.msra.mxu0 0.0
      %4115 = vmatprep.subr.mxu0 0.0
      %4116 = vmatpush2.msra.mxu0 0.0
      %4117 = vmatprep.subr.mxu0 0.0
      %4118 = vmatpush2.msra.mxu0 0.0
      %4119 = vmatprep.subr.mxu0 0.0
      %4120 = vmatpush2.msra.mxu0 0.0
      %4121 = vmatprep.mubr.f32.mxu0 0.0
      %4122 = vmatmul.mubr.f32.gmra.mxu0 %v1624
      %v4123 = vpop.f32.mrf.mxu0
      %v4124 = vadd.f32 0.0, %v4123
      %v4125 = vpop.f32.mrf.mxu0
      %4126 = vmatprep.mubr.f32.mxu0 0.0
      %4127 = vmatmul.mubr.f32.gmra.mxu0 %v1627
      %v4128 = vpop.f32.mrf.mxu0
      %v4129 = vadd.f32 0.0, %v4128
      %v4130 = vpop.f32.mrf.mxu0
      %4131 = vmatprep.mubr.f32.mxu0 0.0
      %4132 = vmatmul.mubr.f32.gmra.mxu0 %v1630
      %v4133 = vpop.f32.mrf.mxu0
      %v4134 = vadd.f32 0.0, %v4133
      %v4135 = vpop.f32.mrf.mxu0
      %4136 = vmatprep.mubr.f32.mxu0 0.0
      %4137 = vmatmul.mubr.f32.gmra.mxu0 %v1633
      %v4138 = vpop.f32.mrf.mxu0
      %v4139 = vadd.f32 0.0, %v4138
      %v4140 = vpop.f32.mrf.mxu0
      %4141 = vmatprep.mubr.f32.mxu0 0.0
      %4142 = vmatmul.mubr.f32.gmra.mxu0 %v1636
      %v4143 = vpop.f32.mrf.mxu0
      %v4144 = vadd.f32 0.0, %v4143
      %v4145 = vpop.f32.mrf.mxu0
      %4146 = vmatprep.mubr.f32.mxu0 0.0
      %4147 = vmatmul.mubr.f32.gmra.mxu0 %v1639
      %v4148 = vpop.f32.mrf.mxu0
      %v4149 = vadd.f32 0.0, %v4148
      %v4150 = vpop.f32.mrf.mxu0
      %4151 = vmatprep.mubr.f32.mxu0 0.0
      %4152 = vmatmul.mubr.f32.gmra.mxu0 %v1642
      %v4153 = vpop.f32.mrf.mxu0
      %v4154 = vadd.f32 0.0, %v4153
      %v4155 = vpop.f32.mrf.mxu0
      %4156 = vmatprep.mubr.f32.mxu0 0.0
      %4157 = vmatmul.mubr.f32.gmra.mxu0 %v1645
      %v4158 = vpop.f32.mrf.mxu0
      %v4159 = vadd.f32 0.0, %v4158
      %v4160 = vpop.f32.mrf.mxu0
      %4161 = vdwg.mxu0
      %4162 = vmatprep.subr.mxu0 0.0
      %4163 = vmatpush1.msra.mxu0 0.0
      %4164 = vmatprep.subr.mxu0 0.0
      %4165 = vmatpush1.msra.mxu0 0.0
      %4166 = vmatprep.subr.mxu0 0.0
      %4167 = vmatpush1.msra.mxu0 0.0
      %4168 = vmatprep.subr.mxu0 0.0
      %4169 = vmatpush1.msra.mxu0 0.0
      %4170 = vmatprep.subr.mxu0 0.0
      %4171 = vmatpush1.msra.mxu0 0.0
      %4172 = vmatprep.subr.mxu0 0.0
      %4173 = vmatpush1.msra.mxu0 0.0
      %4174 = vmatprep.subr.mxu0 0.0
      %4175 = vmatpush1.msra.mxu0 0.0
      %4176 = vmatprep.subr.mxu0 0.0
      %4177 = vmatpush1.msra.mxu0 0.0
      %4178 = vmatprep.subr.mxu0 0.0
      %4179 = vmatpush1.msra.mxu0 %v3524
      %4180 = vmatprep.subr.mxu0 0.0
      %4181 = vmatpush1.msra.mxu0 %v3519
      %4182 = vmatprep.subr.mxu0 0.0
      %4183 = vmatpush1.msra.mxu0 %v3514
      %4184 = vmatprep.subr.mxu0 0.0
      %4185 = vmatpush1.msra.mxu0 %v3509
      %4186 = vmatprep.subr.mxu0 0.0
      %4187 = vmatpush1.msra.mxu0 %v3504
      %4188 = vmatprep.subr.mxu0 0.0
      %4189 = vmatpush1.msra.mxu0 %v3499
      %4190 = vmatprep.subr.mxu0 0.0
      %4191 = vmatpush1.msra.mxu0 %v3494
      %4192 = vmatprep.subr.mxu0 0.0
      %4193 = vmatpush1.msra.mxu0 %v3489
      %4194 = vmatprep.subr.mxu0 0.0
      %4195 = vmatpush2.msra.mxu0 0.0
      %4196 = vmatprep.subr.mxu0 0.0
      %4197 = vmatpush2.msra.mxu0 0.0
      %4198 = vmatprep.subr.mxu0 0.0
      %4199 = vmatpush2.msra.mxu0 0.0
      %4200 = vmatprep.subr.mxu0 0.0
      %4201 = vmatpush2.msra.mxu0 0.0
      %4202 = vmatprep.subr.mxu0 0.0
      %4203 = vmatpush2.msra.mxu0 0.0
      %4204 = vmatprep.subr.mxu0 0.0
      %4205 = vmatpush2.msra.mxu0 0.0
      %4206 = vmatprep.subr.mxu0 0.0
      %4207 = vmatpush2.msra.mxu0 0.0
      %4208 = vmatprep.subr.mxu0 0.0
      %4209 = vmatpush2.msra.mxu0 0.0
      %4210 = vmatprep.subr.mxu0 0.0
      %4211 = vmatpush2.msra.mxu0 0.0
      %4212 = vmatprep.subr.mxu0 0.0
      %4213 = vmatpush2.msra.mxu0 0.0
      %4214 = vmatprep.subr.mxu0 0.0
      %4215 = vmatpush2.msra.mxu0 0.0
      %4216 = vmatprep.subr.mxu0 0.0
      %4217 = vmatpush2.msra.mxu0 0.0
      %4218 = vmatprep.subr.mxu0 0.0
      %4219 = vmatpush2.msra.mxu0 0.0
      %4220 = vmatprep.subr.mxu0 0.0
      %4221 = vmatpush2.msra.mxu0 0.0
      %4222 = vmatprep.subr.mxu0 0.0
      %4223 = vmatpush2.msra.mxu0 0.0
      %4224 = vmatprep.subr.mxu0 0.0
      %4225 = vmatpush2.msra.mxu0 0.0
      %4226 = vmatprep.mubr.f32.mxu0 0.0
      %4227 = vmatmul.mubr.f32.gmra.mxu0 %v1753
      %v4228 = vpop.f32.mrf.mxu0
      %v4229 = vadd.f32 0.0, %v4228
      %v4230 = vpop.f32.mrf.mxu0
      %4231 = vmatprep.mubr.f32.mxu0 0.0
      %4232 = vmatmul.mubr.f32.gmra.mxu0 %v1756
      %v4233 = vpop.f32.mrf.mxu0
      %v4234 = vadd.f32 0.0, %v4233
      %v4235 = vpop.f32.mrf.mxu0
      %4236 = vmatprep.mubr.f32.mxu0 0.0
      %4237 = vmatmul.mubr.f32.gmra.mxu0 %v1759
      %v4238 = vpop.f32.mrf.mxu0
      %v4239 = vadd.f32 0.0, %v4238
      %v4240 = vpop.f32.mrf.mxu0
      %4241 = vmatprep.mubr.f32.mxu0 0.0
      %4242 = vmatmul.mubr.f32.gmra.mxu0 %v1762
      %v4243 = vpop.f32.mrf.mxu0
      %v4244 = vadd.f32 0.0, %v4243
      %v4245 = vpop.f32.mrf.mxu0
      %4246 = vmatprep.mubr.f32.mxu0 0.0
      %4247 = vmatmul.mubr.f32.gmra.mxu0 %v1765
      %v4248 = vpop.f32.mrf.mxu0
      %v4249 = vadd.f32 0.0, %v4248
      %v4250 = vpop.f32.mrf.mxu0
      %4251 = vmatprep.mubr.f32.mxu0 0.0
      %4252 = vmatmul.mubr.f32.gmra.mxu0 %v1768
      %v4253 = vpop.f32.mrf.mxu0
      %v4254 = vadd.f32 0.0, %v4253
      %v4255 = vpop.f32.mrf.mxu0
      %4256 = vmatprep.mubr.f32.mxu0 0.0
      %4257 = vmatmul.mubr.f32.gmra.mxu0 %v1771
      %v4258 = vpop.f32.mrf.mxu0
      %v4259 = vadd.f32 0.0, %v4258
      %v4260 = vpop.f32.mrf.mxu0
      %4261 = vmatprep.mubr.f32.mxu0 0.0
      %4262 = vmatmul.mubr.f32.gmra.mxu0 %v1774
      %v4263 = vpop.f32.mrf.mxu0
      %v4264 = vadd.f32 0.0, %v4263
      %v4265 = vpop.f32.mrf.mxu0
      %4266 = vdwg.mxu0
      %4267 = vmatprep.subr.mxu0 0.0
      %4268 = vmatpush1.msra.mxu0 0.0
      %4269 = vmatprep.subr.mxu0 0.0
      %4270 = vmatpush1.msra.mxu0 0.0
      %4271 = vmatprep.subr.mxu0 0.0
      %4272 = vmatpush1.msra.mxu0 0.0
      %4273 = vmatprep.subr.mxu0 0.0
      %4274 = vmatpush1.msra.mxu0 0.0
      %4275 = vmatprep.subr.mxu0 0.0
      %4276 = vmatpush1.msra.mxu0 0.0
      %4277 = vmatprep.subr.mxu0 0.0
      %4278 = vmatpush1.msra.mxu0 0.0
      %4279 = vmatprep.subr.mxu0 0.0
      %4280 = vmatpush1.msra.mxu0 0.0
      %4281 = vmatprep.subr.mxu0 0.0
      %4282 = vmatpush1.msra.mxu0 0.0
      %4283 = vmatprep.subr.mxu0 0.0
      %4284 = vmatpush1.msra.mxu0 %v3564
      %4285 = vmatprep.subr.mxu0 0.0
      %4286 = vmatpush1.msra.mxu0 %v3559
      %4287 = vmatprep.subr.mxu0 0.0
      %4288 = vmatpush1.msra.mxu0 %v3554
      %4289 = vmatprep.subr.mxu0 0.0
      %4290 = vmatpush1.msra.mxu0 %v3549
      %4291 = vmatprep.subr.mxu0 0.0
      %4292 = vmatpush1.msra.mxu0 %v3544
      %4293 = vmatprep.subr.mxu0 0.0
      %4294 = vmatpush1.msra.mxu0 %v3539
      %4295 = vmatprep.subr.mxu0 0.0
      %4296 = vmatpush1.msra.mxu0 %v3534
      %4297 = vmatprep.subr.mxu0 0.0
      %4298 = vmatpush1.msra.mxu0 %v3529
      %4299 = vmatprep.subr.mxu0 0.0
      %4300 = vmatpush2.msra.mxu0 0.0
      %4301 = vmatprep.subr.mxu0 0.0
      %4302 = vmatpush2.msra.mxu0 0.0
      %4303 = vmatprep.subr.mxu0 0.0
      %4304 = vmatpush2.msra.mxu0 0.0
      %4305 = vmatprep.subr.mxu0 0.0
      %4306 = vmatpush2.msra.mxu0 0.0
      %4307 = vmatprep.subr.mxu0 0.0
      %4308 = vmatpush2.msra.mxu0 0.0
      %4309 = vmatprep.subr.mxu0 0.0
      %4310 = vmatpush2.msra.mxu0 0.0
      %4311 = vmatprep.subr.mxu0 0.0
      %4312 = vmatpush2.msra.mxu0 0.0
      %4313 = vmatprep.subr.mxu0 0.0
      %4314 = vmatpush2.msra.mxu0 0.0
      %4315 = vmatprep.subr.mxu0 0.0
      %4316 = vmatpush2.msra.mxu0 0.0
      %4317 = vmatprep.subr.mxu0 0.0
      %4318 = vmatpush2.msra.mxu0 0.0
      %4319 = vmatprep.subr.mxu0 0.0
      %4320 = vmatpush2.msra.mxu0 0.0
      %4321 = vmatprep.subr.mxu0 0.0
      %4322 = vmatpush2.msra.mxu0 0.0
      %4323 = vmatprep.subr.mxu0 0.0
      %4324 = vmatpush2.msra.mxu0 0.0
      %4325 = vmatprep.subr.mxu0 0.0
      %4326 = vmatpush2.msra.mxu0 0.0
      %4327 = vmatprep.subr.mxu0 0.0
      %4328 = vmatpush2.msra.mxu0 0.0
      %4329 = vmatprep.subr.mxu0 0.0
      %4330 = vmatpush2.msra.mxu0 0.0
      %4331 = vmatprep.mubr.f32.mxu0 0.0
      %4332 = vmatmul.mubr.f32.gmra.mxu0 %v1882
      %v4333 = vpop.f32.mrf.mxu0
      %v4334 = vadd.f32 0.0, %v4333
      %v4335 = vpop.f32.mrf.mxu0
      %4336 = vmatprep.mubr.f32.mxu0 0.0
      %4337 = vmatmul.mubr.f32.gmra.mxu0 %v1885
      %v4338 = vpop.f32.mrf.mxu0
      %v4339 = vadd.f32 0.0, %v4338
      %v4340 = vpop.f32.mrf.mxu0
      %4341 = vmatprep.mubr.f32.mxu0 0.0
      %4342 = vmatmul.mubr.f32.gmra.mxu0 %v1888
      %v4343 = vpop.f32.mrf.mxu0
      %v4344 = vadd.f32 0.0, %v4343
      %v4345 = vpop.f32.mrf.mxu0
      %4346 = vmatprep.mubr.f32.mxu0 0.0
      %4347 = vmatmul.mubr.f32.gmra.mxu0 %v1891
      %v4348 = vpop.f32.mrf.mxu0
      %v4349 = vadd.f32 0.0, %v4348
      %v4350 = vpop.f32.mrf.mxu0
      %4351 = vmatprep.mubr.f32.mxu0 0.0
      %4352 = vmatmul.mubr.f32.gmra.mxu0 %v1894
      %v4353 = vpop.f32.mrf.mxu0
      %v4354 = vadd.f32 0.0, %v4353
      %v4355 = vpop.f32.mrf.mxu0
      %4356 = vmatprep.mubr.f32.mxu0 0.0
      %4357 = vmatmul.mubr.f32.gmra.mxu0 %v1897
      %v4358 = vpop.f32.mrf.mxu0
      %v4359 = vadd.f32 0.0, %v4358
      %v4360 = vpop.f32.mrf.mxu0
      %4361 = vmatprep.mubr.f32.mxu0 0.0
      %4362 = vmatmul.mubr.f32.gmra.mxu0 %v1900
      %v4363 = vpop.f32.mrf.mxu0
      %v4364 = vadd.f32 0.0, %v4363
      %v4365 = vpop.f32.mrf.mxu0
      %4366 = vmatprep.mubr.f32.mxu0 0.0
      %4367 = vmatmul.mubr.f32.gmra.mxu0 %v1903
      %v4368 = vpop.f32.mrf.mxu0
      %v4369 = vadd.f32 0.0, %v4368
      %v4370 = vpop.f32.mrf.mxu0
      %4371 = vdwg.mxu0
      %4372 = vmatprep.subr.mxu0 0.0
      %4373 = vmatpush1.msra.mxu0 0.0
      %4374 = vmatprep.subr.mxu0 0.0
      %4375 = vmatpush1.msra.mxu0 0.0
      %4376 = vmatprep.subr.mxu0 0.0
      %4377 = vmatpush1.msra.mxu0 0.0
      %4378 = vmatprep.subr.mxu0 0.0
      %4379 = vmatpush1.msra.mxu0 0.0
      %4380 = vmatprep.subr.mxu0 0.0
      %4381 = vmatpush1.msra.mxu0 0.0
      %4382 = vmatprep.subr.mxu0 0.0
      %4383 = vmatpush1.msra.mxu0 0.0
      %4384 = vmatprep.subr.mxu0 0.0
      %4385 = vmatpush1.msra.mxu0 0.0
      %4386 = vmatprep.subr.mxu0 0.0
      %4387 = vmatpush1.msra.mxu0 0.0
      %4388 = vmatprep.subr.mxu0 0.0
      %4389 = vmatpush1.msra.mxu0 %v3604
      %4390 = vmatprep.subr.mxu0 0.0
      %4391 = vmatpush1.msra.mxu0 %v3599
      %4392 = vmatprep.subr.mxu0 0.0
      %4393 = vmatpush1.msra.mxu0 %v3594
      %4394 = vmatprep.subr.mxu0 0.0
      %4395 = vmatpush1.msra.mxu0 %v3589
      %4396 = vmatprep.subr.mxu0 0.0
      %4397 = vmatpush1.msra.mxu0 %v3584
      %4398 = vmatprep.subr.mxu0 0.0
      %4399 = vmatpush1.msra.mxu0 %v3579
      %4400 = vmatprep.subr.mxu0 0.0
      %4401 = vmatpush1.msra.mxu0 %v3574
      %4402 = vmatprep.subr.mxu0 0.0
      %4403 = vmatpush1.msra.mxu0 %v3569
      %4404 = vmatprep.subr.mxu0 0.0
      %4405 = vmatpush2.msra.mxu0 0.0
      %4406 = vmatprep.subr.mxu0 0.0
      %4407 = vmatpush2.msra.mxu0 0.0
      %4408 = vmatprep.subr.mxu0 0.0
      %4409 = vmatpush2.msra.mxu0 0.0
      %4410 = vmatprep.subr.mxu0 0.0
      %4411 = vmatpush2.msra.mxu0 0.0
      %4412 = vmatprep.subr.mxu0 0.0
      %4413 = vmatpush2.msra.mxu0 0.0
      %4414 = vmatprep.subr.mxu0 0.0
      %4415 = vmatpush2.msra.mxu0 0.0
      %4416 = vmatprep.subr.mxu0 0.0
      %4417 = vmatpush2.msra.mxu0 0.0
      %4418 = vmatprep.subr.mxu0 0.0
      %4419 = vmatpush2.msra.mxu0 0.0
      %4420 = vmatprep.subr.mxu0 0.0
      %4421 = vmatpush2.msra.mxu0 0.0
      %4422 = vmatprep.subr.mxu0 0.0
      %4423 = vmatpush2.msra.mxu0 0.0
      %4424 = vmatprep.subr.mxu0 0.0
      %4425 = vmatpush2.msra.mxu0 0.0
      %4426 = vmatprep.subr.mxu0 0.0
      %4427 = vmatpush2.msra.mxu0 0.0
      %4428 = vmatprep.subr.mxu0 0.0
      %4429 = vmatpush2.msra.mxu0 0.0
      %4430 = vmatprep.subr.mxu0 0.0
      %4431 = vmatpush2.msra.mxu0 0.0
      %4432 = vmatprep.subr.mxu0 0.0
      %4433 = vmatpush2.msra.mxu0 0.0
      %4434 = vmatprep.subr.mxu0 0.0
      %4435 = vmatpush2.msra.mxu0 0.0
      %4436 = vmatprep.mubr.f32.mxu0 0.0
      %4437 = vmatmul.mubr.f32.gmra.mxu0 %v2011
      %v4438 = vpop.f32.mrf.mxu0
      %v4439 = vadd.f32 0.0, %v4438
      %v4440 = vpop.f32.mrf.mxu0
      %4441 = vmatprep.mubr.f32.mxu0 0.0
      %4442 = vmatmul.mubr.f32.gmra.mxu0 %v2014
      %v4443 = vpop.f32.mrf.mxu0
      %v4444 = vadd.f32 0.0, %v4443
      %v4445 = vpop.f32.mrf.mxu0
      %4446 = vmatprep.mubr.f32.mxu0 0.0
      %4447 = vmatmul.mubr.f32.gmra.mxu0 %v2017
      %v4448 = vpop.f32.mrf.mxu0
      %v4449 = vadd.f32 0.0, %v4448
      %v4450 = vpop.f32.mrf.mxu0
      %4451 = vmatprep.mubr.f32.mxu0 0.0
      %4452 = vmatmul.mubr.f32.gmra.mxu0 %v2020
      %v4453 = vpop.f32.mrf.mxu0
      %v4454 = vadd.f32 0.0, %v4453
      %v4455 = vpop.f32.mrf.mxu0
      %4456 = vmatprep.mubr.f32.mxu0 0.0
      %4457 = vmatmul.mubr.f32.gmra.mxu0 %v2023
      %v4458 = vpop.f32.mrf.mxu0
      %v4459 = vadd.f32 0.0, %v4458
      %v4460 = vpop.f32.mrf.mxu0
      %4461 = vmatprep.mubr.f32.mxu0 0.0
      %4462 = vmatmul.mubr.f32.gmra.mxu0 %v2026
      %v4463 = vpop.f32.mrf.mxu0
      %v4464 = vadd.f32 0.0, %v4463
      %v4465 = vpop.f32.mrf.mxu0
      %4466 = vmatprep.mubr.f32.mxu0 0.0
      %4467 = vmatmul.mubr.f32.gmra.mxu0 %v2029
      %v4468 = vpop.f32.mrf.mxu0
      %v4469 = vadd.f32 0.0, %v4468
      %v4470 = vpop.f32.mrf.mxu0
      %4471 = vmatprep.mubr.f32.mxu0 0.0
      %4472 = vmatmul.mubr.f32.gmra.mxu0 %v2032
      %v4473 = vpop.f32.mrf.mxu0
      %v4474 = vadd.f32 0.0, %v4473
      %v4475 = vpop.f32.mrf.mxu0
      %4476 = vdwg.mxu0
      %4477 = vmatprep.subr.mxu0 0.0
      %4478 = vmatpush1.msra.mxu0 0.0
      %4479 = vmatprep.subr.mxu0 0.0
      %4480 = vmatpush1.msra.mxu0 0.0
      %4481 = vmatprep.subr.mxu0 0.0
      %4482 = vmatpush1.msra.mxu0 0.0
      %4483 = vmatprep.subr.mxu0 0.0
      %4484 = vmatpush1.msra.mxu0 0.0
      %4485 = vmatprep.subr.mxu0 0.0
      %4486 = vmatpush1.msra.mxu0 0.0
      %4487 = vmatprep.subr.mxu0 0.0
      %4488 = vmatpush1.msra.mxu0 0.0
      %4489 = vmatprep.subr.mxu0 0.0
      %4490 = vmatpush1.msra.mxu0 0.0
      %4491 = vmatprep.subr.mxu0 0.0
      %4492 = vmatpush1.msra.mxu0 0.0
      %4493 = vmatprep.subr.mxu0 0.0
      %4494 = vmatpush1.msra.mxu0 %v3644
      %4495 = vmatprep.subr.mxu0 0.0
      %4496 = vmatpush1.msra.mxu0 %v3639
      %4497 = vmatprep.subr.mxu0 0.0
      %4498 = vmatpush1.msra.mxu0 %v3634
      %4499 = vmatprep.subr.mxu0 0.0
      %4500 = vmatpush1.msra.mxu0 %v3629
      %4501 = vmatprep.subr.mxu0 0.0
      %4502 = vmatpush1.msra.mxu0 %v3624
      %4503 = vmatprep.subr.mxu0 0.0
      %4504 = vmatpush1.msra.mxu0 %v3619
      %4505 = vmatprep.subr.mxu0 0.0
      %4506 = vmatpush1.msra.mxu0 %v3614
      %4507 = vmatprep.subr.mxu0 0.0
      %4508 = vmatpush1.msra.mxu0 %v3609
      %4509 = vmatprep.subr.mxu0 0.0
      %4510 = vmatpush2.msra.mxu0 0.0
      %4511 = vmatprep.subr.mxu0 0.0
      %4512 = vmatpush2.msra.mxu0 0.0
      %4513 = vmatprep.subr.mxu0 0.0
      %4514 = vmatpush2.msra.mxu0 0.0
      %4515 = vmatprep.subr.mxu0 0.0
      %4516 = vmatpush2.msra.mxu0 0.0
      %4517 = vmatprep.subr.mxu0 0.0
      %4518 = vmatpush2.msra.mxu0 0.0
      %4519 = vmatprep.subr.mxu0 0.0
      %4520 = vmatpush2.msra.mxu0 0.0
      %4521 = vmatprep.subr.mxu0 0.0
      %4522 = vmatpush2.msra.mxu0 0.0
      %4523 = vmatprep.subr.mxu0 0.0
      %4524 = vmatpush2.msra.mxu0 0.0
      %4525 = vmatprep.subr.mxu0 0.0
      %4526 = vmatpush2.msra.mxu0 0.0
      %4527 = vmatprep.subr.mxu0 0.0
      %4528 = vmatpush2.msra.mxu0 0.0
      %4529 = vmatprep.subr.mxu0 0.0
      %4530 = vmatpush2.msra.mxu0 0.0
      %4531 = vmatprep.subr.mxu0 0.0
      %4532 = vmatpush2.msra.mxu0 0.0
      %4533 = vmatprep.subr.mxu0 0.0
      %4534 = vmatpush2.msra.mxu0 0.0
      %4535 = vmatprep.subr.mxu0 0.0
      %4536 = vmatpush2.msra.mxu0 0.0
      %4537 = vmatprep.subr.mxu0 0.0
      %4538 = vmatpush2.msra.mxu0 0.0
      %4539 = vmatprep.subr.mxu0 0.0
      %4540 = vmatpush2.msra.mxu0 0.0
      %4541 = vmatprep.mubr.f32.mxu0 0.0
      %4542 = vmatmul.mubr.f32.gmra.mxu0 %v2140
      %v4543 = vpop.f32.mrf.mxu0
      %v4544 = vadd.f32 0.0, %v4543
      %v4545 = vpop.f32.mrf.mxu0
      %4546 = vmatprep.mubr.f32.mxu0 0.0
      %4547 = vmatmul.mubr.f32.gmra.mxu0 %v2143
      %v4548 = vpop.f32.mrf.mxu0
      %v4549 = vadd.f32 0.0, %v4548
      %v4550 = vpop.f32.mrf.mxu0
      %4551 = vmatprep.mubr.f32.mxu0 0.0
      %4552 = vmatmul.mubr.f32.gmra.mxu0 %v2146
      %v4553 = vpop.f32.mrf.mxu0
      %v4554 = vadd.f32 0.0, %v4553
      %v4555 = vpop.f32.mrf.mxu0
      %4556 = vmatprep.mubr.f32.mxu0 0.0
      %4557 = vmatmul.mubr.f32.gmra.mxu0 %v2149
      %v4558 = vpop.f32.mrf.mxu0
      %v4559 = vadd.f32 0.0, %v4558
      %v4560 = vpop.f32.mrf.mxu0
      %4561 = vmatprep.mubr.f32.mxu0 0.0
      %4562 = vmatmul.mubr.f32.gmra.mxu0 %v2152
      %v4563 = vpop.f32.mrf.mxu0
      %v4564 = vadd.f32 0.0, %v4563
      %v4565 = vpop.f32.mrf.mxu0
      %4566 = vmatprep.mubr.f32.mxu0 0.0
      %4567 = vmatmul.mubr.f32.gmra.mxu0 %v2155
      %v4568 = vpop.f32.mrf.mxu0
      %v4569 = vadd.f32 0.0, %v4568
      %v4570 = vpop.f32.mrf.mxu0
      %4571 = vmatprep.mubr.f32.mxu0 0.0
      %4572 = vmatmul.mubr.f32.gmra.mxu0 %v2158
      %v4573 = vpop.f32.mrf.mxu0
      %v4574 = vadd.f32 0.0, %v4573
      %v4575 = vpop.f32.mrf.mxu0
      %4576 = vmatprep.mubr.f32.mxu0 0.0
      %4577 = vmatmul.mubr.f32.gmra.mxu0 %v2161
      %v4578 = vpop.f32.mrf.mxu0
      %v4579 = vadd.f32 0.0, %v4578
      %v4580 = vpop.f32.mrf.mxu0
      %4581 = vdwg.mxu0
      %4582 = vmatprep.subr.mxu0 0.0
      %4583 = vmatpush1.msra.mxu0 0.0
      %4584 = vmatprep.subr.mxu0 0.0
      %4585 = vmatpush1.msra.mxu0 0.0
      %4586 = vmatprep.subr.mxu0 0.0
      %4587 = vmatpush1.msra.mxu0 0.0
      %4588 = vmatprep.subr.mxu0 0.0
      %4589 = vmatpush1.msra.mxu0 0.0
      %4590 = vmatprep.subr.mxu0 0.0
      %4591 = vmatpush1.msra.mxu0 0.0
      %4592 = vmatprep.subr.mxu0 0.0
      %4593 = vmatpush1.msra.mxu0 0.0
      %4594 = vmatprep.subr.mxu0 0.0
      %4595 = vmatpush1.msra.mxu0 0.0
      %4596 = vmatprep.subr.mxu0 0.0
      %4597 = vmatpush1.msra.mxu0 0.0
      %4598 = vmatprep.subr.mxu0 0.0
      %4599 = vmatpush1.msra.mxu0 %v3684
      %4600 = vmatprep.subr.mxu0 0.0
      %4601 = vmatpush1.msra.mxu0 %v3679
      %4602 = vmatprep.subr.mxu0 0.0
      %4603 = vmatpush1.msra.mxu0 %v3674
      %4604 = vmatprep.subr.mxu0 0.0
      %4605 = vmatpush1.msra.mxu0 %v3669
      %4606 = vmatprep.subr.mxu0 0.0
      %4607 = vmatpush1.msra.mxu0 %v3664
      %4608 = vmatprep.subr.mxu0 0.0
      %4609 = vmatpush1.msra.mxu0 %v3659
      %4610 = vmatprep.subr.mxu0 0.0
      %4611 = vmatpush1.msra.mxu0 %v3654
      %4612 = vmatprep.subr.mxu0 0.0
      %4613 = vmatpush1.msra.mxu0 %v3649
      %4614 = vmatprep.subr.mxu0 0.0
      %4615 = vmatpush2.msra.mxu0 0.0
      %4616 = vmatprep.subr.mxu0 0.0
      %4617 = vmatpush2.msra.mxu0 0.0
      %4618 = vmatprep.subr.mxu0 0.0
      %4619 = vmatpush2.msra.mxu0 0.0
      %4620 = vmatprep.subr.mxu0 0.0
      %4621 = vmatpush2.msra.mxu0 0.0
      %4622 = vmatprep.subr.mxu0 0.0
      %4623 = vmatpush2.msra.mxu0 0.0
      %4624 = vmatprep.subr.mxu0 0.0
      %4625 = vmatpush2.msra.mxu0 0.0
      %4626 = vmatprep.subr.mxu0 0.0
      %4627 = vmatpush2.msra.mxu0 0.0
      %4628 = vmatprep.subr.mxu0 0.0
      %4629 = vmatpush2.msra.mxu0 0.0
      %4630 = vmatprep.subr.mxu0 0.0
      %4631 = vmatpush2.msra.mxu0 0.0
      %4632 = vmatprep.subr.mxu0 0.0
      %4633 = vmatpush2.msra.mxu0 0.0
      %4634 = vmatprep.subr.mxu0 0.0
      %4635 = vmatpush2.msra.mxu0 0.0
      %4636 = vmatprep.subr.mxu0 0.0
      %4637 = vmatpush2.msra.mxu0 0.0
      %4638 = vmatprep.subr.mxu0 0.0
      %4639 = vmatpush2.msra.mxu0 0.0
      %4640 = vmatprep.subr.mxu0 0.0
      %4641 = vmatpush2.msra.mxu0 0.0
      %4642 = vmatprep.subr.mxu0 0.0
      %4643 = vmatpush2.msra.mxu0 0.0
      %4644 = vmatprep.subr.mxu0 0.0
      %4645 = vmatpush2.msra.mxu0 0.0
      %4646 = vmatprep.mubr.f32.mxu0 0.0
      %4647 = vmatmul.mubr.f32.gmra.mxu0 %v2269
      %v4648 = vpop.f32.mrf.mxu0
      %v4649 = vadd.f32 0.0, %v4648
      %v4650 = vpop.f32.mrf.mxu0
      %4651 = vmatprep.mubr.f32.mxu0 0.0
      %4652 = vmatmul.mubr.f32.gmra.mxu0 %v2272
      %v4653 = vpop.f32.mrf.mxu0
      %v4654 = vadd.f32 0.0, %v4653
      %v4655 = vpop.f32.mrf.mxu0
      %4656 = vmatprep.mubr.f32.mxu0 0.0
      %4657 = vmatmul.mubr.f32.gmra.mxu0 %v2275
      %v4658 = vpop.f32.mrf.mxu0
      %v4659 = vadd.f32 0.0, %v4658
      %v4660 = vpop.f32.mrf.mxu0
      %4661 = vmatprep.mubr.f32.mxu0 0.0
      %4662 = vmatmul.mubr.f32.gmra.mxu0 %v2278
      %v4663 = vpop.f32.mrf.mxu0
      %v4664 = vadd.f32 0.0, %v4663
      %v4665 = vpop.f32.mrf.mxu0
      %4666 = vmatprep.mubr.f32.mxu0 0.0
      %4667 = vmatmul.mubr.f32.gmra.mxu0 %v2281
      %v4668 = vpop.f32.mrf.mxu0
      %v4669 = vadd.f32 0.0, %v4668
      %v4670 = vpop.f32.mrf.mxu0
      %4671 = vmatprep.mubr.f32.mxu0 0.0
      %4672 = vmatmul.mubr.f32.gmra.mxu0 %v2284
      %v4673 = vpop.f32.mrf.mxu0
      %v4674 = vadd.f32 0.0, %v4673
      %v4675 = vpop.f32.mrf.mxu0
      %4676 = vmatprep.mubr.f32.mxu0 0.0
      %4677 = vmatmul.mubr.f32.gmra.mxu0 %v2287
      %v4678 = vpop.f32.mrf.mxu0
      %v4679 = vadd.f32 0.0, %v4678
      %v4680 = vpop.f32.mrf.mxu0
      %4681 = vmatprep.mubr.f32.mxu0 0.0
      %4682 = vmatmul.mubr.f32.gmra.mxu0 %v2290
      %v4683 = vpop.f32.mrf.mxu0
      %v4684 = vadd.f32 0.0, %v4683
      %v4685 = vpop.f32.mrf.mxu0
      %4686 = vdwg.mxu0
      %4687 = vmatprep.subr.mxu0 0.0
      %4688 = vmatpush1.msra.mxu0 0.0
      %4689 = vmatprep.subr.mxu0 0.0
      %4690 = vmatpush1.msra.mxu0 0.0
      %4691 = vmatprep.subr.mxu0 0.0
      %4692 = vmatpush1.msra.mxu0 0.0
      %4693 = vmatprep.subr.mxu0 0.0
      %4694 = vmatpush1.msra.mxu0 0.0
      %4695 = vmatprep.subr.mxu0 0.0
      %4696 = vmatpush1.msra.mxu0 0.0
      %4697 = vmatprep.subr.mxu0 0.0
      %4698 = vmatpush1.msra.mxu0 0.0
      %4699 = vmatprep.subr.mxu0 0.0
      %4700 = vmatpush1.msra.mxu0 0.0
      %4701 = vmatprep.subr.mxu0 0.0
      %4702 = vmatpush1.msra.mxu0 0.0
      %4703 = vmatprep.subr.mxu0 0.0
      %4704 = vmatpush1.msra.mxu0 %v3724
      %4705 = vmatprep.subr.mxu0 0.0
      %4706 = vmatpush1.msra.mxu0 %v3719
      %4707 = vmatprep.subr.mxu0 0.0
      %4708 = vmatpush1.msra.mxu0 %v3714
      %4709 = vmatprep.subr.mxu0 0.0
      %4710 = vmatpush1.msra.mxu0 %v3709
      %4711 = vmatprep.subr.mxu0 0.0
      %4712 = vmatpush1.msra.mxu0 %v3704
      %4713 = vmatprep.subr.mxu0 0.0
      %4714 = vmatpush1.msra.mxu0 %v3699
      %4715 = vmatprep.subr.mxu0 0.0
      %4716 = vmatpush1.msra.mxu0 %v3694
      %4717 = vmatprep.subr.mxu0 0.0
      %4718 = vmatpush1.msra.mxu0 %v3689
      %4719 = vmatprep.subr.mxu0 0.0
      %4720 = vmatpush2.msra.mxu0 0.0
      %4721 = vmatprep.subr.mxu0 0.0
      %4722 = vmatpush2.msra.mxu0 0.0
      %4723 = vmatprep.subr.mxu0 0.0
      %4724 = vmatpush2.msra.mxu0 0.0
      %4725 = vmatprep.subr.mxu0 0.0
      %4726 = vmatpush2.msra.mxu0 0.0
      %4727 = vmatprep.subr.mxu0 0.0
      %4728 = vmatpush2.msra.mxu0 0.0
      %4729 = vmatprep.subr.mxu0 0.0
      %4730 = vmatpush2.msra.mxu0 0.0
      %4731 = vmatprep.subr.mxu0 0.0
      %4732 = vmatpush2.msra.mxu0 0.0
      %4733 = vmatprep.subr.mxu0 0.0
      %4734 = vmatpush2.msra.mxu0 0.0
      %4735 = vmatprep.subr.mxu0 0.0
      %4736 = vmatpush2.msra.mxu0 0.0
      %4737 = vmatprep.subr.mxu0 0.0
      %4738 = vmatpush2.msra.mxu0 0.0
      %4739 = vmatprep.subr.mxu0 0.0
      %4740 = vmatpush2.msra.mxu0 0.0
      %4741 = vmatprep.subr.mxu0 0.0
      %4742 = vmatpush2.msra.mxu0 0.0
      %4743 = vmatprep.subr.mxu0 0.0
      %4744 = vmatpush2.msra.mxu0 0.0
      %4745 = vmatprep.subr.mxu0 0.0
      %4746 = vmatpush2.msra.mxu0 0.0
      %4747 = vmatprep.subr.mxu0 0.0
      %4748 = vmatpush2.msra.mxu0 0.0
      %4749 = vmatprep.subr.mxu0 0.0
      %4750 = vmatpush2.msra.mxu0 0.0
      %4751 = vmatprep.mubr.f32.mxu0 0.0
      %4752 = vmatmul.mubr.f32.gmra.mxu0 %v2398
      %v4753 = vpop.f32.mrf.mxu0
      %v4754 = vadd.f32 0.0, %v4753
      %v4755 = vpop.f32.mrf.mxu0
      %4756 = vmatprep.mubr.f32.mxu0 0.0
      %4757 = vmatmul.mubr.f32.gmra.mxu0 %v2401
      %v4758 = vpop.f32.mrf.mxu0
      %v4759 = vadd.f32 0.0, %v4758
      %v4760 = vpop.f32.mrf.mxu0
      %4761 = vmatprep.mubr.f32.mxu0 0.0
      %4762 = vmatmul.mubr.f32.gmra.mxu0 %v2404
      %v4763 = vpop.f32.mrf.mxu0
      %v4764 = vadd.f32 0.0, %v4763
      %v4765 = vpop.f32.mrf.mxu0
      %4766 = vmatprep.mubr.f32.mxu0 0.0
      %4767 = vmatmul.mubr.f32.gmra.mxu0 %v2407
      %v4768 = vpop.f32.mrf.mxu0
      %v4769 = vadd.f32 0.0, %v4768
      %v4770 = vpop.f32.mrf.mxu0
      %4771 = vmatprep.mubr.f32.mxu0 0.0
      %4772 = vmatmul.mubr.f32.gmra.mxu0 %v2410
      %v4773 = vpop.f32.mrf.mxu0
      %v4774 = vadd.f32 0.0, %v4773
      %v4775 = vpop.f32.mrf.mxu0
      %4776 = vmatprep.mubr.f32.mxu0 0.0
      %4777 = vmatmul.mubr.f32.gmra.mxu0 %v2413
      %v4778 = vpop.f32.mrf.mxu0
      %v4779 = vadd.f32 0.0, %v4778
      %v4780 = vpop.f32.mrf.mxu0
      %4781 = vmatprep.mubr.f32.mxu0 0.0
      %4782 = vmatmul.mubr.f32.gmra.mxu0 %v2416
      %v4783 = vpop.f32.mrf.mxu0
      %v4784 = vadd.f32 0.0, %v4783
      %v4785 = vpop.f32.mrf.mxu0
      %4786 = vmatprep.mubr.f32.mxu0 0.0
      %4787 = vmatmul.mubr.f32.gmra.mxu0 %v2419
      %v4788 = vpop.f32.mrf.mxu0
      %v4789 = vadd.f32 0.0, %v4788
      %v4790 = vpop.f32.mrf.mxu0
      %4791 = vdwg.mxu0
      %4792 = vmatprep.subr.mxu0 0.0
      %4793 = vmatpush1.msra.mxu0 0.0
      %4794 = vmatprep.subr.mxu0 0.0
      %4795 = vmatpush1.msra.mxu0 0.0
      %4796 = vmatprep.subr.mxu0 0.0
      %4797 = vmatpush1.msra.mxu0 0.0
      %4798 = vmatprep.subr.mxu0 0.0
      %4799 = vmatpush1.msra.mxu0 0.0
      %4800 = vmatprep.subr.mxu0 0.0
      %4801 = vmatpush1.msra.mxu0 0.0
      %4802 = vmatprep.subr.mxu0 0.0
      %4803 = vmatpush1.msra.mxu0 0.0
      %4804 = vmatprep.subr.mxu0 0.0
      %4805 = vmatpush1.msra.mxu0 0.0
      %4806 = vmatprep.subr.mxu0 0.0
      %4807 = vmatpush1.msra.mxu0 0.0
      %4808 = vmatprep.subr.mxu0 0.0
      %4809 = vmatpush1.msra.mxu0 %v3764
      %4810 = vmatprep.subr.mxu0 0.0
      %4811 = vmatpush1.msra.mxu0 %v3759
      %4812 = vmatprep.subr.mxu0 0.0
      %4813 = vmatpush1.msra.mxu0 %v3754
      %4814 = vmatprep.subr.mxu0 0.0
      %4815 = vmatpush1.msra.mxu0 %v3749
      %4816 = vmatprep.subr.mxu0 0.0
      %4817 = vmatpush1.msra.mxu0 %v3744
      %4818 = vmatprep.subr.mxu0 0.0
      %4819 = vmatpush1.msra.mxu0 %v3739
      %4820 = vmatprep.subr.mxu0 0.0
      %4821 = vmatpush1.msra.mxu0 %v3734
      %4822 = vmatprep.subr.mxu0 0.0
      %4823 = vmatpush1.msra.mxu0 %v3729
      %4824 = vmatprep.subr.mxu0 0.0
      %4825 = vmatpush2.msra.mxu0 0.0
      %4826 = vmatprep.subr.mxu0 0.0
      %4827 = vmatpush2.msra.mxu0 0.0
      %4828 = vmatprep.subr.mxu0 0.0
      %4829 = vmatpush2.msra.mxu0 0.0
      %4830 = vmatprep.subr.mxu0 0.0
      %4831 = vmatpush2.msra.mxu0 0.0
      %4832 = vmatprep.subr.mxu0 0.0
      %4833 = vmatpush2.msra.mxu0 0.0
      %4834 = vmatprep.subr.mxu0 0.0
      %4835 = vmatpush2.msra.mxu0 0.0
      %4836 = vmatprep.subr.mxu0 0.0
      %4837 = vmatpush2.msra.mxu0 0.0
      %4838 = vmatprep.subr.mxu0 0.0
      %4839 = vmatpush2.msra.mxu0 0.0
      %4840 = vmatprep.subr.mxu0 0.0
      %4841 = vmatpush2.msra.mxu0 0.0
      %4842 = vmatprep.subr.mxu0 0.0
      %4843 = vmatpush2.msra.mxu0 0.0
      %4844 = vmatprep.subr.mxu0 0.0
      %4845 = vmatpush2.msra.mxu0 0.0
      %4846 = vmatprep.subr.mxu0 0.0
      %4847 = vmatpush2.msra.mxu0 0.0
      %4848 = vmatprep.subr.mxu0 0.0
      %4849 = vmatpush2.msra.mxu0 0.0
      %4850 = vmatprep.subr.mxu0 0.0
      %4851 = vmatpush2.msra.mxu0 0.0
      %4852 = vmatprep.subr.mxu0 0.0
      %4853 = vmatpush2.msra.mxu0 0.0
      %4854 = vmatprep.subr.mxu0 0.0
      %4855 = vmatpush2.msra.mxu0 0.0
      %4856 = vmatprep.mubr.f32.mxu0 0.0
      %4857 = vmatmul.mubr.f32.gmra.mxu0 %v2527
      %v4858 = vpop.f32.mrf.mxu0
      %v4859 = vadd.f32 0.0, %v4858
      %v4860 = vpop.f32.mrf.mxu0
      %4861 = vmatprep.mubr.f32.mxu0 0.0
      %4862 = vmatmul.mubr.f32.gmra.mxu0 %v2530
      %v4863 = vpop.f32.mrf.mxu0
      %v4864 = vadd.f32 0.0, %v4863
      %v4865 = vpop.f32.mrf.mxu0
      %4866 = vmatprep.mubr.f32.mxu0 0.0
      %4867 = vmatmul.mubr.f32.gmra.mxu0 %v2533
      %v4868 = vpop.f32.mrf.mxu0
      %v4869 = vadd.f32 0.0, %v4868
      %v4870 = vpop.f32.mrf.mxu0
      %4871 = vmatprep.mubr.f32.mxu0 0.0
      %4872 = vmatmul.mubr.f32.gmra.mxu0 %v2536
      %v4873 = vpop.f32.mrf.mxu0
      %v4874 = vadd.f32 0.0, %v4873
      %v4875 = vpop.f32.mrf.mxu0
      %4876 = vmatprep.mubr.f32.mxu0 0.0
      %4877 = vmatmul.mubr.f32.gmra.mxu0 %v2539
      %v4878 = vpop.f32.mrf.mxu0
      %v4879 = vadd.f32 0.0, %v4878
      %v4880 = vpop.f32.mrf.mxu0
      %4881 = vmatprep.mubr.f32.mxu0 0.0
      %4882 = vmatmul.mubr.f32.gmra.mxu0 %v2542
      %v4883 = vpop.f32.mrf.mxu0
      %v4884 = vadd.f32 0.0, %v4883
      %v4885 = vpop.f32.mrf.mxu0
      %4886 = vmatprep.mubr.f32.mxu0 0.0
      %4887 = vmatmul.mubr.f32.gmra.mxu0 %v2545
      %v4888 = vpop.f32.mrf.mxu0
      %v4889 = vadd.f32 0.0, %v4888
      %v4890 = vpop.f32.mrf.mxu0
      %4891 = vmatprep.mubr.f32.mxu0 0.0
      %4892 = vmatmul.mubr.f32.gmra.mxu0 %v2548
      %v4893 = vpop.f32.mrf.mxu0
      %v4894 = vadd.f32 0.0, %v4893
      %v4895 = vpop.f32.mrf.mxu0
      %4896 = vdwg.mxu0
      %4897 = vmatprep.subr.mxu0 0.0
      %4898 = vmatpush1.msra.mxu0 0.0
      %4899 = vmatprep.subr.mxu0 0.0
      %4900 = vmatpush1.msra.mxu0 0.0
      %4901 = vmatprep.subr.mxu0 0.0
      %4902 = vmatpush1.msra.mxu0 0.0
      %4903 = vmatprep.subr.mxu0 0.0
      %4904 = vmatpush1.msra.mxu0 0.0
      %4905 = vmatprep.subr.mxu0 0.0
      %4906 = vmatpush1.msra.mxu0 0.0
      %4907 = vmatprep.subr.mxu0 0.0
      %4908 = vmatpush1.msra.mxu0 0.0
      %4909 = vmatprep.subr.mxu0 0.0
      %4910 = vmatpush1.msra.mxu0 0.0
      %4911 = vmatprep.subr.mxu0 0.0
      %4912 = vmatpush1.msra.mxu0 0.0
      %4913 = vmatprep.subr.mxu0 0.0
      %4914 = vmatpush1.msra.mxu0 %v3804
      %4915 = vmatprep.subr.mxu0 0.0
      %4916 = vmatpush1.msra.mxu0 %v3799
      %4917 = vmatprep.subr.mxu0 0.0
      %4918 = vmatpush1.msra.mxu0 %v3794
      %4919 = vmatprep.subr.mxu0 0.0
      %4920 = vmatpush1.msra.mxu0 %v3789
      %4921 = vmatprep.subr.mxu0 0.0
      %4922 = vmatpush1.msra.mxu0 %v3784
      %4923 = vmatprep.subr.mxu0 0.0
      %4924 = vmatpush1.msra.mxu0 %v3779
      %4925 = vmatprep.subr.mxu0 0.0
      %4926 = vmatpush1.msra.mxu0 %v3774
      %4927 = vmatprep.subr.mxu0 0.0
      %4928 = vmatpush1.msra.mxu0 %v3769
      %4929 = vmatprep.subr.mxu0 0.0
      %4930 = vmatpush2.msra.mxu0 0.0
      %4931 = vmatprep.subr.mxu0 0.0
      %4932 = vmatpush2.msra.mxu0 0.0
      %4933 = vmatprep.subr.mxu0 0.0
      %4934 = vmatpush2.msra.mxu0 0.0
      %4935 = vmatprep.subr.mxu0 0.0
      %4936 = vmatpush2.msra.mxu0 0.0
      %4937 = vmatprep.subr.mxu0 0.0
      %4938 = vmatpush2.msra.mxu0 0.0
      %4939 = vmatprep.subr.mxu0 0.0
      %4940 = vmatpush2.msra.mxu0 0.0
      %4941 = vmatprep.subr.mxu0 0.0
      %4942 = vmatpush2.msra.mxu0 0.0
      %4943 = vmatprep.subr.mxu0 0.0
      %4944 = vmatpush2.msra.mxu0 0.0
      %4945 = vmatprep.subr.mxu0 0.0
      %4946 = vmatpush2.msra.mxu0 0.0
      %4947 = vmatprep.subr.mxu0 0.0
      %4948 = vmatpush2.msra.mxu0 0.0
      %4949 = vmatprep.subr.mxu0 0.0
      %4950 = vmatpush2.msra.mxu0 0.0
      %4951 = vmatprep.subr.mxu0 0.0
      %4952 = vmatpush2.msra.mxu0 0.0
      %4953 = vmatprep.subr.mxu0 0.0
      %4954 = vmatpush2.msra.mxu0 0.0
      %4955 = vmatprep.subr.mxu0 0.0
      %4956 = vmatpush2.msra.mxu0 0.0
      %4957 = vmatprep.subr.mxu0 0.0
      %4958 = vmatpush2.msra.mxu0 0.0
      %4959 = vmatprep.subr.mxu0 0.0
      %4960 = vmatpush2.msra.mxu0 0.0
      %4961 = vmatprep.mubr.f32.mxu0 0.0
      %4962 = vmatmul.mubr.f32.gmra.mxu0 %v2656
      %v4963 = vpop.f32.mrf.mxu0
      %v4964 = vadd.f32 0.0, %v4963
      %v4965 = vpop.f32.mrf.mxu0
      %4966 = vmatprep.mubr.f32.mxu0 0.0
      %4967 = vmatmul.mubr.f32.gmra.mxu0 %v2659
      %v4968 = vpop.f32.mrf.mxu0
      %v4969 = vadd.f32 0.0, %v4968
      %v4970 = vpop.f32.mrf.mxu0
      %4971 = vmatprep.mubr.f32.mxu0 0.0
      %4972 = vmatmul.mubr.f32.gmra.mxu0 %v2662
      %v4973 = vpop.f32.mrf.mxu0
      %v4974 = vadd.f32 0.0, %v4973
      %v4975 = vpop.f32.mrf.mxu0
      %4976 = vmatprep.mubr.f32.mxu0 0.0
      %4977 = vmatmul.mubr.f32.gmra.mxu0 %v2665
      %v4978 = vpop.f32.mrf.mxu0
      %v4979 = vadd.f32 0.0, %v4978
      %v4980 = vpop.f32.mrf.mxu0
      %4981 = vmatprep.mubr.f32.mxu0 0.0
      %4982 = vmatmul.mubr.f32.gmra.mxu0 %v2668
      %v4983 = vpop.f32.mrf.mxu0
      %v4984 = vadd.f32 0.0, %v4983
      %v4985 = vpop.f32.mrf.mxu0
      %4986 = vmatprep.mubr.f32.mxu0 0.0
      %4987 = vmatmul.mubr.f32.gmra.mxu0 %v2671
      %v4988 = vpop.f32.mrf.mxu0
      %v4989 = vadd.f32 0.0, %v4988
      %v4990 = vpop.f32.mrf.mxu0
      %4991 = vmatprep.mubr.f32.mxu0 0.0
      %4992 = vmatmul.mubr.f32.gmra.mxu0 %v2674
      %v4993 = vpop.f32.mrf.mxu0
      %v4994 = vadd.f32 0.0, %v4993
      %v4995 = vpop.f32.mrf.mxu0
      %4996 = vmatprep.mubr.f32.mxu0 0.0
      %4997 = vmatmul.mubr.f32.gmra.mxu0 %v2677
      %v4998 = vpop.f32.mrf.mxu0
      %v4999 = vadd.f32 0.0, %v4998
      %v5000 = vpop.f32.mrf.mxu0
      %5001 = vdwg.mxu0
      %5002 = vmatprep.subr.mxu0 0.0
      %5003 = vmatpush1.msra.mxu0 0.0
      %5004 = vmatprep.subr.mxu0 0.0
      %5005 = vmatpush1.msra.mxu0 0.0
      %5006 = vmatprep.subr.mxu0 0.0
      %5007 = vmatpush1.msra.mxu0 0.0
      %5008 = vmatprep.subr.mxu0 0.0
      %5009 = vmatpush1.msra.mxu0 0.0
      %5010 = vmatprep.subr.mxu0 0.0
      %5011 = vmatpush1.msra.mxu0 0.0
      %5012 = vmatprep.subr.mxu0 0.0
      %5013 = vmatpush1.msra.mxu0 0.0
      %5014 = vmatprep.subr.mxu0 0.0
      %5015 = vmatpush1.msra.mxu0 0.0
      %5016 = vmatprep.subr.mxu0 0.0
      %5017 = vmatpush1.msra.mxu0 0.0
      %5018 = vmatprep.subr.mxu0 0.0
      %5019 = vmatpush1.msra.mxu0 %v3844
      %5020 = vmatprep.subr.mxu0 0.0
      %5021 = vmatpush1.msra.mxu0 %v3839
      %5022 = vmatprep.subr.mxu0 0.0
      %5023 = vmatpush1.msra.mxu0 %v3834
      %5024 = vmatprep.subr.mxu0 0.0
      %5025 = vmatpush1.msra.mxu0 %v3829
      %5026 = vmatprep.subr.mxu0 0.0
      %5027 = vmatpush1.msra.mxu0 %v3824
      %5028 = vmatprep.subr.mxu0 0.0
      %5029 = vmatpush1.msra.mxu0 %v3819
      %5030 = vmatprep.subr.mxu0 0.0
      %5031 = vmatpush1.msra.mxu0 %v3814
      %5032 = vmatprep.subr.mxu0 0.0
      %5033 = vmatpush1.msra.mxu0 %v3809
      %5034 = vmatprep.subr.mxu0 0.0
      %5035 = vmatpush2.msra.mxu0 0.0
      %5036 = vmatprep.subr.mxu0 0.0
      %5037 = vmatpush2.msra.mxu0 0.0
      %5038 = vmatprep.subr.mxu0 0.0
      %5039 = vmatpush2.msra.mxu0 0.0
      %5040 = vmatprep.subr.mxu0 0.0
      %5041 = vmatpush2.msra.mxu0 0.0
      %5042 = vmatprep.subr.mxu0 0.0
      %5043 = vmatpush2.msra.mxu0 0.0
      %5044 = vmatprep.subr.mxu0 0.0
      %5045 = vmatpush2.msra.mxu0 0.0
      %5046 = vmatprep.subr.mxu0 0.0
      %5047 = vmatpush2.msra.mxu0 0.0
      %5048 = vmatprep.subr.mxu0 0.0
      %5049 = vmatpush2.msra.mxu0 0.0
      %5050 = vmatprep.subr.mxu0 0.0
      %5051 = vmatpush2.msra.mxu0 0.0
      %5052 = vmatprep.subr.mxu0 0.0
      %5053 = vmatpush2.msra.mxu0 0.0
      %5054 = vmatprep.subr.mxu0 0.0
      %5055 = vmatpush2.msra.mxu0 0.0
      %5056 = vmatprep.subr.mxu0 0.0
      %5057 = vmatpush2.msra.mxu0 0.0
      %5058 = vmatprep.subr.mxu0 0.0
      %5059 = vmatpush2.msra.mxu0 0.0
      %5060 = vmatprep.subr.mxu0 0.0
      %5061 = vmatpush2.msra.mxu0 0.0
      %5062 = vmatprep.subr.mxu0 0.0
      %5063 = vmatpush2.msra.mxu0 0.0
      %5064 = vmatprep.subr.mxu0 0.0
      %5065 = vmatpush2.msra.mxu0 0.0
      %5066 = vmatprep.mubr.f32.mxu0 0.0
      %5067 = vmatmul.mubr.f32.gmra.mxu0 %v2785
      %v5068 = vpop.f32.mrf.mxu0
      %v5069 = vadd.f32 0.0, %v5068
      %v5070 = vpop.f32.mrf.mxu0
      %5071 = vmatprep.mubr.f32.mxu0 0.0
      %5072 = vmatmul.mubr.f32.gmra.mxu0 %v2788
      %v5073 = vpop.f32.mrf.mxu0
      %v5074 = vadd.f32 0.0, %v5073
      %v5075 = vpop.f32.mrf.mxu0
      %5076 = vmatprep.mubr.f32.mxu0 0.0
      %5077 = vmatmul.mubr.f32.gmra.mxu0 %v2791
      %v5078 = vpop.f32.mrf.mxu0
      %v5079 = vadd.f32 0.0, %v5078
      %v5080 = vpop.f32.mrf.mxu0
      %5081 = vmatprep.mubr.f32.mxu0 0.0
      %5082 = vmatmul.mubr.f32.gmra.mxu0 %v2794
      %v5083 = vpop.f32.mrf.mxu0
      %v5084 = vadd.f32 0.0, %v5083
      %v5085 = vpop.f32.mrf.mxu0
      %5086 = vmatprep.mubr.f32.mxu0 0.0
      %5087 = vmatmul.mubr.f32.gmra.mxu0 %v2797
      %v5088 = vpop.f32.mrf.mxu0
      %v5089 = vadd.f32 0.0, %v5088
      %v5090 = vpop.f32.mrf.mxu0
      %5091 = vmatprep.mubr.f32.mxu0 0.0
      %5092 = vmatmul.mubr.f32.gmra.mxu0 %v2800
      %v5093 = vpop.f32.mrf.mxu0
      %v5094 = vadd.f32 0.0, %v5093
      %v5095 = vpop.f32.mrf.mxu0
      %5096 = vmatprep.mubr.f32.mxu0 0.0
      %5097 = vmatmul.mubr.f32.gmra.mxu0 %v2803
      %v5098 = vpop.f32.mrf.mxu0
      %v5099 = vadd.f32 0.0, %v5098
      %v5100 = vpop.f32.mrf.mxu0
      %5101 = vmatprep.mubr.f32.mxu0 0.0
      %5102 = vmatmul.mubr.f32.gmra.mxu0 %v2806
      %v5103 = vpop.f32.mrf.mxu0
      %v5104 = vadd.f32 0.0, %v5103
      %v5105 = vpop.f32.mrf.mxu0
      %5106 = vdwg.mxu0
      %v5107 = vmax.f32 %v3914, 0.0
      %v5108 = vmax.f32 %v3919, 0.0
      %v5109 = vmax.f32 %v3924, 0.0
      %v5110 = vmax.f32 %v3929, 0.0
      %v5111 = vmax.f32 %v3934, 0.0
      %v5112 = vmax.f32 %v3939, 0.0
      %v5113 = vmax.f32 %v3944, 0.0
      %v5114 = vmax.f32 %v3949, 0.0
      %v5115 = vmax.f32 %v4019, 0.0
      %v5116 = vmax.f32 %v4024, 0.0
      %v5117 = vmax.f32 %v4029, 0.0
      %v5118 = vmax.f32 %v4034, 0.0
      %v5119 = vmax.f32 %v4039, 0.0
      %v5120 = vmax.f32 %v4044, 0.0
      %v5121 = vmax.f32 %v4049, 0.0
      %v5122 = vmax.f32 %v4054, 0.0
      %v5123 = vmax.f32 %v4124, 0.0
      %v5124 = vmax.f32 %v4129, 0.0
      %v5125 = vmax.f32 %v4134, 0.0
      %v5126 = vmax.f32 %v4139, 0.0
      %v5127 = vmax.f32 %v4144, 0.0
      %v5128 = vmax.f32 %v4149, 0.0
      %v5129 = vmax.f32 %v4154, 0.0
      %v5130 = vmax.f32 %v4159, 0.0
      %v5131 = vmax.f32 %v4229, 0.0
      %v5132 = vmax.f32 %v4234, 0.0
      %v5133 = vmax.f32 %v4239, 0.0
      %v5134 = vmax.f32 %v4244, 0.0
      %v5135 = vmax.f32 %v4249, 0.0
      %v5136 = vmax.f32 %v4254, 0.0
      %v5137 = vmax.f32 %v4259, 0.0
      %v5138 = vmax.f32 %v4264, 0.0
      %v5139 = vmax.f32 %v4334, 0.0
      %v5140 = vmax.f32 %v4339, 0.0
      %v5141 = vmax.f32 %v4344, 0.0
      %v5142 = vmax.f32 %v4349, 0.0
      %v5143 = vmax.f32 %v4354, 0.0
      %v5144 = vmax.f32 %v4359, 0.0
      %v5145 = vmax.f32 %v4364, 0.0
      %v5146 = vmax.f32 %v4369, 0.0
      %v5147 = vmax.f32 %v4439, 0.0
      %v5148 = vmax.f32 %v4444, 0.0
      %v5149 = vmax.f32 %v4449, 0.0
      %v5150 = vmax.f32 %v4454, 0.0
      %v5151 = vmax.f32 %v4459, 0.0
      %v5152 = vmax.f32 %v4464, 0.0
      %v5153 = vmax.f32 %v4469, 0.0
      %v5154 = vmax.f32 %v4474, 0.0
      %v5155 = vmax.f32 %v4544, 0.0
      %v5156 = vmax.f32 %v4549, 0.0
      %v5157 = vmax.f32 %v4554, 0.0
      %v5158 = vmax.f32 %v4559, 0.0
      %v5159 = vmax.f32 %v4564, 0.0
      %v5160 = vmax.f32 %v4569, 0.0
      %v5161 = vmax.f32 %v4574, 0.0
      %v5162 = vmax.f32 %v4579, 0.0
      %v5163 = vmax.f32 %v4649, 0.0
      %v5164 = vmax.f32 %v4654, 0.0
      %v5165 = vmax.f32 %v4659, 0.0
      %v5166 = vmax.f32 %v4664, 0.0
      %v5167 = vmax.f32 %v4669, 0.0
      %v5168 = vmax.f32 %v4674, 0.0
      %v5169 = vmax.f32 %v4679, 0.0
      %v5170 = vmax.f32 %v4684, 0.0
      %v5171 = vmax.f32 %v4754, 0.0
      %v5172 = vmax.f32 %v4759, 0.0
      %v5173 = vmax.f32 %v4764, 0.0
      %v5174 = vmax.f32 %v4769, 0.0
      %v5175 = vmax.f32 %v4774, 0.0
      %v5176 = vmax.f32 %v4779, 0.0
      %v5177 = vmax.f32 %v4784, 0.0
      %v5178 = vmax.f32 %v4789, 0.0
      %v5179 = vmax.f32 %v4859, 0.0
      %v5180 = vmax.f32 %v4864, 0.0
      %v5181 = vmax.f32 %v4869, 0.0
      %v5182 = vmax.f32 %v4874, 0.0
      %v5183 = vmax.f32 %v4879, 0.0
      %v5184 = vmax.f32 %v4884, 0.0
      %v5185 = vmax.f32 %v4889, 0.0
      %v5186 = vmax.f32 %v4894, 0.0
      %v5187 = vmax.f32 %v4964, 0.0
      %v5188 = vmax.f32 %v4969, 0.0
      %v5189 = vmax.f32 %v4974, 0.0
      %v5190 = vmax.f32 %v4979, 0.0
      %v5191 = vmax.f32 %v4984, 0.0
      %v5192 = vmax.f32 %v4989, 0.0
      %v5193 = vmax.f32 %v4994, 0.0
      %v5194 = vmax.f32 %v4999, 0.0
      %v5195 = vmax.f32 %v5069, 0.0
      %v5196 = vmax.f32 %v5074, 0.0
      %v5197 = vmax.f32 %v5079, 0.0
      %v5198 = vmax.f32 %v5084, 0.0
      %v5199 = vmax.f32 %v5089, 0.0
      %v5200 = vmax.f32 %v5094, 0.0
      %v5201 = vmax.f32 %v5099, 0.0
      %v5202 = vmax.f32 %v5104, 0.0
      %v5203 = vsel %vm3013, %v5107, 0.0
      %v5204 = vsel %vm3013, %v5108, 0.0
      %v5205 = vadd.f32 %v5203, %v5204
      %v5206 = vsel %vm3013, %v5109, 0.0
      %v5207 = vadd.f32 %v5205, %v5206
      %v5208 = vsel %vm3013, %v5110, 0.0
      %v5209 = vadd.f32 %v5207, %v5208
      %v5210 = vsel %vm3013, %v5111, 0.0
      %v5211 = vadd.f32 %v5209, %v5210
      %v5212 = vsel %vm3013, %v5112, 0.0
      %v5213 = vadd.f32 %v5211, %v5212
      %v5214 = vsel %vm3013, %v5113, 0.0
      %v5215 = vadd.f32 %v5213, %v5214
      %v5216 = vsel %vm3013, %v5114, 0.0
      %v5217 = vadd.f32 %v5215, %v5216
      %v5218 = vrot.slane %v5217, 4
      %v5219 = vadd.f32 %v5217, %v5218
      %v5220 = vrot.slane %v5219, 2
      %v5221 = vadd.f32 %v5219, %v5220
      %v5222 = vrot.slane %v5221, 1
      %v5223 = vadd.f32 %v5221, %v5222
      %v5224 = vsel %vm3013, %v5115, 0.0
      %v5225 = vsel %vm3013, %v5116, 0.0
      %v5226 = vadd.f32 %v5224, %v5225
      %v5227 = vsel %vm3013, %v5117, 0.0
      %v5228 = vadd.f32 %v5226, %v5227
      %v5229 = vsel %vm3013, %v5118, 0.0
      %v5230 = vadd.f32 %v5228, %v5229
      %v5231 = vsel %vm3013, %v5119, 0.0
      %v5232 = vadd.f32 %v5230, %v5231
      %v5233 = vsel %vm3013, %v5120, 0.0
      %v5234 = vadd.f32 %v5232, %v5233
      %v5235 = vsel %vm3013, %v5121, 0.0
      %v5236 = vadd.f32 %v5234, %v5235
      %v5237 = vsel %vm3013, %v5122, 0.0
      %v5238 = vadd.f32 %v5236, %v5237
      %v5239 = vrot.slane %v5238, 4
      %v5240 = vadd.f32 %v5238, %v5239
      %v5241 = vrot.slane %v5240, 2
      %v5242 = vadd.f32 %v5240, %v5241
      %v5243 = vrot.slane %v5242, 1
      %v5244 = vadd.f32 %v5242, %v5243
      %v5245 = vsel %vm3013, %v5123, 0.0
      %v5246 = vsel %vm3013, %v5124, 0.0
      %v5247 = vadd.f32 %v5245, %v5246
      %v5248 = vsel %vm3013, %v5125, 0.0
      %v5249 = vadd.f32 %v5247, %v5248
      %v5250 = vsel %vm3013, %v5126, 0.0
      %v5251 = vadd.f32 %v5249, %v5250
      %v5252 = vsel %vm3013, %v5127, 0.0
      %v5253 = vadd.f32 %v5251, %v5252
      %v5254 = vsel %vm3013, %v5128, 0.0
      %v5255 = vadd.f32 %v5253, %v5254
      %v5256 = vsel %vm3013, %v5129, 0.0
      %v5257 = vadd.f32 %v5255, %v5256
      %v5258 = vsel %vm3013, %v5130, 0.0
      %v5259 = vadd.f32 %v5257, %v5258
      %v5260 = vrot.slane %v5259, 4
      %v5261 = vadd.f32 %v5259, %v5260
      %v5262 = vrot.slane %v5261, 2
      %v5263 = vadd.f32 %v5261, %v5262
      %v5264 = vrot.slane %v5263, 1
      %v5265 = vadd.f32 %v5263, %v5264
      %v5266 = vsel %vm3013, %v5131, 0.0
      %v5267 = vsel %vm3013, %v5132, 0.0
      %v5268 = vadd.f32 %v5266, %v5267
      %v5269 = vsel %vm3013, %v5133, 0.0
      %v5270 = vadd.f32 %v5268, %v5269
      %v5271 = vsel %vm3013, %v5134, 0.0
      %v5272 = vadd.f32 %v5270, %v5271
      %v5273 = vsel %vm3013, %v5135, 0.0
      %v5274 = vadd.f32 %v5272, %v5273
      %v5275 = vsel %vm3013, %v5136, 0.0
      %v5276 = vadd.f32 %v5274, %v5275
      %v5277 = vsel %vm3013, %v5137, 0.0
      %v5278 = vadd.f32 %v5276, %v5277
      %v5279 = vsel %vm3013, %v5138, 0.0
      %v5280 = vadd.f32 %v5278, %v5279
      %v5281 = vrot.slane %v5280, 4
      %v5282 = vadd.f32 %v5280, %v5281
      %v5283 = vrot.slane %v5282, 2
      %v5284 = vadd.f32 %v5282, %v5283
      %v5285 = vrot.slane %v5284, 1
      %v5286 = vadd.f32 %v5284, %v5285
      %v5287 = vsel %vm3013, %v5139, 0.0
      %v5288 = vsel %vm3013, %v5140, 0.0
      %v5289 = vadd.f32 %v5287, %v5288
      %v5290 = vsel %vm3013, %v5141, 0.0
      %v5291 = vadd.f32 %v5289, %v5290
      %v5292 = vsel %vm3013, %v5142, 0.0
      %v5293 = vadd.f32 %v5291, %v5292
      %v5294 = vsel %vm3013, %v5143, 0.0
      %v5295 = vadd.f32 %v5293, %v5294
      %v5296 = vsel %vm3013, %v5144, 0.0
      %v5297 = vadd.f32 %v5295, %v5296
      %v5298 = vsel %vm3013, %v5145, 0.0
      %v5299 = vadd.f32 %v5297, %v5298
      %v5300 = vsel %vm3013, %v5146, 0.0
      %v5301 = vadd.f32 %v5299, %v5300
      %v5302 = vrot.slane %v5301, 4
      %v5303 = vadd.f32 %v5301, %v5302
      %v5304 = vrot.slane %v5303, 2
      %v5305 = vadd.f32 %v5303, %v5304
      %v5306 = vrot.slane %v5305, 1
      %v5307 = vadd.f32 %v5305, %v5306
      %v5308 = vsel %vm3013, %v5147, 0.0
      %v5309 = vsel %vm3013, %v5148, 0.0
      %v5310 = vadd.f32 %v5308, %v5309
      %v5311 = vsel %vm3013, %v5149, 0.0
      %v5312 = vadd.f32 %v5310, %v5311
      %v5313 = vsel %vm3013, %v5150, 0.0
      %v5314 = vadd.f32 %v5312, %v5313
      %v5315 = vsel %vm3013, %v5151, 0.0
      %v5316 = vadd.f32 %v5314, %v5315
      %v5317 = vsel %vm3013, %v5152, 0.0
      %v5318 = vadd.f32 %v5316, %v5317
      %v5319 = vsel %vm3013, %v5153, 0.0
      %v5320 = vadd.f32 %v5318, %v5319
      %v5321 = vsel %vm3013, %v5154, 0.0
      %v5322 = vadd.f32 %v5320, %v5321
      %v5323 = vrot.slane %v5322, 4
      %v5324 = vadd.f32 %v5322, %v5323
      %v5325 = vrot.slane %v5324, 2
      %v5326 = vadd.f32 %v5324, %v5325
      %v5327 = vrot.slane %v5326, 1
      %v5328 = vadd.f32 %v5326, %v5327
      %v5329 = vsel %vm3013, %v5155, 0.0
      %v5330 = vsel %vm3013, %v5156, 0.0
      %v5331 = vadd.f32 %v5329, %v5330
      %v5332 = vsel %vm3013, %v5157, 0.0
      %v5333 = vadd.f32 %v5331, %v5332
      %v5334 = vsel %vm3013, %v5158, 0.0
      %v5335 = vadd.f32 %v5333, %v5334
      %v5336 = vsel %vm3013, %v5159, 0.0
      %v5337 = vadd.f32 %v5335, %v5336
      %v5338 = vsel %vm3013, %v5160, 0.0
      %v5339 = vadd.f32 %v5337, %v5338
      %v5340 = vsel %vm3013, %v5161, 0.0
      %v5341 = vadd.f32 %v5339, %v5340
      %v5342 = vsel %vm3013, %v5162, 0.0
      %v5343 = vadd.f32 %v5341, %v5342
      %v5344 = vrot.slane %v5343, 4
      %v5345 = vadd.f32 %v5343, %v5344
      %v5346 = vrot.slane %v5345, 2
      %v5347 = vadd.f32 %v5345, %v5346
      %v5348 = vrot.slane %v5347, 1
      %v5349 = vadd.f32 %v5347, %v5348
      %v5350 = vsel %vm3013, %v5163, 0.0
      %v5351 = vsel %vm3013, %v5164, 0.0
      %v5352 = vadd.f32 %v5350, %v5351
      %v5353 = vsel %vm3013, %v5165, 0.0
      %v5354 = vadd.f32 %v5352, %v5353
      %v5355 = vsel %vm3013, %v5166, 0.0
      %v5356 = vadd.f32 %v5354, %v5355
      %v5357 = vsel %vm3013, %v5167, 0.0
      %v5358 = vadd.f32 %v5356, %v5357
      %v5359 = vsel %vm3013, %v5168, 0.0
      %v5360 = vadd.f32 %v5358, %v5359
      %v5361 = vsel %vm3013, %v5169, 0.0
      %v5362 = vadd.f32 %v5360, %v5361
      %v5363 = vsel %vm3013, %v5170, 0.0
      %v5364 = vadd.f32 %v5362, %v5363
      %v5365 = vrot.slane %v5364, 4
      %v5366 = vadd.f32 %v5364, %v5365
      %v5367 = vrot.slane %v5366, 2
      %v5368 = vadd.f32 %v5366, %v5367
      %v5369 = vrot.slane %v5368, 1
      %v5370 = vadd.f32 %v5368, %v5369
      %v5371 = vsel %vm3013, %v5171, 0.0
      %v5372 = vsel %vm3013, %v5172, 0.0
      %v5373 = vadd.f32 %v5371, %v5372
      %v5374 = vsel %vm3013, %v5173, 0.0
      %v5375 = vadd.f32 %v5373, %v5374
      %v5376 = vsel %vm3013, %v5174, 0.0
      %v5377 = vadd.f32 %v5375, %v5376
      %v5378 = vsel %vm3013, %v5175, 0.0
      %v5379 = vadd.f32 %v5377, %v5378
      %v5380 = vsel %vm3013, %v5176, 0.0
      %v5381 = vadd.f32 %v5379, %v5380
      %v5382 = vsel %vm3013, %v5177, 0.0
      %v5383 = vadd.f32 %v5381, %v5382
      %v5384 = vsel %vm3013, %v5178, 0.0
      %v5385 = vadd.f32 %v5383, %v5384
      %v5386 = vrot.slane %v5385, 4
      %v5387 = vadd.f32 %v5385, %v5386
      %v5388 = vrot.slane %v5387, 2
      %v5389 = vadd.f32 %v5387, %v5388
      %v5390 = vrot.slane %v5389, 1
      %v5391 = vadd.f32 %v5389, %v5390
      %v5392 = vsel %vm3013, %v5179, 0.0
      %v5393 = vsel %vm3013, %v5180, 0.0
      %v5394 = vadd.f32 %v5392, %v5393
      %v5395 = vsel %vm3013, %v5181, 0.0
      %v5396 = vadd.f32 %v5394, %v5395
      %v5397 = vsel %vm3013, %v5182, 0.0
      %v5398 = vadd.f32 %v5396, %v5397
      %v5399 = vsel %vm3013, %v5183, 0.0
      %v5400 = vadd.f32 %v5398, %v5399
      %v5401 = vsel %vm3013, %v5184, 0.0
      %v5402 = vadd.f32 %v5400, %v5401
      %v5403 = vsel %vm3013, %v5185, 0.0
      %v5404 = vadd.f32 %v5402, %v5403
      %v5405 = vsel %vm3013, %v5186, 0.0
      %v5406 = vadd.f32 %v5404, %v5405
      %v5407 = vrot.slane %v5406, 4
      %v5408 = vadd.f32 %v5406, %v5407
      %v5409 = vrot.slane %v5408, 2
      %v5410 = vadd.f32 %v5408, %v5409
      %v5411 = vrot.slane %v5410, 1
      %v5412 = vadd.f32 %v5410, %v5411
      %v5413 = vsel %vm3013, %v5187, 0.0
      %v5414 = vsel %vm3013, %v5188, 0.0
      %v5415 = vadd.f32 %v5413, %v5414
      %v5416 = vsel %vm3013, %v5189, 0.0
      %v5417 = vadd.f32 %v5415, %v5416
      %v5418 = vsel %vm3013, %v5190, 0.0
      %v5419 = vadd.f32 %v5417, %v5418
      %v5420 = vsel %vm3013, %v5191, 0.0
      %v5421 = vadd.f32 %v5419, %v5420
      %v5422 = vsel %vm3013, %v5192, 0.0
      %v5423 = vadd.f32 %v5421, %v5422
      %v5424 = vsel %vm3013, %v5193, 0.0
      %v5425 = vadd.f32 %v5423, %v5424
      %v5426 = vsel %vm3013, %v5194, 0.0
      %v5427 = vadd.f32 %v5425, %v5426
      %v5428 = vrot.slane %v5427, 4
      %v5429 = vadd.f32 %v5427, %v5428
      %v5430 = vrot.slane %v5429, 2
      %v5431 = vadd.f32 %v5429, %v5430
      %v5432 = vrot.slane %v5431, 1
      %v5433 = vadd.f32 %v5431, %v5432
      %v5434 = vsel %vm3013, %v5195, 0.0
      %v5435 = vsel %vm3013, %v5196, 0.0
      %v5436 = vadd.f32 %v5434, %v5435
      %v5437 = vsel %vm3013, %v5197, 0.0
      %v5438 = vadd.f32 %v5436, %v5437
      %v5439 = vsel %vm3013, %v5198, 0.0
      %v5440 = vadd.f32 %v5438, %v5439
      %v5441 = vsel %vm3013, %v5199, 0.0
      %v5442 = vadd.f32 %v5440, %v5441
      %v5443 = vsel %vm3013, %v5200, 0.0
      %v5444 = vadd.f32 %v5442, %v5443
      %v5445 = vsel %vm3013, %v5201, 0.0
      %v5446 = vadd.f32 %v5444, %v5445
      %v5447 = vsel %vm3013, %v5202, 0.0
      %v5448 = vadd.f32 %v5446, %v5447
      %v5449 = vrot.slane %v5448, 4
      %v5450 = vadd.f32 %v5448, %v5449
      %v5451 = vrot.slane %v5450, 2
      %v5452 = vadd.f32 %v5450, %v5451
      %v5453 = vrot.slane %v5452, 1
      %v5454 = vadd.f32 %v5452, %v5453
      %v5455 = vld [vmem:[%s4] sm:$0xff]
      %v5456 = vld [vmem:[%s4 + $0x8] sm:$0xff]
      %v5457 = vld [vmem:[%s4 + $0x10] sm:$0xff]
      %v5458 = vld [vmem:[%s4 + $0x18] sm:$0xff]
      %v5459 = vld [vmem:[%s5] sm:$0x1]
      %v5461 = vlaneseq
      %v5462 = vshrl.u32 %v5461, 7
      %v5463 = vsub.s32 0, %v5462
      %v5464 = vrot.slane %v5459, %v5463
      %vm5478 = vcmask 1041409
      %v5479 = vsel %vm5478, %v5244, %v5223
      %vm5480 = vcmask 1042434
      %v5481 = vsel %vm5480, %v5265, %v5479
      %vm5482 = vcmask 1043459
      %v5483 = vsel %vm5482, %v5286, %v5481
      %vm5484 = vcmask 1044484
      %v5485 = vsel %vm5484, %v5307, %v5483
      %vm5486 = vcmask 1045509
      %v5487 = vsel %vm5486, %v5328, %v5485
      %vm5488 = vcmask 1046534
      %v5489 = vsel %vm5488, %v5349, %v5487
      %vm5490 = vcmask 1047559
      %v5491 = vsel %vm5490, %v5370, %v5489
      %v5492 = vsel %vm5478, %v5412, %v5391
      %v5493 = vsel %vm5480, %v5433, %v5492
      %v5494 = vsel %vm5482, %v5454, %v5493
      %v5495 = vsel %vm3013, %v5491, 0
      %v5497 = vsel %vm3013, %v5494, 0
      %5499 = vmatprep.subr.mxu0 0.0
      %5500 = vmatpush1.msra.mxu0 0.0
      %5501 = vmatprep.subr.mxu0 0.0
      %5502 = vmatpush1.msra.mxu0 0.0
      %5503 = vmatprep.subr.mxu0 0.0
      %5504 = vmatpush1.msra.mxu0 0.0
      %5505 = vmatprep.subr.mxu0 0.0
      %5506 = vmatpush1.msra.mxu0 0.0
      %5507 = vmatprep.subr.mxu0 0.0
      %5508 = vmatpush1.msra.mxu0 0.0
      %5509 = vmatprep.subr.mxu0 0.0
      %5510 = vmatpush1.msra.mxu0 0.0
      %5511 = vmatprep.subr.mxu0 0.0
      %5512 = vmatpush1.msra.mxu0 0.0
      %5513 = vmatprep.subr.mxu0 0.0
      %5514 = vmatpush1.msra.mxu0 0.0
      %5515 = vmatprep.subr.mxu0 0.0
      %5516 = vmatpush1.msra.mxu0 0.0
      %5517 = vmatprep.subr.mxu0 0.0
      %5518 = vmatpush1.msra.mxu0 0.0
      %5519 = vmatprep.subr.mxu0 0.0
      %5520 = vmatpush1.msra.mxu0 0.0
      %5521 = vmatprep.subr.mxu0 0.0
      %5522 = vmatpush1.msra.mxu0 0.0
      %5523 = vmatprep.subr.mxu0 0.0
      %5524 = vmatpush1.msra.mxu0 %v5458
      %5525 = vmatprep.subr.mxu0 0.0
      %5526 = vmatpush1.msra.mxu0 %v5457
      %5527 = vmatprep.subr.mxu0 0.0
      %5528 = vmatpush1.msra.mxu0 %v5456
      %5529 = vmatprep.subr.mxu0 0.0
      %5530 = vmatpush1.msra.mxu0 %v5455
      %5531 = vmatprep.subr.mxu0 0.0
      %5532 = vmatpush2.msra.mxu0 0.0
      %5533 = vmatprep.subr.mxu0 0.0
      %5534 = vmatpush2.msra.mxu0 0.0
      %5535 = vmatprep.subr.mxu0 0.0
      %5536 = vmatpush2.msra.mxu0 0.0
      %5537 = vmatprep.subr.mxu0 0.0
      %5538 = vmatpush2.msra.mxu0 0.0
      %5539 = vmatprep.subr.mxu0 0.0
      %5540 = vmatpush2.msra.mxu0 0.0
      %5541 = vmatprep.subr.mxu0 0.0
      %5542 = vmatpush2.msra.mxu0 0.0
      %5543 = vmatprep.subr.mxu0 0.0
      %5544 = vmatpush2.msra.mxu0 0.0
      %5545 = vmatprep.subr.mxu0 0.0
      %5546 = vmatpush2.msra.mxu0 0.0
      %5547 = vmatprep.subr.mxu0 0.0
      %5548 = vmatpush2.msra.mxu0 0.0
      %5549 = vmatprep.subr.mxu0 0.0
      %5550 = vmatpush2.msra.mxu0 0.0
      %5551 = vmatprep.subr.mxu0 0.0
      %5552 = vmatpush2.msra.mxu0 0.0
      %5553 = vmatprep.subr.mxu0 0.0
      %5554 = vmatpush2.msra.mxu0 0.0
      %5555 = vmatprep.subr.mxu0 0.0
      %5556 = vmatpush2.msra.mxu0 0.0
      %5557 = vmatprep.subr.mxu0 0.0
      %5558 = vmatpush2.msra.mxu0 0.0
      %5559 = vmatprep.subr.mxu0 0.0
      %5560 = vmatpush2.msra.mxu0 0.0
      %5561 = vmatprep.subr.mxu0 0.0
      %5562 = vmatpush2.msra.mxu0 0.0
      %5563 = vmatprep.mubr.f32.mxu0 0.0
      %5564 = vmatmul.mubr.f32.gmra.mxu0 %v5495
      %v5565 = vpop.f32.mrf.mxu0
      %v5566 = vadd.f32 %v5464, %v5565
      %v5567 = vpop.f32.mrf.mxu0
      %5568 = vmatprep.mubr.f32.mxu0 0.0
      %5569 = vmatmul.mubr.f32.gmra.mxu0 %v5497
      %v5570 = vpop.f32.mrf.mxu0
      %v5571 = vadd.f32 %v5464, %v5570
      %v5572 = vpop.f32.mrf.mxu0
      %5573 = vdwg.mxu0
      %v5574 = vmax.f32 %v5566, 0.0
      %v5575 = vmax.f32 %v5571, 0.0
      %v5576 = vld [vmem:[%s6] sm:$0xff]
      %v5577 = vld [vmem:[%s6 + $0x8] sm:$0xff]
      %v5578 = vld [vmem:[%s6 + $0x10] sm:$0xff]
      %v5579 = vld [vmem:[%s6 + $0x18] sm:$0xff]
      %v5580 = vld [vmem:[%s7] sm:$0x1]
      %v5582 = vlaneseq
      %v5583 = vshrl.u32 %v5582, 7
      %v5584 = vsub.s32 0, %v5583
      %v5585 = vrot.slane %v5580, %v5584
      %v5588 = vsel %vm3013, %v5574, 0
      %v5591 = vsel %vm3013, %v5575, 0
      %5593 = vmatprep.subr.mxu0 0.0
      %5594 = vmatpush1.msra.mxu0 0.0
      %5595 = vmatprep.subr.mxu0 0.0
      %5596 = vmatpush1.msra.mxu0 0.0
      %5597 = vmatprep.subr.mxu0 0.0
      %5598 = vmatpush1.msra.mxu0 0.0
      %5599 = vmatprep.subr.mxu0 0.0
      %5600 = vmatpush1.msra.mxu0 0.0
      %5601 = vmatprep.subr.mxu0 0.0
      %5602 = vmatpush1.msra.mxu0 0.0
      %5603 = vmatprep.subr.mxu0 0.0
      %5604 = vmatpush1.msra.mxu0 0.0
      %5605 = vmatprep.subr.mxu0 0.0
      %5606 = vmatpush1.msra.mxu0 0.0
      %5607 = vmatprep.subr.mxu0 0.0
      %5608 = vmatpush1.msra.mxu0 0.0
      %5609 = vmatprep.subr.mxu0 0.0
      %5610 = vmatpush1.msra.mxu0 0.0
      %5611 = vmatprep.subr.mxu0 0.0
      %5612 = vmatpush1.msra.mxu0 0.0
      %5613 = vmatprep.subr.mxu0 0.0
      %5614 = vmatpush1.msra.mxu0 0.0
      %5615 = vmatprep.subr.mxu0 0.0
      %5616 = vmatpush1.msra.mxu0 0.0
      %5617 = vmatprep.subr.mxu0 0.0
      %5618 = vmatpush1.msra.mxu0 %v5579
      %5619 = vmatprep.subr.mxu0 0.0
      %5620 = vmatpush1.msra.mxu0 %v5578
      %5621 = vmatprep.subr.mxu0 0.0
      %5622 = vmatpush1.msra.mxu0 %v5577
      %5623 = vmatprep.subr.mxu0 0.0
      %5624 = vmatpush1.msra.mxu0 %v5576
      %5625 = vmatprep.subr.mxu0 0.0
      %5626 = vmatpush2.msra.mxu0 0.0
      %5627 = vmatprep.subr.mxu0 0.0
      %5628 = vmatpush2.msra.mxu0 0.0
      %5629 = vmatprep.subr.mxu0 0.0
      %5630 = vmatpush2.msra.mxu0 0.0
      %5631 = vmatprep.subr.mxu0 0.0
      %5632 = vmatpush2.msra.mxu0 0.0
      %5633 = vmatprep.subr.mxu0 0.0
      %5634 = vmatpush2.msra.mxu0 0.0
      %5635 = vmatprep.subr.mxu0 0.0
      %5636 = vmatpush2.msra.mxu0 0.0
      %5637 = vmatprep.subr.mxu0 0.0
      %5638 = vmatpush2.msra.mxu0 0.0
      %5639 = vmatprep.subr.mxu0 0.0
      %5640 = vmatpush2.msra.mxu0 0.0
      %5641 = vmatprep.subr.mxu0 0.0
      %5642 = vmatpush2.msra.mxu0 0.0
      %5643 = vmatprep.subr.mxu0 0.0
      %5644 = vmatpush2.msra.mxu0 0.0
      %5645 = vmatprep.subr.mxu0 0.0
      %5646 = vmatpush2.msra.mxu0 0.0
      %5647 = vmatprep.subr.mxu0 0.0
      %5648 = vmatpush2.msra.mxu0 0.0
      %5649 = vmatprep.subr.mxu0 0.0
      %5650 = vmatpush2.msra.mxu0 0.0
      %5651 = vmatprep.subr.mxu0 0.0
      %5652 = vmatpush2.msra.mxu0 0.0
      %5653 = vmatprep.subr.mxu0 0.0
      %5654 = vmatpush2.msra.mxu0 0.0
      %5655 = vmatprep.subr.mxu0 0.0
      %5656 = vmatpush2.msra.mxu0 0.0
      %5657 = vmatprep.mubr.f32.mxu0 0.0
      %5658 = vmatmul.mubr.f32.gmra.mxu0 %v5588
      %v5659 = vpop.f32.mrf.mxu0
      %v5660 = vadd.f32 %v5585, %v5659
      %v5661 = vpop.f32.mrf.mxu0
      %5662 = vmatprep.mubr.f32.mxu0 0.0
      %5663 = vmatmul.mubr.f32.gmra.mxu0 %v5591
      %v5664 = vpop.f32.mrf.mxu0
      %v5665 = vadd.f32 %v5585, %v5664
      %v5666 = vpop.f32.mrf.mxu0
      %5667 = vdwg.mxu0
      %5668 = vst [vmem:[%s335] sm:$0xff] %v5660
      %5669 = vst [vmem:[%s335 + $0x8] sm:$0xf] %v5665
      %p5670 = scmp.lt.s32.totalorder %s19, 1
      %s5671 = scalar_select %p5670, %s19, 1
      %s5672 = smul.addr %s5671, 2
      %s5673 = smul.addr %s5672, 8
      %s5674 = scalar_lea.vmem %s8, %s5673
      // Predicated region
      $region53: #{tpu_custom_call.1} parent=51 // pred_check
        %p5675 = pneg %p215
      $region54: #{tpu_custom_call.1} parent=51 // pred_check_branch
        %5677 = sbr.rel (%p5675) target = $region56
      $region55: #{tpu_custom_call.1} parent=51 // pred_region
        _
      $region56: #{tpu_custom_call.1} parent=51 // pred_fallthru
        _
    $region52: #{tpu_custom_call.1} parent=5 // pred_fallthru
      _
    %p5678 = scmp.le.s32.totalorder 2, %s14
    // Predicated region
    $region57: #{tpu_custom_call.1} parent=5 // pred_check
      %p5679 = pneg %p5678
    $region58: #{tpu_custom_call.1} parent=5 // pred_check_branch
      %5681 = sbr.rel (%p5679) target = $region60
    $region59: #{tpu_custom_call.1} parent=5 // pred_region
      %s5682 = ssub.s32 %s14, 2
      // Predicated region
      $region61: #{tpu_custom_call.1} parent=59 // pred_check
        %p5683 = pneg %p221
      $region62: #{tpu_custom_call.1} parent=59 // pred_check_branch
        %5685 = sbr.rel (%p5683) target = $region64
      $region63: #{tpu_custom_call.1} parent=59 // pred_region
        %p5686 = scmp.lt.s32.totalorder %s20, 1
        %s5687 = scalar_select %p5686, %s20, 1
        %s5688 = smul.addr %s5687, 2
        %s5689 = smul.addr %s5688, 8
        %s5690 = scalar_lea.vmem %s8, %s5689
      $region64: #{tpu_custom_call.1} parent=59 // pred_fallthru
        _
    $region60: #{tpu_custom_call.1} parent=5 // pred_fallthru
      _
  $region6: #{tpu_custom_call.1} parent=0 // loop_footer
    %s18 = sadd.s32 1, %s14
  $region7: #{tpu_custom_call.1} parent=0 // loop_footer_branch
    %13 = sbr.rel target = $region3
  $region8: #{tpu_custom_call.1} parent=0 // loop_exit
    _

</llo_original>
